<compile_context>
chip_gen: v6e
topology: v6e:2x2x1
jax: 0.10.0
libtpu: 0.0.40
codegen_flags: <defaults>
</compile_context>

<pallas_src>
import math
import functools

import jax
import jax.numpy as jnp
from jax import lax
from jax.experimental import pallas as pl
from jax.experimental.pallas import tpu as pltpu

# ----------------------------- model config ---------------------------------
CFG = dict(
    vocab=128,      # vocab size (== lane width -> [T, V] logits are lane-dense)
    n_pos=32,       # max positions
    d_model=32,     # hidden size
    n_head=2,
    n_layer=2,
    d_ff=128,       # 4 * d_model
    eps=1e-5,
)

NEG_INF = -1e9      # plain Python float -> jaxpr literal, never a captured constant


# ----------------------------- in-kernel helpers -----------------------------
def _mm(a, b, dims=(((1,), (0,)), ((), ()))):
    """MXU matmul: bf16 operands, f32 accumulation."""
    return lax.dot_general(a.astype(jnp.bfloat16), b.astype(jnp.bfloat16),
                           dimension_numbers=dims,
                           preferred_element_type=jnp.float32)


def _layernorm(x, g, b, eps):
    mean = jnp.mean(x, axis=-1, keepdims=True)
    var = jnp.mean((x - mean) ** 2, axis=-1, keepdims=True)
    return (x - mean) * lax.rsqrt(var + eps) * g + b


def _gelu_new(y):
    # GPT2 "gelu_new": 0.5*y*(1+tanh(sqrt(2/pi)*(y+0.044715*y^3)))
    c = math.sqrt(2.0 / math.pi)
    return 0.5 * y * (1.0 + jnp.tanh(c * (y + 0.044715 * y * y * y)))


# ----------------------------- fused forward kernel --------------------------
def _fused_forward_kernel(*refs, T, H, L, eps):
    """One grid step == one batch element (T tokens, full depth of the model)."""
    (ids_ref, tgt_ref, mask_ref, wte_ref, wpe_ref, lnf_g_ref, lnf_b_ref) = refs[:7]
    layer_refs = refs[7:7 + 16 * L]
    out_ref = refs[-1]

    wte = wte_ref[...]                                   # [V, D] bf16 (tied embed/head)
    V, D = wte.shape
    Dh = D // H

    # ---- embeddings: one-hot @ wte (gather on the MXU) + positional rows ----
    ids_col = ids_ref[...]                               # [T, 1] int32
    onehot = (lax.broadcasted_iota(jnp.int32, (T, V), 1) == ids_col)
    tok = _mm(onehot, wte)                               # [T, D] f32
    h = tok + wpe_ref[...]                               # [T, D] f32 (broadcast add)

    # ---- causal + key-padding bias for this batch element (built in-kernel) ----
    mask_row = mask_ref[0]                               # [1, T] f32
    row_i = lax.broadcasted_iota(jnp.int32, (T, T), 0)
    col_j = lax.broadcasted_iota(jnp.int32, (T, T), 1)
    bias2d = (jnp.where(col_j <= row_i, 0.0, NEG_INF).astype(jnp.float32)
              + (1.0 - mask_row) * NEG_INF)              # [T, T]

    # ---- transformer layers (fully unrolled, all weights VMEM-resident) ------
    for li in range(L):
        (ln1_g, ln1_b, w_q, w_k, w_v, b_q, b_k, b_v,
         w_o, b_o, ln2_g, ln2_b, w_fc, b_fc, w_proj, b_proj) = \
            layer_refs[16 * li: 16 * (li + 1)]

        # ----- attention -----
        x = _layernorm(h, ln1_g[...], ln1_b[...], eps)   # [T, D] f32
        xb = x.astype(jnp.bfloat16)                      # hoisted MXU-operand cast

        v_heads, s_heads = [], []
        for hh in range(H):
            # head-major pre-split weights: no in-kernel lane-offset column slices
            q_h = _mm(xb, w_q[hh]) + b_q[hh]             # [T, Dh] (1/sqrt(Dh) folded)
            k_h = _mm(xb, w_k[hh]) + b_k[hh]             # [T, Dh]
            v_h = _mm(xb, w_v[hh]) + b_v[hh]             # [T, Dh]
            s_heads.append(_mm(q_h, k_h, dims=(((1,), (1,)), ((), ()))))  # [T, T]
            v_heads.append(v_h)

        # one softmax over all H heads (batched max/exp/sum/divide)
        s = jnp.stack(s_heads, axis=0) + bias2d          # [H, T, T]
        m = jnp.max(s, axis=-1, keepdims=True)
        p = jnp.exp(s - m)
        denom = jnp.sum(p, axis=-1, keepdims=True)       # [H, T, 1]
        # NOTE: on hardware pl.reciprocal(denom, approx=True) moves this to the EUP;
        # plain divide kept here for interpret-mode portability.
        p = p * (1.0 / denom)

        # per-head PV + output projection accumulated on the MXU (no lane concat)
        acc = None
        for hh in range(H):
            pv = _mm(p[hh], v_heads[hh])                 # [T, Dh]
            proj = _mm(pv, w_o[hh])                      # [T, D]
            acc = proj if acc is None else acc + proj
        h = h + acc + b_o[...]

        # ----- MLP -----
        x = _layernorm(h, ln2_g[...], ln2_b[...], eps)
        m1 = _gelu_new(_mm(x, w_fc[...]) + b_fc[...])    # [T, F]
        h = h + _mm(m1, w_proj[...]) + b_proj[...]

    # ---- final LN + tied LM head ([T, V] lane-dense) + log-softmax gather ----
    hf = _layernorm(h, lnf_g_ref[...], lnf_b_ref[...], eps)
    logits = _mm(hf, wte, dims=(((1,), (1,)), ((), ())))  # [T, V] f32
    mx = jnp.max(logits, axis=-1, keepdims=True)          # [T, 1]
    lse = mx + jnp.log(jnp.sum(jnp.exp(logits - mx), axis=-1, keepdims=True))
    tgt_col = tgt_ref[...]                                # [T, 1] int32
    viota = lax.broadcasted_iota(jnp.int32, (T, V), 1)
    sel = jnp.sum(jnp.where(viota == tgt_col, logits, 0.0),
                  axis=-1, keepdims=True)                 # [T, 1]
    out_ref[...] = sel - lse                              # full-block store


# ----------------------------- parameter init --------------------------------
def init_params(key, cfg):
    V, P, D, F, L = cfg["vocab"], cfg["n_pos"], cfg["d_model"], cfg["d_ff"], cfg["n_layer"]
    keys = jax.random.split(key, 2 + 4 * L)
    std = 0.02
    params = dict(
        wte=std * jax.random.normal(keys[0], (V, D), jnp.float32),
        wpe=std * jax.random.normal(keys[1], (P, D), jnp.float32),
        lnf_g=jnp.ones((D,), jnp.float32),
        lnf_b=jnp.zeros((D,), jnp.float32),
        layers=[],
    )
    for li in range(L):
        k0, k1, k2, k3 = keys[2 + 4 * li: 6 + 4 * li]
        params["layers"].append(dict(
            ln1_g=jnp.ones((D,), jnp.float32),
            ln1_b=jnp.zeros((D,), jnp.float32),
            w_qkv=std * jax.random.normal(k0, (D, 3 * D), jnp.float32),
            b_qkv=jnp.zeros((3 * D,), jnp.float32),
            w_o=std * jax.random.normal(k1, (D, D), jnp.float32),
            b_o=jnp.zeros((D,), jnp.float32),
            ln2_g=jnp.ones((D,), jnp.float32),
            ln2_b=jnp.zeros((D,), jnp.float32),
            w_fc=std * jax.random.normal(k2, (D, F), jnp.float32),
            b_fc=jnp.zeros((F,), jnp.float32),
            w_proj=std * jax.random.normal(k3, (F, D), jnp.float32),
            b_proj=jnp.zeros((D,), jnp.float32),
        ))
    return params


# ----------------------------- forward wrapper --------------------------------
def _full_spec(shape):
    """Whole-array block, same block for every grid step (stays VMEM-resident)."""
    if len(shape) == 2:
        return pl.BlockSpec(shape, lambda b: (0, 0))
    return pl.BlockSpec(shape, lambda b: (0, 0, 0))


def actor_forward(params, input_ids, attention_mask, cfg=CFG):
    """ActorModel.forward: log_probs_from_logits(logits[:, :-1], input_ids[:, 1:])."""
    B, T = input_ids.shape
    D, H, L = cfg["d_model"], cfg["n_head"], cfg["n_layer"]
    V, F = cfg["vocab"], cfg["d_ff"]
    Dh = D // H
    scale = 1.0 / math.sqrt(Dh)
    bf16 = jnp.bfloat16

    ids_col = input_ids.reshape(B * T, 1).astype(jnp.int32)            # [BT, 1]
    # tgt[b, t] = input_ids[b, t+1]; last column wraps within its own row and is
    # dropped after the kernel (never crosses batch rows).
    tgt = jnp.concatenate([input_ids[:, 1:], input_ids[:, :1]], axis=1)
    tgt_col = tgt.reshape(B * T, 1).astype(jnp.int32)                  # [BT, 1]
    mask3 = attention_mask.astype(jnp.float32).reshape(B, 1, T)        # [B, 1, T]
    wpe_t = params["wpe"][:T, :]                                       # [T, D]

    operands = [ids_col, tgt_col, mask3,
                params["wte"].astype(bf16), wpe_t,
                params["lnf_g"].reshape(1, D), params["lnf_b"].reshape(1, D)]
    in_specs = [pl.BlockSpec((T, 1), lambda b: (b, 0)),
                pl.BlockSpec((T, 1), lambda b: (b, 0)),
                pl.BlockSpec((1, 1, T), lambda b: (b, 0, 0)),
                _full_spec((V, D)), _full_spec((T, D)),
                _full_spec((1, D)), _full_spec((1, D))]

    for lyr in params["layers"]:
        w_qkv, b_qkv = lyr["w_qkv"], lyr["b_qkv"]
        # head-major pre-split weights; attention scale folded into Q weight + bias
        w_q = (w_qkv[:, 0:D] * scale).reshape(D, H, Dh).transpose(1, 0, 2).astype(bf16)
        w_k = w_qkv[:, D:2 * D].reshape(D, H, Dh).transpose(1, 0, 2).astype(bf16)
        w_v = w_qkv[:, 2 * D:3 * D].reshape(D, H, Dh).transpose(1, 0, 2).astype(bf16)
        b_q = (b_qkv[0:D] * scale).reshape(H, 1, Dh)
        b_k = b_qkv[D:2 * D].reshape(H, 1, Dh)
        b_v = b_qkv[2 * D:3 * D].reshape(H, 1, Dh)
        w_o = lyr["w_o"].reshape(H, Dh, D).astype(bf16)                # row-split per head

        layer_ops = [lyr["ln1_g"].reshape(1, D), lyr["ln1_b"].reshape(1, D),
                     w_q, w_k, w_v, b_q, b_k, b_v,
                     w_o, lyr["b_o"].reshape(1, D),
                     lyr["ln2_g"].reshape(1, D), lyr["ln2_b"].reshape(1, D),
                     lyr["w_fc"].astype(bf16), lyr["b_fc"].reshape(1, F),
                     lyr["w_proj"].astype(bf16), lyr["b_proj"].reshape(1, D)]
        operands += layer_ops
        in_specs += [_full_spec(tuple(op.shape)) for op in layer_ops]

    kern = functools.partial(_fused_forward_kernel, T=T, H=H, L=L, eps=cfg["eps"])
    lp = pl.pallas_call(
        kern,
        grid=(B,),                                       # parallel over batch (v7x: 2 TCs)
        in_specs=in_specs,
        out_specs=pl.BlockSpec((T, 1), lambda b: (b, 0)),
        out_shape=jax.ShapeDtypeStruct((B * T, 1), jnp.float32),
        compiler_params=pltpu.CompilerParams(dimension_semantics=("parallel",)),
    )(*operands)

    # drop the final position per sequence (its "target" would be the wrapped token)
    return lp.reshape(B, T)[:, :T - 1]


# ----------------------------- main -------------------------------------------
if __name__ == "__main__":
    key = jax.random.PRNGKey(0)
    k_param, k_ids = jax.random.split(key)

    params = init_params(k_param, CFG)

    B, T = 2, 8
    input_ids = jax.random.randint(k_ids, (B, T), 0, CFG["vocab"], dtype=jnp.int32)
    # simple padding pattern: last two tokens of batch 1 are padding
    attention_mask = jnp.array(
        [[1, 1, 1, 1, 1, 1, 1, 1],
         [1, 1, 1, 1, 1, 1, 0, 0]], dtype=jnp.int32)

    fwd = jax.jit(actor_forward)
    log_probs = fwd(params, input_ids, attention_mask)
    jax.block_until_ready(log_probs)

    assert log_probs.shape == (B, T - 1)
    assert bool(jnp.all(jnp.isfinite(log_probs)))
    assert bool(jnp.all(log_probs <= 0.0))   # log-probabilities are <= 0
    print("KERNEL_OK")
</pallas_src>

<mosaic_0001>
module attributes {stable_mosaic.version = 11 : i64} {
  func.func @_fused_forward_kernel(%arg0: i32, %arg1: memref<8x1xi32, #tpu.memory_space<vmem>>, %arg2: memref<8x1xi32, #tpu.memory_space<vmem>>, %arg3: memref<1x1x8xf32, #tpu.memory_space<vmem>>, %arg4: memref<128x32xbf16, #tpu.memory_space<vmem>>, %arg5: memref<8x32xf32, #tpu.memory_space<vmem>>, %arg6: memref<1x32xf32, #tpu.memory_space<vmem>>, %arg7: memref<1x32xf32, #tpu.memory_space<vmem>>, %arg8: memref<1x32xf32, #tpu.memory_space<vmem>>, %arg9: memref<1x32xf32, #tpu.memory_space<vmem>>, %arg10: memref<2x32x16xbf16, #tpu.memory_space<vmem>>, %arg11: memref<2x32x16xbf16, #tpu.memory_space<vmem>>, %arg12: memref<2x32x16xbf16, #tpu.memory_space<vmem>>, %arg13: memref<2x1x16xf32, #tpu.memory_space<vmem>>, %arg14: memref<2x1x16xf32, #tpu.memory_space<vmem>>, %arg15: memref<2x1x16xf32, #tpu.memory_space<vmem>>, %arg16: memref<2x16x32xbf16, #tpu.memory_space<vmem>>, %arg17: memref<1x32xf32, #tpu.memory_space<vmem>>, %arg18: memref<1x32xf32, #tpu.memory_space<vmem>>, %arg19: memref<1x32xf32, #tpu.memory_space<vmem>>, %arg20: memref<32x128xbf16, #tpu.memory_space<vmem>>, %arg21: memref<1x128xf32, #tpu.memory_space<vmem>>, %arg22: memref<128x32xbf16, #tpu.memory_space<vmem>>, %arg23: memref<1x32xf32, #tpu.memory_space<vmem>>, %arg24: memref<1x32xf32, #tpu.memory_space<vmem>>, %arg25: memref<1x32xf32, #tpu.memory_space<vmem>>, %arg26: memref<2x32x16xbf16, #tpu.memory_space<vmem>>, %arg27: memref<2x32x16xbf16, #tpu.memory_space<vmem>>, %arg28: memref<2x32x16xbf16, #tpu.memory_space<vmem>>, %arg29: memref<2x1x16xf32, #tpu.memory_space<vmem>>, %arg30: memref<2x1x16xf32, #tpu.memory_space<vmem>>, %arg31: memref<2x1x16xf32, #tpu.memory_space<vmem>>, %arg32: memref<2x16x32xbf16, #tpu.memory_space<vmem>>, %arg33: memref<1x32xf32, #tpu.memory_space<vmem>>, %arg34: memref<1x32xf32, #tpu.memory_space<vmem>>, %arg35: memref<1x32xf32, #tpu.memory_space<vmem>>, %arg36: memref<32x128xbf16, #tpu.memory_space<vmem>>, %arg37: memref<1x128xf32, #tpu.memory_space<vmem>>, %arg38: memref<128x32xbf16, #tpu.memory_space<vmem>>, %arg39: memref<1x32xf32, #tpu.memory_space<vmem>>, %arg40: memref<8x1xf32, #tpu.memory_space<vmem>>) attributes {dimension_semantics = [#tpu.dimension_semantics<parallel>], iteration_bounds = array<i64: 2>, scalar_prefetch = 0 : i64, scratch_operands = 0 : i64, tpu.core_type = #tpu.core_type<tc>, window_params = [{transform_indices = @transform_0, window_bounds = array<i64: 8, 1>}, {transform_indices = @transform_1, window_bounds = array<i64: 8, 1>}, {transform_indices = @transform_2, window_bounds = array<i64: 1, 1, 8>}, {pipeline_mode = #tpu.pipeline_mode<synchronous>, transform_indices = @transform_3, window_bounds = array<i64: 128, 32>}, {pipeline_mode = #tpu.pipeline_mode<synchronous>, transform_indices = @transform_4, window_bounds = array<i64: 8, 32>}, {pipeline_mode = #tpu.pipeline_mode<synchronous>, transform_indices = @transform_5, window_bounds = array<i64: 1, 32>}, {pipeline_mode = #tpu.pipeline_mode<synchronous>, transform_indices = @transform_6, window_bounds = array<i64: 1, 32>}, {pipeline_mode = #tpu.pipeline_mode<synchronous>, transform_indices = @transform_7, window_bounds = array<i64: 1, 32>}, {pipeline_mode = #tpu.pipeline_mode<synchronous>, transform_indices = @transform_8, window_bounds = array<i64: 1, 32>}, {pipeline_mode = #tpu.pipeline_mode<synchronous>, transform_indices = @transform_9, window_bounds = array<i64: 2, 32, 16>}, {pipeline_mode = #tpu.pipeline_mode<synchronous>, transform_indices = @transform_10, window_bounds = array<i64: 2, 32, 16>}, {pipeline_mode = #tpu.pipeline_mode<synchronous>, transform_indices = @transform_11, window_bounds = array<i64: 2, 32, 16>}, {pipeline_mode = #tpu.pipeline_mode<synchronous>, transform_indices = @transform_12, window_bounds = array<i64: 2, 1, 16>}, {pipeline_mode = #tpu.pipeline_mode<synchronous>, transform_indices = @transform_13, window_bounds = array<i64: 2, 1, 16>}, {pipeline_mode = #tpu.pipeline_mode<synchronous>, transform_indices = @transform_14, window_bounds = array<i64: 2, 1, 16>}, {pipeline_mode = #tpu.pipeline_mode<synchronous>, transform_indices = @transform_15, window_bounds = array<i64: 2, 16, 32>}, {pipeline_mode = #tpu.pipeline_mode<synchronous>, transform_indices = @transform_16, window_bounds = array<i64: 1, 32>}, {pipeline_mode = #tpu.pipeline_mode<synchronous>, transform_indices = @transform_17, window_bounds = array<i64: 1, 32>}, {pipeline_mode = #tpu.pipeline_mode<synchronous>, transform_indices = @transform_18, window_bounds = array<i64: 1, 32>}, {pipeline_mode = #tpu.pipeline_mode<synchronous>, transform_indices = @transform_19, window_bounds = array<i64: 32, 128>}, {pipeline_mode = #tpu.pipeline_mode<synchronous>, transform_indices = @transform_20, window_bounds = array<i64: 1, 128>}, {pipeline_mode = #tpu.pipeline_mode<synchronous>, transform_indices = @transform_21, window_bounds = array<i64: 128, 32>}, {pipeline_mode = #tpu.pipeline_mode<synchronous>, transform_indices = @transform_22, window_bounds = array<i64: 1, 32>}, {pipeline_mode = #tpu.pipeline_mode<synchronous>, transform_indices = @transform_23, window_bounds = array<i64: 1, 32>}, {pipeline_mode = #tpu.pipeline_mode<synchronous>, transform_indices = @transform_24, window_bounds = array<i64: 1, 32>}, {pipeline_mode = #tpu.pipeline_mode<synchronous>, transform_indices = @transform_25, window_bounds = array<i64: 2, 32, 16>}, {pipeline_mode = #tpu.pipeline_mode<synchronous>, transform_indices = @transform_26, window_bounds = array<i64: 2, 32, 16>}, {pipeline_mode = #tpu.pipeline_mode<synchronous>, transform_indices = @transform_27, window_bounds = array<i64: 2, 32, 16>}, {pipeline_mode = #tpu.pipeline_mode<synchronous>, transform_indices = @transform_28, window_bounds = array<i64: 2, 1, 16>}, {pipeline_mode = #tpu.pipeline_mode<synchronous>, transform_indices = @transform_29, window_bounds = array<i64: 2, 1, 16>}, {pipeline_mode = #tpu.pipeline_mode<synchronous>, transform_indices = @transform_30, window_bounds = array<i64: 2, 1, 16>}, {pipeline_mode = #tpu.pipeline_mode<synchronous>, transform_indices = @transform_31, window_bounds = array<i64: 2, 16, 32>}, {pipeline_mode = #tpu.pipeline_mode<synchronous>, transform_indices = @transform_32, window_bounds = array<i64: 1, 32>}, {pipeline_mode = #tpu.pipeline_mode<synchronous>, transform_indices = @transform_33, window_bounds = array<i64: 1, 32>}, {pipeline_mode = #tpu.pipeline_mode<synchronous>, transform_indices = @transform_34, window_bounds = array<i64: 1, 32>}, {pipeline_mode = #tpu.pipeline_mode<synchronous>, transform_indices = @transform_35, window_bounds = array<i64: 32, 128>}, {pipeline_mode = #tpu.pipeline_mode<synchronous>, transform_indices = @transform_36, window_bounds = array<i64: 1, 128>}, {pipeline_mode = #tpu.pipeline_mode<synchronous>, transform_indices = @transform_37, window_bounds = array<i64: 128, 32>}, {pipeline_mode = #tpu.pipeline_mode<synchronous>, transform_indices = @transform_38, window_bounds = array<i64: 1, 32>}, {transform_indices = @transform_39, window_bounds = array<i64: 8, 1>}]} {
    %c0 = arith.constant 0 : index
    %c0_0 = arith.constant 0 : index
    %0 = vector.load %arg4[%c0, %c0_0] : memref<128x32xbf16, #tpu.memory_space<vmem>>, vector<128x32xbf16>
    %c0_1 = arith.constant 0 : index
    %c0_2 = arith.constant 0 : index
    %1 = vector.load %arg1[%c0_1, %c0_2] : memref<8x1xi32, #tpu.memory_space<vmem>>, vector<8x1xi32>
    %2 = tpu.iota {dimensions = array<i32: 1>} : vector<8x128xi32>
    %3 = vector.broadcast %1 : vector<8x1xi32> to vector<8x128xi32>
    %4 = arith.cmpi eq, %2, %3 : vector<8x128xi32>
    %5 = arith.extui %4 : vector<8x128xi1> to vector<8x128xi32>
    %6 = arith.sitofp %5 : vector<8x128xi32> to vector<8x128xf32>
    %7 = arith.truncf %6 : vector<8x128xf32> to vector<8x128xbf16>
    %cst = arith.constant dense<0.000000e+00> : vector<8x32xf32>
    %8 = tpu.matmul %7, %0, %cst {dimension_numbers = #tpu.dot_dimension_numbers<[1], [0], [0], [1], [0, 0, 1, 1], [], []>} : vector<8x128xbf16>, vector<128x32xbf16>, vector<8x32xf32> -> vector<8x32xf32>
    %c0_3 = arith.constant 0 : index
    %c0_4 = arith.constant 0 : index
    %9 = vector.load %arg5[%c0_3, %c0_4] : memref<8x32xf32, #tpu.memory_space<vmem>>, vector<8x32xf32>
    %10 = arith.addf %8, %9 : vector<8x32xf32>
    %c0_5 = arith.constant 0 : index
    %c0_6 = arith.constant 0 : index
    %c0_7 = arith.constant 0 : index
    %11 = vector.load %arg3[%c0_5, %c0_6, %c0_7] : memref<1x1x8xf32, #tpu.memory_space<vmem>>, vector<1x1x8xf32>
    %12 = vector.shape_cast %11 : vector<1x1x8xf32> to vector<1x8xf32>
    %13 = tpu.iota {dimensions = array<i32: 0>} : vector<8x8xi32>
    %14 = tpu.iota {dimensions = array<i32: 1>} : vector<8x8xi32>
    %15 = arith.cmpi sle, %14, %13 : vector<8x8xi32>
    %cst_8 = arith.constant 0.000000e+00 : f32
    %cst_9 = arith.constant -1.000000e+09 : f32
    %16 = vector.broadcast %cst_8 : f32 to vector<8x8xf32>
    %17 = vector.broadcast %cst_9 : f32 to vector<8x8xf32>
    %18 = arith.select %15, %16, %17 : vector<8x8xi1>, vector<8x8xf32>
    %cst_10 = arith.constant 1.000000e+00 : f32
    %19 = vector.broadcast %cst_10 : f32 to vector<1x8xf32>
    %20 = arith.subf %19, %12 : vector<1x8xf32>
    %cst_11 = arith.constant -1.000000e+09 : f32
    %21 = vector.broadcast %cst_11 : f32 to vector<1x8xf32>
    %22 = arith.mulf %20, %21 : vector<1x8xf32>
    %23 = vector.broadcast %22 : vector<1x8xf32> to vector<8x8xf32>
    %24 = arith.addf %18, %23 : vector<8x8xf32>
    %c0_12 = arith.constant 0 : index
    %c0_13 = arith.constant 0 : index
    %25 = vector.load %arg8[%c0_12, %c0_13] : memref<1x32xf32, #tpu.memory_space<vmem>>, vector<1x32xf32>
    %c0_14 = arith.constant 0 : index
    %c0_15 = arith.constant 0 : index
    %26 = vector.load %arg9[%c0_14, %c0_15] : memref<1x32xf32, #tpu.memory_space<vmem>>, vector<1x32xf32>
    %cst_16 = arith.constant dense<0.000000e+00> : vector<8xf32>
    %27 = vector.multi_reduction <add>, %10, %cst_16 [1] : vector<8x32xf32> to vector<8xf32>
    %28 = vector.shape_cast %27 : vector<8xf32> to vector<8x1xf32>
    %cst_17 = arith.constant 3.200000e+01 : f32
    %29 = vector.broadcast %cst_17 : f32 to vector<8x1xf32>
    %30 = arith.divf %28, %29 : vector<8x1xf32>
    %31 = vector.broadcast %30 : vector<8x1xf32> to vector<8x32xf32>
    %32 = arith.subf %10, %31 : vector<8x32xf32>
    %33 = arith.mulf %32, %32 : vector<8x32xf32>
    %cst_18 = arith.constant dense<0.000000e+00> : vector<8xf32>
    %34 = vector.multi_reduction <add>, %33, %cst_18 [1] : vector<8x32xf32> to vector<8xf32>
    %35 = vector.shape_cast %34 : vector<8xf32> to vector<8x1xf32>
    %cst_19 = arith.constant 3.200000e+01 : f32
    %36 = vector.broadcast %cst_19 : f32 to vector<8x1xf32>
    %37 = arith.divf %35, %36 : vector<8x1xf32>
    %38 = vector.broadcast %30 : vector<8x1xf32> to vector<8x32xf32>
    %39 = arith.subf %10, %38 : vector<8x32xf32>
    %cst_20 = arith.constant 9.99999974E-6 : f32
    %40 = vector.broadcast %cst_20 : f32 to vector<8x1xf32>
    %41 = arith.addf %37, %40 : vector<8x1xf32>
    %42 = math.rsqrt %41 : vector<8x1xf32>
    %43 = vector.broadcast %42 : vector<8x1xf32> to vector<8x32xf32>
    %44 = arith.mulf %39, %43 : vector<8x32xf32>
    %45 = vector.broadcast %25 : vector<1x32xf32> to vector<8x32xf32>
    %46 = arith.mulf %44, %45 : vector<8x32xf32>
    %47 = vector.broadcast %26 : vector<1x32xf32> to vector<8x32xf32>
    %48 = arith.addf %46, %47 : vector<8x32xf32>
    %49 = arith.truncf %48 : vector<8x32xf32> to vector<8x32xbf16>
    %c0_21 = arith.constant 0 : index
    %c0_22 = arith.constant 0 : index
    %c0_23 = arith.constant 0 : index
    %50 = vector.load %arg10[%c0_21, %c0_22, %c0_23] : memref<2x32x16xbf16, #tpu.memory_space<vmem>>, vector<1x32x16xbf16>
    %51 = vector.shape_cast %50 : vector<1x32x16xbf16> to vector<32x16xbf16>
    %cst_24 = arith.constant dense<0.000000e+00> : vector<8x16xf32>
    %52 = tpu.matmul %49, %51, %cst_24 {dimension_numbers = #tpu.dot_dimension_numbers<[1], [0], [0], [1], [0, 0, 1, 1], [], []>} : vector<8x32xbf16>, vector<32x16xbf16>, vector<8x16xf32> -> vector<8x16xf32>
    %c0_25 = arith.constant 0 : index
    %c0_26 = arith.constant 0 : index
    %c0_27 = arith.constant 0 : index
    %53 = vector.load %arg13[%c0_25, %c0_26, %c0_27] : memref<2x1x16xf32, #tpu.memory_space<vmem>>, vector<1x1x16xf32>
    %54 = vector.shape_cast %53 : vector<1x1x16xf32> to vector<1x16xf32>
    %55 = vector.broadcast %54 : vector<1x16xf32> to vector<8x16xf32>
    %56 = arith.addf %52, %55 : vector<8x16xf32>
    %c0_28 = arith.constant 0 : index
    %c0_29 = arith.constant 0 : index
    %c0_30 = arith.constant 0 : index
    %57 = vector.load %arg11[%c0_28, %c0_29, %c0_30] : memref<2x32x16xbf16, #tpu.memory_space<vmem>>, vector<1x32x16xbf16>
    %58 = vector.shape_cast %57 : vector<1x32x16xbf16> to vector<32x16xbf16>
    %cst_31 = arith.constant dense<0.000000e+00> : vector<8x16xf32>
    %59 = tpu.matmul %49, %58, %cst_31 {dimension_numbers = #tpu.dot_dimension_numbers<[1], [0], [0], [1], [0, 0, 1, 1], [], []>} : vector<8x32xbf16>, vector<32x16xbf16>, vector<8x16xf32> -> vector<8x16xf32>
    %c0_32 = arith.constant 0 : index
    %c0_33 = arith.constant 0 : index
    %c0_34 = arith.constant 0 : index
    %60 = vector.load %arg14[%c0_32, %c0_33, %c0_34] : memref<2x1x16xf32, #tpu.memory_space<vmem>>, vector<1x1x16xf32>
    %61 = vector.shape_cast %60 : vector<1x1x16xf32> to vector<1x16xf32>
    %62 = vector.broadcast %61 : vector<1x16xf32> to vector<8x16xf32>
    %63 = arith.addf %59, %62 : vector<8x16xf32>
    %c0_35 = arith.constant 0 : index
    %c0_36 = arith.constant 0 : index
    %c0_37 = arith.constant 0 : index
    %64 = vector.load %arg12[%c0_35, %c0_36, %c0_37] : memref<2x32x16xbf16, #tpu.memory_space<vmem>>, vector<1x32x16xbf16>
    %65 = vector.shape_cast %64 : vector<1x32x16xbf16> to vector<32x16xbf16>
    %cst_38 = arith.constant dense<0.000000e+00> : vector<8x16xf32>
    %66 = tpu.matmul %49, %65, %cst_38 {dimension_numbers = #tpu.dot_dimension_numbers<[1], [0], [0], [1], [0, 0, 1, 1], [], []>} : vector<8x32xbf16>, vector<32x16xbf16>, vector<8x16xf32> -> vector<8x16xf32>
    %c0_39 = arith.constant 0 : index
    %c0_40 = arith.constant 0 : index
    %c0_41 = arith.constant 0 : index
    %67 = vector.load %arg15[%c0_39, %c0_40, %c0_41] : memref<2x1x16xf32, #tpu.memory_space<vmem>>, vector<1x1x16xf32>
    %68 = vector.shape_cast %67 : vector<1x1x16xf32> to vector<1x16xf32>
    %69 = vector.broadcast %68 : vector<1x16xf32> to vector<8x16xf32>
    %70 = arith.addf %66, %69 : vector<8x16xf32>
    %71 = arith.truncf %56 : vector<8x16xf32> to vector<8x16xbf16>
    %72 = arith.truncf %63 : vector<8x16xf32> to vector<8x16xbf16>
    %cst_42 = arith.constant dense<0.000000e+00> : vector<8x8xf32>
    %73 = tpu.matmul %71, %72, %cst_42 {dimension_numbers = #tpu.dot_dimension_numbers<[1], [1], [0], [0], [0, 0, 1, 0], [], []>} : vector<8x16xbf16>, vector<8x16xbf16>, vector<8x8xf32> -> vector<8x8xf32>
    %c1 = arith.constant 1 : index
    %c0_43 = arith.constant 0 : index
    %c0_44 = arith.constant 0 : index
    %74 = vector.load %arg10[%c1, %c0_43, %c0_44] : memref<2x32x16xbf16, #tpu.memory_space<vmem>>, vector<1x32x16xbf16>
    %75 = vector.shape_cast %74 : vector<1x32x16xbf16> to vector<32x16xbf16>
    %cst_45 = arith.constant dense<0.000000e+00> : vector<8x16xf32>
    %76 = tpu.matmul %49, %75, %cst_45 {dimension_numbers = #tpu.dot_dimension_numbers<[1], [0], [0], [1], [0, 0, 1, 1], [], []>} : vector<8x32xbf16>, vector<32x16xbf16>, vector<8x16xf32> -> vector<8x16xf32>
    %c1_46 = arith.constant 1 : index
    %c0_47 = arith.constant 0 : index
    %c0_48 = arith.constant 0 : index
    %77 = vector.load %arg13[%c1_46, %c0_47, %c0_48] : memref<2x1x16xf32, #tpu.memory_space<vmem>>, vector<1x1x16xf32>
    %78 = vector.shape_cast %77 : vector<1x1x16xf32> to vector<1x16xf32>
    %79 = vector.broadcast %78 : vector<1x16xf32> to vector<8x16xf32>
    %80 = arith.addf %76, %79 : vector<8x16xf32>
    %c1_49 = arith.constant 1 : index
    %c0_50 = arith.constant 0 : index
    %c0_51 = arith.constant 0 : index
    %81 = vector.load %arg11[%c1_49, %c0_50, %c0_51] : memref<2x32x16xbf16, #tpu.memory_space<vmem>>, vector<1x32x16xbf16>
    %82 = vector.shape_cast %81 : vector<1x32x16xbf16> to vector<32x16xbf16>
    %cst_52 = arith.constant dense<0.000000e+00> : vector<8x16xf32>
    %83 = tpu.matmul %49, %82, %cst_52 {dimension_numbers = #tpu.dot_dimension_numbers<[1], [0], [0], [1], [0, 0, 1, 1], [], []>} : vector<8x32xbf16>, vector<32x16xbf16>, vector<8x16xf32> -> vector<8x16xf32>
    %c1_53 = arith.constant 1 : index
    %c0_54 = arith.constant 0 : index
    %c0_55 = arith.constant 0 : index
    %84 = vector.load %arg14[%c1_53, %c0_54, %c0_55] : memref<2x1x16xf32, #tpu.memory_space<vmem>>, vector<1x1x16xf32>
    %85 = vector.shape_cast %84 : vector<1x1x16xf32> to vector<1x16xf32>
    %86 = vector.broadcast %85 : vector<1x16xf32> to vector<8x16xf32>
    %87 = arith.addf %83, %86 : vector<8x16xf32>
    %c1_56 = arith.constant 1 : index
    %c0_57 = arith.constant 0 : index
    %c0_58 = arith.constant 0 : index
    %88 = vector.load %arg12[%c1_56, %c0_57, %c0_58] : memref<2x32x16xbf16, #tpu.memory_space<vmem>>, vector<1x32x16xbf16>
    %89 = vector.shape_cast %88 : vector<1x32x16xbf16> to vector<32x16xbf16>
    %cst_59 = arith.constant dense<0.000000e+00> : vector<8x16xf32>
    %90 = tpu.matmul %49, %89, %cst_59 {dimension_numbers = #tpu.dot_dimension_numbers<[1], [0], [0], [1], [0, 0, 1, 1], [], []>} : vector<8x32xbf16>, vector<32x16xbf16>, vector<8x16xf32> -> vector<8x16xf32>
    %c1_60 = arith.constant 1 : index
    %c0_61 = arith.constant 0 : index
    %c0_62 = arith.constant 0 : index
    %91 = vector.load %arg15[%c1_60, %c0_61, %c0_62] : memref<2x1x16xf32, #tpu.memory_space<vmem>>, vector<1x1x16xf32>
    %92 = vector.shape_cast %91 : vector<1x1x16xf32> to vector<1x16xf32>
    %93 = vector.broadcast %92 : vector<1x16xf32> to vector<8x16xf32>
    %94 = arith.addf %90, %93 : vector<8x16xf32>
    %95 = arith.truncf %80 : vector<8x16xf32> to vector<8x16xbf16>
    %96 = arith.truncf %87 : vector<8x16xf32> to vector<8x16xbf16>
    %cst_63 = arith.constant dense<0.000000e+00> : vector<8x8xf32>
    %97 = tpu.matmul %95, %96, %cst_63 {dimension_numbers = #tpu.dot_dimension_numbers<[1], [1], [0], [0], [0, 0, 1, 0], [], []>} : vector<8x16xbf16>, vector<8x16xbf16>, vector<8x8xf32> -> vector<8x8xf32>
    %98 = vector.shape_cast %73 : vector<8x8xf32> to vector<1x8x8xf32>
    %99 = vector.shape_cast %97 : vector<8x8xf32> to vector<1x8x8xf32>
    %100 = tpu.concatenate %98, %99 in 0 : vector<1x8x8xf32>, vector<1x8x8xf32> -> vector<2x8x8xf32>
    %101 = vector.shape_cast %24 : vector<8x8xf32> to vector<1x8x8xf32>
    %102 = vector.broadcast %101 : vector<1x8x8xf32> to vector<2x8x8xf32>
    %103 = arith.addf %100, %102 : vector<2x8x8xf32>
    %cst_64 = arith.constant dense<0xFF800000> : vector<2x8xf32>
    %104 = vector.multi_reduction <maximumf>, %103, %cst_64 [2] : vector<2x8x8xf32> to vector<2x8xf32>
    %105 = vector.shape_cast %104 : vector<2x8xf32> to vector<2x8x1xf32>
    %106 = vector.broadcast %105 : vector<2x8x1xf32> to vector<2x8x8xf32>
    %107 = arith.subf %103, %106 : vector<2x8x8xf32>
    %108 = math.exp %107 : vector<2x8x8xf32>
    %cst_65 = arith.constant dense<0.000000e+00> : vector<2x8xf32>
    %109 = vector.multi_reduction <add>, %108, %cst_65 [2] : vector<2x8x8xf32> to vector<2x8xf32>
    %110 = vector.shape_cast %109 : vector<2x8xf32> to vector<2x8x1xf32>
    %cst_66 = arith.constant 1.000000e+00 : f32
    %111 = vector.broadcast %cst_66 : f32 to vector<2x8x1xf32>
    %112 = arith.divf %111, %110 : vector<2x8x1xf32>
    %113 = vector.broadcast %112 : vector<2x8x1xf32> to vector<2x8x8xf32>
    %114 = arith.mulf %108, %113 : vector<2x8x8xf32>
    %115 = vector.extract_strided_slice %114 {offsets = [0, 0, 0], sizes = [1, 8, 8], strides = [1, 1, 1]} : vector<2x8x8xf32> to vector<1x8x8xf32>
    %116 = vector.shape_cast %115 : vector<1x8x8xf32> to vector<8x8xf32>
    %117 = arith.truncf %116 : vector<8x8xf32> to vector<8x8xbf16>
    %118 = arith.truncf %70 : vector<8x16xf32> to vector<8x16xbf16>
    %cst_67 = arith.constant dense<0.000000e+00> : vector<8x16xf32>
    %119 = tpu.matmul %117, %118, %cst_67 {dimension_numbers = #tpu.dot_dimension_numbers<[1], [0], [0], [1], [0, 0, 1, 1], [], []>} : vector<8x8xbf16>, vector<8x16xbf16>, vector<8x16xf32> -> vector<8x16xf32>
    %c0_68 = arith.constant 0 : index
    %c0_69 = arith.constant 0 : index
    %c0_70 = arith.constant 0 : index
    %120 = vector.load %arg16[%c0_68, %c0_69, %c0_70] : memref<2x16x32xbf16, #tpu.memory_space<vmem>>, vector<1x16x32xbf16>
    %121 = vector.shape_cast %120 : vector<1x16x32xbf16> to vector<16x32xbf16>
    %122 = arith.truncf %119 : vector<8x16xf32> to vector<8x16xbf16>
    %cst_71 = arith.constant dense<0.000000e+00> : vector<8x32xf32>
    %123 = tpu.matmul %122, %121, %cst_71 {dimension_numbers = #tpu.dot_dimension_numbers<[1], [0], [0], [1], [0, 0, 1, 1], [], []>} : vector<8x16xbf16>, vector<16x32xbf16>, vector<8x32xf32> -> vector<8x32xf32>
    %124 = vector.extract_strided_slice %114 {offsets = [1, 0, 0], sizes = [1, 8, 8], strides = [1, 1, 1]} : vector<2x8x8xf32> to vector<1x8x8xf32>
    %125 = vector.shape_cast %124 : vector<1x8x8xf32> to vector<8x8xf32>
    %126 = arith.truncf %125 : vector<8x8xf32> to vector<8x8xbf16>
    %127 = arith.truncf %94 : vector<8x16xf32> to vector<8x16xbf16>
    %cst_72 = arith.constant dense<0.000000e+00> : vector<8x16xf32>
    %128 = tpu.matmul %126, %127, %cst_72 {dimension_numbers = #tpu.dot_dimension_numbers<[1], [0], [0], [1], [0, 0, 1, 1], [], []>} : vector<8x8xbf16>, vector<8x16xbf16>, vector<8x16xf32> -> vector<8x16xf32>
    %c1_73 = arith.constant 1 : index
    %c0_74 = arith.constant 0 : index
    %c0_75 = arith.constant 0 : index
    %129 = vector.load %arg16[%c1_73, %c0_74, %c0_75] : memref<2x16x32xbf16, #tpu.memory_space<vmem>>, vector<1x16x32xbf16>
    %130 = vector.shape_cast %129 : vector<1x16x32xbf16> to vector<16x32xbf16>
    %131 = arith.truncf %128 : vector<8x16xf32> to vector<8x16xbf16>
    %cst_76 = arith.constant dense<0.000000e+00> : vector<8x32xf32>
    %132 = tpu.matmul %131, %130, %cst_76 {dimension_numbers = #tpu.dot_dimension_numbers<[1], [0], [0], [1], [0, 0, 1, 1], [], []>} : vector<8x16xbf16>, vector<16x32xbf16>, vector<8x32xf32> -> vector<8x32xf32>
    %133 = arith.addf %123, %132 : vector<8x32xf32>
    %134 = arith.addf %10, %133 : vector<8x32xf32>
    %c0_77 = arith.constant 0 : index
    %c0_78 = arith.constant 0 : index
    %135 = vector.load %arg17[%c0_77, %c0_78] : memref<1x32xf32, #tpu.memory_space<vmem>>, vector<1x32xf32>
    %136 = vector.broadcast %135 : vector<1x32xf32> to vector<8x32xf32>
    %137 = arith.addf %134, %136 : vector<8x32xf32>
    %c0_79 = arith.constant 0 : index
    %c0_80 = arith.constant 0 : index
    %138 = vector.load %arg18[%c0_79, %c0_80] : memref<1x32xf32, #tpu.memory_space<vmem>>, vector<1x32xf32>
    %c0_81 = arith.constant 0 : index
    %c0_82 = arith.constant 0 : index
    %139 = vector.load %arg19[%c0_81, %c0_82] : memref<1x32xf32, #tpu.memory_space<vmem>>, vector<1x32xf32>
    %cst_83 = arith.constant dense<0.000000e+00> : vector<8xf32>
    %140 = vector.multi_reduction <add>, %137, %cst_83 [1] : vector<8x32xf32> to vector<8xf32>
    %141 = vector.shape_cast %140 : vector<8xf32> to vector<8x1xf32>
    %cst_84 = arith.constant 3.200000e+01 : f32
    %142 = vector.broadcast %cst_84 : f32 to vector<8x1xf32>
    %143 = arith.divf %141, %142 : vector<8x1xf32>
    %144 = vector.broadcast %143 : vector<8x1xf32> to vector<8x32xf32>
    %145 = arith.subf %137, %144 : vector<8x32xf32>
    %146 = arith.mulf %145, %145 : vector<8x32xf32>
    %cst_85 = arith.constant dense<0.000000e+00> : vector<8xf32>
    %147 = vector.multi_reduction <add>, %146, %cst_85 [1] : vector<8x32xf32> to vector<8xf32>
    %148 = vector.shape_cast %147 : vector<8xf32> to vector<8x1xf32>
    %cst_86 = arith.constant 3.200000e+01 : f32
    %149 = vector.broadcast %cst_86 : f32 to vector<8x1xf32>
    %150 = arith.divf %148, %149 : vector<8x1xf32>
    %151 = vector.broadcast %143 : vector<8x1xf32> to vector<8x32xf32>
    %152 = arith.subf %137, %151 : vector<8x32xf32>
    %cst_87 = arith.constant 9.99999974E-6 : f32
    %153 = vector.broadcast %cst_87 : f32 to vector<8x1xf32>
    %154 = arith.addf %150, %153 : vector<8x1xf32>
    %155 = math.rsqrt %154 : vector<8x1xf32>
    %156 = vector.broadcast %155 : vector<8x1xf32> to vector<8x32xf32>
    %157 = arith.mulf %152, %156 : vector<8x32xf32>
    %158 = vector.broadcast %138 : vector<1x32xf32> to vector<8x32xf32>
    %159 = arith.mulf %157, %158 : vector<8x32xf32>
    %160 = vector.broadcast %139 : vector<1x32xf32> to vector<8x32xf32>
    %161 = arith.addf %159, %160 : vector<8x32xf32>
    %c0_88 = arith.constant 0 : index
    %c0_89 = arith.constant 0 : index
    %162 = vector.load %arg20[%c0_88, %c0_89] : memref<32x128xbf16, #tpu.memory_space<vmem>>, vector<32x128xbf16>
    %163 = arith.truncf %161 : vector<8x32xf32> to vector<8x32xbf16>
    %cst_90 = arith.constant dense<0.000000e+00> : vector<8x128xf32>
    %164 = tpu.matmul %163, %162, %cst_90 {dimension_numbers = #tpu.dot_dimension_numbers<[1], [0], [0], [1], [0, 0, 1, 1], [], []>} : vector<8x32xbf16>, vector<32x128xbf16>, vector<8x128xf32> -> vector<8x128xf32>
    %c0_91 = arith.constant 0 : index
    %c0_92 = arith.constant 0 : index
    %165 = vector.load %arg21[%c0_91, %c0_92] : memref<1x128xf32, #tpu.memory_space<vmem>>, vector<1x128xf32>
    %166 = vector.broadcast %165 : vector<1x128xf32> to vector<8x128xf32>
    %167 = arith.addf %164, %166 : vector<8x128xf32>
    %cst_93 = arith.constant 5.000000e-01 : f32
    %168 = vector.broadcast %cst_93 : f32 to vector<8x128xf32>
    %169 = arith.mulf %168, %167 : vector<8x128xf32>
    %cst_94 = arith.constant 4.471500e-02 : f32
    %170 = vector.broadcast %cst_94 : f32 to vector<8x128xf32>
    %171 = arith.mulf %170, %167 : vector<8x128xf32>
    %172 = arith.mulf %171, %167 : vector<8x128xf32>
    %173 = arith.mulf %172, %167 : vector<8x128xf32>
    %174 = arith.addf %167, %173 : vector<8x128xf32>
    %cst_95 = arith.constant 0.797884583 : f32
    %175 = vector.broadcast %cst_95 : f32 to vector<8x128xf32>
    %176 = arith.mulf %175, %174 : vector<8x128xf32>
    %177 = math.tanh %176 : vector<8x128xf32>
    %cst_96 = arith.constant 1.000000e+00 : f32
    %178 = vector.broadcast %cst_96 : f32 to vector<8x128xf32>
    %179 = arith.addf %178, %177 : vector<8x128xf32>
    %180 = arith.mulf %169, %179 : vector<8x128xf32>
    %c0_97 = arith.constant 0 : index
    %c0_98 = arith.constant 0 : index
    %181 = vector.load %arg22[%c0_97, %c0_98] : memref<128x32xbf16, #tpu.memory_space<vmem>>, vector<128x32xbf16>
    %182 = arith.truncf %180 : vector<8x128xf32> to vector<8x128xbf16>
    %cst_99 = arith.constant dense<0.000000e+00> : vector<8x32xf32>
    %183 = tpu.matmul %182, %181, %cst_99 {dimension_numbers = #tpu.dot_dimension_numbers<[1], [0], [0], [1], [0, 0, 1, 1], [], []>} : vector<8x128xbf16>, vector<128x32xbf16>, vector<8x32xf32> -> vector<8x32xf32>
    %184 = arith.addf %137, %183 : vector<8x32xf32>
    %c0_100 = arith.constant 0 : index
    %c0_101 = arith.constant 0 : index
    %185 = vector.load %arg23[%c0_100, %c0_101] : memref<1x32xf32, #tpu.memory_space<vmem>>, vector<1x32xf32>
    %186 = vector.broadcast %185 : vector<1x32xf32> to vector<8x32xf32>
    %187 = arith.addf %184, %186 : vector<8x32xf32>
    %c0_102 = arith.constant 0 : index
    %c0_103 = arith.constant 0 : index
    %188 = vector.load %arg24[%c0_102, %c0_103] : memref<1x32xf32, #tpu.memory_space<vmem>>, vector<1x32xf32>
    %c0_104 = arith.constant 0 : index
    %c0_105 = arith.constant 0 : index
    %189 = vector.load %arg25[%c0_104, %c0_105] : memref<1x32xf32, #tpu.memory_space<vmem>>, vector<1x32xf32>
    %cst_106 = arith.constant dense<0.000000e+00> : vector<8xf32>
    %190 = vector.multi_reduction <add>, %187, %cst_106 [1] : vector<8x32xf32> to vector<8xf32>
    %191 = vector.shape_cast %190 : vector<8xf32> to vector<8x1xf32>
    %cst_107 = arith.constant 3.200000e+01 : f32
    %192 = vector.broadcast %cst_107 : f32 to vector<8x1xf32>
    %193 = arith.divf %191, %192 : vector<8x1xf32>
    %194 = vector.broadcast %193 : vector<8x1xf32> to vector<8x32xf32>
    %195 = arith.subf %187, %194 : vector<8x32xf32>
    %196 = arith.mulf %195, %195 : vector<8x32xf32>
    %cst_108 = arith.constant dense<0.000000e+00> : vector<8xf32>
    %197 = vector.multi_reduction <add>, %196, %cst_108 [1] : vector<8x32xf32> to vector<8xf32>
    %198 = vector.shape_cast %197 : vector<8xf32> to vector<8x1xf32>
    %cst_109 = arith.constant 3.200000e+01 : f32
    %199 = vector.broadcast %cst_109 : f32 to vector<8x1xf32>
    %200 = arith.divf %198, %199 : vector<8x1xf32>
    %201 = vector.broadcast %193 : vector<8x1xf32> to vector<8x32xf32>
    %202 = arith.subf %187, %201 : vector<8x32xf32>
    %cst_110 = arith.constant 9.99999974E-6 : f32
    %203 = vector.broadcast %cst_110 : f32 to vector<8x1xf32>
    %204 = arith.addf %200, %203 : vector<8x1xf32>
    %205 = math.rsqrt %204 : vector<8x1xf32>
    %206 = vector.broadcast %205 : vector<8x1xf32> to vector<8x32xf32>
    %207 = arith.mulf %202, %206 : vector<8x32xf32>
    %208 = vector.broadcast %188 : vector<1x32xf32> to vector<8x32xf32>
    %209 = arith.mulf %207, %208 : vector<8x32xf32>
    %210 = vector.broadcast %189 : vector<1x32xf32> to vector<8x32xf32>
    %211 = arith.addf %209, %210 : vector<8x32xf32>
    %212 = arith.truncf %211 : vector<8x32xf32> to vector<8x32xbf16>
    %c0_111 = arith.constant 0 : index
    %c0_112 = arith.constant 0 : index
    %c0_113 = arith.constant 0 : index
    %213 = vector.load %arg26[%c0_111, %c0_112, %c0_113] : memref<2x32x16xbf16, #tpu.memory_space<vmem>>, vector<1x32x16xbf16>
    %214 = vector.shape_cast %213 : vector<1x32x16xbf16> to vector<32x16xbf16>
    %cst_114 = arith.constant dense<0.000000e+00> : vector<8x16xf32>
    %215 = tpu.matmul %212, %214, %cst_114 {dimension_numbers = #tpu.dot_dimension_numbers<[1], [0], [0], [1], [0, 0, 1, 1], [], []>} : vector<8x32xbf16>, vector<32x16xbf16>, vector<8x16xf32> -> vector<8x16xf32>
    %c0_115 = arith.constant 0 : index
    %c0_116 = arith.constant 0 : index
    %c0_117 = arith.constant 0 : index
    %216 = vector.load %arg29[%c0_115, %c0_116, %c0_117] : memref<2x1x16xf32, #tpu.memory_space<vmem>>, vector<1x1x16xf32>
    %217 = vector.shape_cast %216 : vector<1x1x16xf32> to vector<1x16xf32>
    %218 = vector.broadcast %217 : vector<1x16xf32> to vector<8x16xf32>
    %219 = arith.addf %215, %218 : vector<8x16xf32>
    %c0_118 = arith.constant 0 : index
    %c0_119 = arith.constant 0 : index
    %c0_120 = arith.constant 0 : index
    %220 = vector.load %arg27[%c0_118, %c0_119, %c0_120] : memref<2x32x16xbf16, #tpu.memory_space<vmem>>, vector<1x32x16xbf16>
    %221 = vector.shape_cast %220 : vector<1x32x16xbf16> to vector<32x16xbf16>
    %cst_121 = arith.constant dense<0.000000e+00> : vector<8x16xf32>
    %222 = tpu.matmul %212, %221, %cst_121 {dimension_numbers = #tpu.dot_dimension_numbers<[1], [0], [0], [1], [0, 0, 1, 1], [], []>} : vector<8x32xbf16>, vector<32x16xbf16>, vector<8x16xf32> -> vector<8x16xf32>
    %c0_122 = arith.constant 0 : index
    %c0_123 = arith.constant 0 : index
    %c0_124 = arith.constant 0 : index
    %223 = vector.load %arg30[%c0_122, %c0_123, %c0_124] : memref<2x1x16xf32, #tpu.memory_space<vmem>>, vector<1x1x16xf32>
    %224 = vector.shape_cast %223 : vector<1x1x16xf32> to vector<1x16xf32>
    %225 = vector.broadcast %224 : vector<1x16xf32> to vector<8x16xf32>
    %226 = arith.addf %222, %225 : vector<8x16xf32>
    %c0_125 = arith.constant 0 : index
    %c0_126 = arith.constant 0 : index
    %c0_127 = arith.constant 0 : index
    %227 = vector.load %arg28[%c0_125, %c0_126, %c0_127] : memref<2x32x16xbf16, #tpu.memory_space<vmem>>, vector<1x32x16xbf16>
    %228 = vector.shape_cast %227 : vector<1x32x16xbf16> to vector<32x16xbf16>
    %cst_128 = arith.constant dense<0.000000e+00> : vector<8x16xf32>
    %229 = tpu.matmul %212, %228, %cst_128 {dimension_numbers = #tpu.dot_dimension_numbers<[1], [0], [0], [1], [0, 0, 1, 1], [], []>} : vector<8x32xbf16>, vector<32x16xbf16>, vector<8x16xf32> -> vector<8x16xf32>
    %c0_129 = arith.constant 0 : index
    %c0_130 = arith.constant 0 : index
    %c0_131 = arith.constant 0 : index
    %230 = vector.load %arg31[%c0_129, %c0_130, %c0_131] : memref<2x1x16xf32, #tpu.memory_space<vmem>>, vector<1x1x16xf32>
    %231 = vector.shape_cast %230 : vector<1x1x16xf32> to vector<1x16xf32>
    %232 = vector.broadcast %231 : vector<1x16xf32> to vector<8x16xf32>
    %233 = arith.addf %229, %232 : vector<8x16xf32>
    %234 = arith.truncf %219 : vector<8x16xf32> to vector<8x16xbf16>
    %235 = arith.truncf %226 : vector<8x16xf32> to vector<8x16xbf16>
    %cst_132 = arith.constant dense<0.000000e+00> : vector<8x8xf32>
    %236 = tpu.matmul %234, %235, %cst_132 {dimension_numbers = #tpu.dot_dimension_numbers<[1], [1], [0], [0], [0, 0, 1, 0], [], []>} : vector<8x16xbf16>, vector<8x16xbf16>, vector<8x8xf32> -> vector<8x8xf32>
    %c1_133 = arith.constant 1 : index
    %c0_134 = arith.constant 0 : index
    %c0_135 = arith.constant 0 : index
    %237 = vector.load %arg26[%c1_133, %c0_134, %c0_135] : memref<2x32x16xbf16, #tpu.memory_space<vmem>>, vector<1x32x16xbf16>
    %238 = vector.shape_cast %237 : vector<1x32x16xbf16> to vector<32x16xbf16>
    %cst_136 = arith.constant dense<0.000000e+00> : vector<8x16xf32>
    %239 = tpu.matmul %212, %238, %cst_136 {dimension_numbers = #tpu.dot_dimension_numbers<[1], [0], [0], [1], [0, 0, 1, 1], [], []>} : vector<8x32xbf16>, vector<32x16xbf16>, vector<8x16xf32> -> vector<8x16xf32>
    %c1_137 = arith.constant 1 : index
    %c0_138 = arith.constant 0 : index
    %c0_139 = arith.constant 0 : index
    %240 = vector.load %arg29[%c1_137, %c0_138, %c0_139] : memref<2x1x16xf32, #tpu.memory_space<vmem>>, vector<1x1x16xf32>
    %241 = vector.shape_cast %240 : vector<1x1x16xf32> to vector<1x16xf32>
    %242 = vector.broadcast %241 : vector<1x16xf32> to vector<8x16xf32>
    %243 = arith.addf %239, %242 : vector<8x16xf32>
    %c1_140 = arith.constant 1 : index
    %c0_141 = arith.constant 0 : index
    %c0_142 = arith.constant 0 : index
    %244 = vector.load %arg27[%c1_140, %c0_141, %c0_142] : memref<2x32x16xbf16, #tpu.memory_space<vmem>>, vector<1x32x16xbf16>
    %245 = vector.shape_cast %244 : vector<1x32x16xbf16> to vector<32x16xbf16>
    %cst_143 = arith.constant dense<0.000000e+00> : vector<8x16xf32>
    %246 = tpu.matmul %212, %245, %cst_143 {dimension_numbers = #tpu.dot_dimension_numbers<[1], [0], [0], [1], [0, 0, 1, 1], [], []>} : vector<8x32xbf16>, vector<32x16xbf16>, vector<8x16xf32> -> vector<8x16xf32>
    %c1_144 = arith.constant 1 : index
    %c0_145 = arith.constant 0 : index
    %c0_146 = arith.constant 0 : index
    %247 = vector.load %arg30[%c1_144, %c0_145, %c0_146] : memref<2x1x16xf32, #tpu.memory_space<vmem>>, vector<1x1x16xf32>
    %248 = vector.shape_cast %247 : vector<1x1x16xf32> to vector<1x16xf32>
    %249 = vector.broadcast %248 : vector<1x16xf32> to vector<8x16xf32>
    %250 = arith.addf %246, %249 : vector<8x16xf32>
    %c1_147 = arith.constant 1 : index
    %c0_148 = arith.constant 0 : index
    %c0_149 = arith.constant 0 : index
    %251 = vector.load %arg28[%c1_147, %c0_148, %c0_149] : memref<2x32x16xbf16, #tpu.memory_space<vmem>>, vector<1x32x16xbf16>
    %252 = vector.shape_cast %251 : vector<1x32x16xbf16> to vector<32x16xbf16>
    %cst_150 = arith.constant dense<0.000000e+00> : vector<8x16xf32>
    %253 = tpu.matmul %212, %252, %cst_150 {dimension_numbers = #tpu.dot_dimension_numbers<[1], [0], [0], [1], [0, 0, 1, 1], [], []>} : vector<8x32xbf16>, vector<32x16xbf16>, vector<8x16xf32> -> vector<8x16xf32>
    %c1_151 = arith.constant 1 : index
    %c0_152 = arith.constant 0 : index
    %c0_153 = arith.constant 0 : index
    %254 = vector.load %arg31[%c1_151, %c0_152, %c0_153] : memref<2x1x16xf32, #tpu.memory_space<vmem>>, vector<1x1x16xf32>
    %255 = vector.shape_cast %254 : vector<1x1x16xf32> to vector<1x16xf32>
    %256 = vector.broadcast %255 : vector<1x16xf32> to vector<8x16xf32>
    %257 = arith.addf %253, %256 : vector<8x16xf32>
    %258 = arith.truncf %243 : vector<8x16xf32> to vector<8x16xbf16>
    %259 = arith.truncf %250 : vector<8x16xf32> to vector<8x16xbf16>
    %cst_154 = arith.constant dense<0.000000e+00> : vector<8x8xf32>
    %260 = tpu.matmul %258, %259, %cst_154 {dimension_numbers = #tpu.dot_dimension_numbers<[1], [1], [0], [0], [0, 0, 1, 0], [], []>} : vector<8x16xbf16>, vector<8x16xbf16>, vector<8x8xf32> -> vector<8x8xf32>
    %261 = vector.shape_cast %236 : vector<8x8xf32> to vector<1x8x8xf32>
    %262 = vector.shape_cast %260 : vector<8x8xf32> to vector<1x8x8xf32>
    %263 = tpu.concatenate %261, %262 in 0 : vector<1x8x8xf32>, vector<1x8x8xf32> -> vector<2x8x8xf32>
    %264 = vector.shape_cast %24 : vector<8x8xf32> to vector<1x8x8xf32>
    %265 = vector.broadcast %264 : vector<1x8x8xf32> to vector<2x8x8xf32>
    %266 = arith.addf %263, %265 : vector<2x8x8xf32>
    %cst_155 = arith.constant dense<0xFF800000> : vector<2x8xf32>
    %267 = vector.multi_reduction <maximumf>, %266, %cst_155 [2] : vector<2x8x8xf32> to vector<2x8xf32>
    %268 = vector.shape_cast %267 : vector<2x8xf32> to vector<2x8x1xf32>
    %269 = vector.broadcast %268 : vector<2x8x1xf32> to vector<2x8x8xf32>
    %270 = arith.subf %266, %269 : vector<2x8x8xf32>
    %271 = math.exp %270 : vector<2x8x8xf32>
    %cst_156 = arith.constant dense<0.000000e+00> : vector<2x8xf32>
    %272 = vector.multi_reduction <add>, %271, %cst_156 [2] : vector<2x8x8xf32> to vector<2x8xf32>
    %273 = vector.shape_cast %272 : vector<2x8xf32> to vector<2x8x1xf32>
    %cst_157 = arith.constant 1.000000e+00 : f32
    %274 = vector.broadcast %cst_157 : f32 to vector<2x8x1xf32>
    %275 = arith.divf %274, %273 : vector<2x8x1xf32>
    %276 = vector.broadcast %275 : vector<2x8x1xf32> to vector<2x8x8xf32>
    %277 = arith.mulf %271, %276 : vector<2x8x8xf32>
    %278 = vector.extract_strided_slice %277 {offsets = [0, 0, 0], sizes = [1, 8, 8], strides = [1, 1, 1]} : vector<2x8x8xf32> to vector<1x8x8xf32>
    %279 = vector.shape_cast %278 : vector<1x8x8xf32> to vector<8x8xf32>
    %280 = arith.truncf %279 : vector<8x8xf32> to vector<8x8xbf16>
    %281 = arith.truncf %233 : vector<8x16xf32> to vector<8x16xbf16>
    %cst_158 = arith.constant dense<0.000000e+00> : vector<8x16xf32>
    %282 = tpu.matmul %280, %281, %cst_158 {dimension_numbers = #tpu.dot_dimension_numbers<[1], [0], [0], [1], [0, 0, 1, 1], [], []>} : vector<8x8xbf16>, vector<8x16xbf16>, vector<8x16xf32> -> vector<8x16xf32>
    %c0_159 = arith.constant 0 : index
    %c0_160 = arith.constant 0 : index
    %c0_161 = arith.constant 0 : index
    %283 = vector.load %arg32[%c0_159, %c0_160, %c0_161] : memref<2x16x32xbf16, #tpu.memory_space<vmem>>, vector<1x16x32xbf16>
    %284 = vector.shape_cast %283 : vector<1x16x32xbf16> to vector<16x32xbf16>
    %285 = arith.truncf %282 : vector<8x16xf32> to vector<8x16xbf16>
    %cst_162 = arith.constant dense<0.000000e+00> : vector<8x32xf32>
    %286 = tpu.matmul %285, %284, %cst_162 {dimension_numbers = #tpu.dot_dimension_numbers<[1], [0], [0], [1], [0, 0, 1, 1], [], []>} : vector<8x16xbf16>, vector<16x32xbf16>, vector<8x32xf32> -> vector<8x32xf32>
    %287 = vector.extract_strided_slice %277 {offsets = [1, 0, 0], sizes = [1, 8, 8], strides = [1, 1, 1]} : vector<2x8x8xf32> to vector<1x8x8xf32>
    %288 = vector.shape_cast %287 : vector<1x8x8xf32> to vector<8x8xf32>
    %289 = arith.truncf %288 : vector<8x8xf32> to vector<8x8xbf16>
    %290 = arith.truncf %257 : vector<8x16xf32> to vector<8x16xbf16>
    %cst_163 = arith.constant dense<0.000000e+00> : vector<8x16xf32>
    %291 = tpu.matmul %289, %290, %cst_163 {dimension_numbers = #tpu.dot_dimension_numbers<[1], [0], [0], [1], [0, 0, 1, 1], [], []>} : vector<8x8xbf16>, vector<8x16xbf16>, vector<8x16xf32> -> vector<8x16xf32>
    %c1_164 = arith.constant 1 : index
    %c0_165 = arith.constant 0 : index
    %c0_166 = arith.constant 0 : index
    %292 = vector.load %arg32[%c1_164, %c0_165, %c0_166] : memref<2x16x32xbf16, #tpu.memory_space<vmem>>, vector<1x16x32xbf16>
    %293 = vector.shape_cast %292 : vector<1x16x32xbf16> to vector<16x32xbf16>
    %294 = arith.truncf %291 : vector<8x16xf32> to vector<8x16xbf16>
    %cst_167 = arith.constant dense<0.000000e+00> : vector<8x32xf32>
    %295 = tpu.matmul %294, %293, %cst_167 {dimension_numbers = #tpu.dot_dimension_numbers<[1], [0], [0], [1], [0, 0, 1, 1], [], []>} : vector<8x16xbf16>, vector<16x32xbf16>, vector<8x32xf32> -> vector<8x32xf32>
    %296 = arith.addf %286, %295 : vector<8x32xf32>
    %297 = arith.addf %187, %296 : vector<8x32xf32>
    %c0_168 = arith.constant 0 : index
    %c0_169 = arith.constant 0 : index
    %298 = vector.load %arg33[%c0_168, %c0_169] : memref<1x32xf32, #tpu.memory_space<vmem>>, vector<1x32xf32>
    %299 = vector.broadcast %298 : vector<1x32xf32> to vector<8x32xf32>
    %300 = arith.addf %297, %299 : vector<8x32xf32>
    %c0_170 = arith.constant 0 : index
    %c0_171 = arith.constant 0 : index
    %301 = vector.load %arg34[%c0_170, %c0_171] : memref<1x32xf32, #tpu.memory_space<vmem>>, vector<1x32xf32>
    %c0_172 = arith.constant 0 : index
    %c0_173 = arith.constant 0 : index
    %302 = vector.load %arg35[%c0_172, %c0_173] : memref<1x32xf32, #tpu.memory_space<vmem>>, vector<1x32xf32>
    %cst_174 = arith.constant dense<0.000000e+00> : vector<8xf32>
    %303 = vector.multi_reduction <add>, %300, %cst_174 [1] : vector<8x32xf32> to vector<8xf32>
    %304 = vector.shape_cast %303 : vector<8xf32> to vector<8x1xf32>
    %cst_175 = arith.constant 3.200000e+01 : f32
    %305 = vector.broadcast %cst_175 : f32 to vector<8x1xf32>
    %306 = arith.divf %304, %305 : vector<8x1xf32>
    %307 = vector.broadcast %306 : vector<8x1xf32> to vector<8x32xf32>
    %308 = arith.subf %300, %307 : vector<8x32xf32>
    %309 = arith.mulf %308, %308 : vector<8x32xf32>
    %cst_176 = arith.constant dense<0.000000e+00> : vector<8xf32>
    %310 = vector.multi_reduction <add>, %309, %cst_176 [1] : vector<8x32xf32> to vector<8xf32>
    %311 = vector.shape_cast %310 : vector<8xf32> to vector<8x1xf32>
    %cst_177 = arith.constant 3.200000e+01 : f32
    %312 = vector.broadcast %cst_177 : f32 to vector<8x1xf32>
    %313 = arith.divf %311, %312 : vector<8x1xf32>
    %314 = vector.broadcast %306 : vector<8x1xf32> to vector<8x32xf32>
    %315 = arith.subf %300, %314 : vector<8x32xf32>
    %cst_178 = arith.constant 9.99999974E-6 : f32
    %316 = vector.broadcast %cst_178 : f32 to vector<8x1xf32>
    %317 = arith.addf %313, %316 : vector<8x1xf32>
    %318 = math.rsqrt %317 : vector<8x1xf32>
    %319 = vector.broadcast %318 : vector<8x1xf32> to vector<8x32xf32>
    %320 = arith.mulf %315, %319 : vector<8x32xf32>
    %321 = vector.broadcast %301 : vector<1x32xf32> to vector<8x32xf32>
    %322 = arith.mulf %320, %321 : vector<8x32xf32>
    %323 = vector.broadcast %302 : vector<1x32xf32> to vector<8x32xf32>
    %324 = arith.addf %322, %323 : vector<8x32xf32>
    %c0_179 = arith.constant 0 : index
    %c0_180 = arith.constant 0 : index
    %325 = vector.load %arg36[%c0_179, %c0_180] : memref<32x128xbf16, #tpu.memory_space<vmem>>, vector<32x128xbf16>
    %326 = arith.truncf %324 : vector<8x32xf32> to vector<8x32xbf16>
    %cst_181 = arith.constant dense<0.000000e+00> : vector<8x128xf32>
    %327 = tpu.matmul %326, %325, %cst_181 {dimension_numbers = #tpu.dot_dimension_numbers<[1], [0], [0], [1], [0, 0, 1, 1], [], []>} : vector<8x32xbf16>, vector<32x128xbf16>, vector<8x128xf32> -> vector<8x128xf32>
    %c0_182 = arith.constant 0 : index
    %c0_183 = arith.constant 0 : index
    %328 = vector.load %arg37[%c0_182, %c0_183] : memref<1x128xf32, #tpu.memory_space<vmem>>, vector<1x128xf32>
    %329 = vector.broadcast %328 : vector<1x128xf32> to vector<8x128xf32>
    %330 = arith.addf %327, %329 : vector<8x128xf32>
    %cst_184 = arith.constant 5.000000e-01 : f32
    %331 = vector.broadcast %cst_184 : f32 to vector<8x128xf32>
    %332 = arith.mulf %331, %330 : vector<8x128xf32>
    %cst_185 = arith.constant 4.471500e-02 : f32
    %333 = vector.broadcast %cst_185 : f32 to vector<8x128xf32>
    %334 = arith.mulf %333, %330 : vector<8x128xf32>
    %335 = arith.mulf %334, %330 : vector<8x128xf32>
    %336 = arith.mulf %335, %330 : vector<8x128xf32>
    %337 = arith.addf %330, %336 : vector<8x128xf32>
    %cst_186 = arith.constant 0.797884583 : f32
    %338 = vector.broadcast %cst_186 : f32 to vector<8x128xf32>
    %339 = arith.mulf %338, %337 : vector<8x128xf32>
    %340 = math.tanh %339 : vector<8x128xf32>
    %cst_187 = arith.constant 1.000000e+00 : f32
    %341 = vector.broadcast %cst_187 : f32 to vector<8x128xf32>
    %342 = arith.addf %341, %340 : vector<8x128xf32>
    %343 = arith.mulf %332, %342 : vector<8x128xf32>
    %c0_188 = arith.constant 0 : index
    %c0_189 = arith.constant 0 : index
    %344 = vector.load %arg38[%c0_188, %c0_189] : memref<128x32xbf16, #tpu.memory_space<vmem>>, vector<128x32xbf16>
    %345 = arith.truncf %343 : vector<8x128xf32> to vector<8x128xbf16>
    %cst_190 = arith.constant dense<0.000000e+00> : vector<8x32xf32>
    %346 = tpu.matmul %345, %344, %cst_190 {dimension_numbers = #tpu.dot_dimension_numbers<[1], [0], [0], [1], [0, 0, 1, 1], [], []>} : vector<8x128xbf16>, vector<128x32xbf16>, vector<8x32xf32> -> vector<8x32xf32>
    %347 = arith.addf %300, %346 : vector<8x32xf32>
    %c0_191 = arith.constant 0 : index
    %c0_192 = arith.constant 0 : index
    %348 = vector.load %arg39[%c0_191, %c0_192] : memref<1x32xf32, #tpu.memory_space<vmem>>, vector<1x32xf32>
    %349 = vector.broadcast %348 : vector<1x32xf32> to vector<8x32xf32>
    %350 = arith.addf %347, %349 : vector<8x32xf32>
    %c0_193 = arith.constant 0 : index
    %c0_194 = arith.constant 0 : index
    %351 = vector.load %arg6[%c0_193, %c0_194] : memref<1x32xf32, #tpu.memory_space<vmem>>, vector<1x32xf32>
    %c0_195 = arith.constant 0 : index
    %c0_196 = arith.constant 0 : index
    %352 = vector.load %arg7[%c0_195, %c0_196] : memref<1x32xf32, #tpu.memory_space<vmem>>, vector<1x32xf32>
    %cst_197 = arith.constant dense<0.000000e+00> : vector<8xf32>
    %353 = vector.multi_reduction <add>, %350, %cst_197 [1] : vector<8x32xf32> to vector<8xf32>
    %354 = vector.shape_cast %353 : vector<8xf32> to vector<8x1xf32>
    %cst_198 = arith.constant 3.200000e+01 : f32
    %355 = vector.broadcast %cst_198 : f32 to vector<8x1xf32>
    %356 = arith.divf %354, %355 : vector<8x1xf32>
    %357 = vector.broadcast %356 : vector<8x1xf32> to vector<8x32xf32>
    %358 = arith.subf %350, %357 : vector<8x32xf32>
    %359 = arith.mulf %358, %358 : vector<8x32xf32>
    %cst_199 = arith.constant dense<0.000000e+00> : vector<8xf32>
    %360 = vector.multi_reduction <add>, %359, %cst_199 [1] : vector<8x32xf32> to vector<8xf32>
    %361 = vector.shape_cast %360 : vector<8xf32> to vector<8x1xf32>
    %cst_200 = arith.constant 3.200000e+01 : f32
    %362 = vector.broadcast %cst_200 : f32 to vector<8x1xf32>
    %363 = arith.divf %361, %362 : vector<8x1xf32>
    %364 = vector.broadcast %356 : vector<8x1xf32> to vector<8x32xf32>
    %365 = arith.subf %350, %364 : vector<8x32xf32>
    %cst_201 = arith.constant 9.99999974E-6 : f32
    %366 = vector.broadcast %cst_201 : f32 to vector<8x1xf32>
    %367 = arith.addf %363, %366 : vector<8x1xf32>
    %368 = math.rsqrt %367 : vector<8x1xf32>
    %369 = vector.broadcast %368 : vector<8x1xf32> to vector<8x32xf32>
    %370 = arith.mulf %365, %369 : vector<8x32xf32>
    %371 = vector.broadcast %351 : vector<1x32xf32> to vector<8x32xf32>
    %372 = arith.mulf %370, %371 : vector<8x32xf32>
    %373 = vector.broadcast %352 : vector<1x32xf32> to vector<8x32xf32>
    %374 = arith.addf %372, %373 : vector<8x32xf32>
    %375 = arith.truncf %374 : vector<8x32xf32> to vector<8x32xbf16>
    %cst_202 = arith.constant dense<0.000000e+00> : vector<8x128xf32>
    %376 = tpu.matmul %375, %0, %cst_202 {dimension_numbers = #tpu.dot_dimension_numbers<[1], [1], [0], [0], [0, 0, 1, 0], [], []>} : vector<8x32xbf16>, vector<128x32xbf16>, vector<8x128xf32> -> vector<8x128xf32>
    %cst_203 = arith.constant dense<0xFF800000> : vector<8xf32>
    %377 = vector.multi_reduction <maximumf>, %376, %cst_203 [1] : vector<8x128xf32> to vector<8xf32>
    %378 = vector.shape_cast %377 : vector<8xf32> to vector<8x1xf32>
    %379 = vector.broadcast %378 : vector<8x1xf32> to vector<8x128xf32>
    %380 = arith.subf %376, %379 : vector<8x128xf32>
    %381 = math.exp %380 : vector<8x128xf32>
    %cst_204 = arith.constant dense<0.000000e+00> : vector<8xf32>
    %382 = vector.multi_reduction <add>, %381, %cst_204 [1] : vector<8x128xf32> to vector<8xf32>
    %383 = vector.shape_cast %382 : vector<8xf32> to vector<8x1xf32>
    %384 = math.log %383 : vector<8x1xf32>
    %385 = arith.addf %378, %384 : vector<8x1xf32>
    %c0_205 = arith.constant 0 : index
    %c0_206 = arith.constant 0 : index
    %386 = vector.load %arg2[%c0_205, %c0_206] : memref<8x1xi32, #tpu.memory_space<vmem>>, vector<8x1xi32>
    %387 = tpu.iota {dimensions = array<i32: 1>} : vector<8x128xi32>
    %388 = vector.broadcast %386 : vector<8x1xi32> to vector<8x128xi32>
    %389 = arith.cmpi eq, %387, %388 : vector<8x128xi32>
    %cst_207 = arith.constant 0.000000e+00 : f32
    %390 = vector.broadcast %cst_207 : f32 to vector<8x128xf32>
    %391 = arith.select %389, %376, %390 : vector<8x128xi1>, vector<8x128xf32>
    %cst_208 = arith.constant dense<0.000000e+00> : vector<8xf32>
    %392 = vector.multi_reduction <add>, %391, %cst_208 [1] : vector<8x128xf32> to vector<8xf32>
    %393 = vector.shape_cast %392 : vector<8xf32> to vector<8x1xf32>
    %394 = arith.subf %393, %385 : vector<8x1xf32>
    %c0_209 = arith.constant 0 : index
    %c0_210 = arith.constant 0 : index
    %395 = vector.load %arg40[%c0_209, %c0_210] : memref<8x1xf32, #tpu.memory_space<vmem>>, vector<8x1xf32>
    tpu.vector_store %arg40[%c0_209, %c0_210], %394 {strides = array<i32>} : memref<8x1xf32, #tpu.memory_space<vmem>>, vector<8x1xf32>,
    return
  }
  func.func @transform_0(%arg0: i32) -> (i32, i32) {
    %c0_i32 = arith.constant 0 : i32
    %c0_i32_0 = arith.constant 0 : i32
    return %arg0, %c0_i32 : i32, i32
  }
  func.func @transform_1(%arg0: i32) -> (i32, i32) {
    %c0_i32 = arith.constant 0 : i32
    %c0_i32_0 = arith.constant 0 : i32
    return %arg0, %c0_i32 : i32, i32
  }
  func.func @transform_2(%arg0: i32) -> (i32, i32, i32) {
    %c0_i32 = arith.constant 0 : i32
    %c0_i32_0 = arith.constant 0 : i32
    %c0_i32_1 = arith.constant 0 : i32
    return %arg0, %c0_i32, %c0_i32_0 : i32, i32, i32
  }
  func.func @transform_3(%arg0: i32) -> (i32, i32) {
    %c0_i32 = arith.constant 0 : i32
    %c0_i32_0 = arith.constant 0 : i32
    %c0_i32_1 = arith.constant 0 : i32
    return %c0_i32, %c0_i32_0 : i32, i32
  }
  func.func @transform_4(%arg0: i32) -> (i32, i32) {
    %c0_i32 = arith.constant 0 : i32
    %c0_i32_0 = arith.constant 0 : i32
    %c0_i32_1 = arith.constant 0 : i32
    return %c0_i32, %c0_i32_0 : i32, i32
  }
  func.func @transform_5(%arg0: i32) -> (i32, i32) {
    %c0_i32 = arith.constant 0 : i32
    %c0_i32_0 = arith.constant 0 : i32
    %c0_i32_1 = arith.constant 0 : i32
    return %c0_i32, %c0_i32_0 : i32, i32
  }
  func.func @transform_6(%arg0: i32) -> (i32, i32) {
    %c0_i32 = arith.constant 0 : i32
    %c0_i32_0 = arith.constant 0 : i32
    %c0_i32_1 = arith.constant 0 : i32
    return %c0_i32, %c0_i32_0 : i32, i32
  }
  func.func @transform_7(%arg0: i32) -> (i32, i32) {
    %c0_i32 = arith.constant 0 : i32
    %c0_i32_0 = arith.constant 0 : i32
    %c0_i32_1 = arith.constant 0 : i32
    return %c0_i32, %c0_i32_0 : i32, i32
  }
  func.func @transform_8(%arg0: i32) -> (i32, i32) {
    %c0_i32 = arith.constant 0 : i32
    %c0_i32_0 = arith.constant 0 : i32
    %c0_i32_1 = arith.constant 0 : i32
    return %c0_i32, %c0_i32_0 : i32, i32
  }
  func.func @transform_9(%arg0: i32) -> (i32, i32, i32) {
    %c0_i32 = arith.constant 0 : i32
    %c0_i32_0 = arith.constant 0 : i32
    %c0_i32_1 = arith.constant 0 : i32
    %c0_i32_2 = arith.constant 0 : i32
    return %c0_i32, %c0_i32_0, %c0_i32_1 : i32, i32, i32
  }
  func.func @transform_10(%arg0: i32) -> (i32, i32, i32) {
    %c0_i32 = arith.constant 0 : i32
    %c0_i32_0 = arith.constant 0 : i32
    %c0_i32_1 = arith.constant 0 : i32
    %c0_i32_2 = arith.constant 0 : i32
    return %c0_i32, %c0_i32_0, %c0_i32_1 : i32, i32, i32
  }
  func.func @transform_11(%arg0: i32) -> (i32, i32, i32) {
    %c0_i32 = arith.constant 0 : i32
    %c0_i32_0 = arith.constant 0 : i32
    %c0_i32_1 = arith.constant 0 : i32
    %c0_i32_2 = arith.constant 0 : i32
    return %c0_i32, %c0_i32_0, %c0_i32_1 : i32, i32, i32
  }
  func.func @transform_12(%arg0: i32) -> (i32, i32, i32) {
    %c0_i32 = arith.constant 0 : i32
    %c0_i32_0 = arith.constant 0 : i32
    %c0_i32_1 = arith.constant 0 : i32
    %c0_i32_2 = arith.constant 0 : i32
    return %c0_i32, %c0_i32_0, %c0_i32_1 : i32, i32, i32
  }
  func.func @transform_13(%arg0: i32) -> (i32, i32, i32) {
    %c0_i32 = arith.constant 0 : i32
    %c0_i32_0 = arith.constant 0 : i32
    %c0_i32_1 = arith.constant 0 : i32
    %c0_i32_2 = arith.constant 0 : i32
    return %c0_i32, %c0_i32_0, %c0_i32_1 : i32, i32, i32
  }
  func.func @transform_14(%arg0: i32) -> (i32, i32, i32) {
    %c0_i32 = arith.constant 0 : i32
    %c0_i32_0 = arith.constant 0 : i32
    %c0_i32_1 = arith.constant 0 : i32
    %c0_i32_2 = arith.constant 0 : i32
    return %c0_i32, %c0_i32_0, %c0_i32_1 : i32, i32, i32
  }
  func.func @transform_15(%arg0: i32) -> (i32, i32, i32) {
    %c0_i32 = arith.constant 0 : i32
    %c0_i32_0 = arith.constant 0 : i32
    %c0_i32_1 = arith.constant 0 : i32
    %c0_i32_2 = arith.constant 0 : i32
    return %c0_i32, %c0_i32_0, %c0_i32_1 : i32, i32, i32
  }
  func.func @transform_16(%arg0: i32) -> (i32, i32) {
    %c0_i32 = arith.constant 0 : i32
    %c0_i32_0 = arith.constant 0 : i32
    %c0_i32_1 = arith.constant 0 : i32
    return %c0_i32, %c0_i32_0 : i32, i32
  }
  func.func @transform_17(%arg0: i32) -> (i32, i32) {
    %c0_i32 = arith.constant 0 : i32
    %c0_i32_0 = arith.constant 0 : i32
    %c0_i32_1 = arith.constant 0 : i32
    return %c0_i32, %c0_i32_0 : i32, i32
  }
  func.func @transform_18(%arg0: i32) -> (i32, i32) {
    %c0_i32 = arith.constant 0 : i32
    %c0_i32_0 = arith.constant 0 : i32
    %c0_i32_1 = arith.constant 0 : i32
    return %c0_i32, %c0_i32_0 : i32, i32
  }
  func.func @transform_19(%arg0: i32) -> (i32, i32) {
    %c0_i32 = arith.constant 0 : i32
    %c0_i32_0 = arith.constant 0 : i32
    %c0_i32_1 = arith.constant 0 : i32
    return %c0_i32, %c0_i32_0 : i32, i32
  }
  func.func @transform_20(%arg0: i32) -> (i32, i32) {
    %c0_i32 = arith.constant 0 : i32
    %c0_i32_0 = arith.constant 0 : i32
    %c0_i32_1 = arith.constant 0 : i32
    return %c0_i32, %c0_i32_0 : i32, i32
  }
  func.func @transform_21(%arg0: i32) -> (i32, i32) {
    %c0_i32 = arith.constant 0 : i32
    %c0_i32_0 = arith.constant 0 : i32
    %c0_i32_1 = arith.constant 0 : i32
    return %c0_i32, %c0_i32_0 : i32, i32
  }
  func.func @transform_22(%arg0: i32) -> (i32, i32) {
    %c0_i32 = arith.constant 0 : i32
    %c0_i32_0 = arith.constant 0 : i32
    %c0_i32_1 = arith.constant 0 : i32
    return %c0_i32, %c0_i32_0 : i32, i32
  }
  func.func @transform_23(%arg0: i32) -> (i32, i32) {
    %c0_i32 = arith.constant 0 : i32
    %c0_i32_0 = arith.constant 0 : i32
    %c0_i32_1 = arith.constant 0 : i32
    return %c0_i32, %c0_i32_0 : i32, i32
  }
  func.func @transform_24(%arg0: i32) -> (i32, i32) {
    %c0_i32 = arith.constant 0 : i32
    %c0_i32_0 = arith.constant 0 : i32
    %c0_i32_1 = arith.constant 0 : i32
    return %c0_i32, %c0_i32_0 : i32, i32
  }
  func.func @transform_25(%arg0: i32) -> (i32, i32, i32) {
    %c0_i32 = arith.constant 0 : i32
    %c0_i32_0 = arith.constant 0 : i32
    %c0_i32_1 = arith.constant 0 : i32
    %c0_i32_2 = arith.constant 0 : i32
    return %c0_i32, %c0_i32_0, %c0_i32_1 : i32, i32, i32
  }
  func.func @transform_26(%arg0: i32) -> (i32, i32, i32) {
    %c0_i32 = arith.constant 0 : i32
    %c0_i32_0 = arith.constant 0 : i32
    %c0_i32_1 = arith.constant 0 : i32
    %c0_i32_2 = arith.constant 0 : i32
    return %c0_i32, %c0_i32_0, %c0_i32_1 : i32, i32, i32
  }
  func.func @transform_27(%arg0: i32) -> (i32, i32, i32) {
    %c0_i32 = arith.constant 0 : i32
    %c0_i32_0 = arith.constant 0 : i32
    %c0_i32_1 = arith.constant 0 : i32
    %c0_i32_2 = arith.constant 0 : i32
    return %c0_i32, %c0_i32_0, %c0_i32_1 : i32, i32, i32
  }
  func.func @transform_28(%arg0: i32) -> (i32, i32, i32) {
    %c0_i32 = arith.constant 0 : i32
    %c0_i32_0 = arith.constant 0 : i32
    %c0_i32_1 = arith.constant 0 : i32
    %c0_i32_2 = arith.constant 0 : i32
    return %c0_i32, %c0_i32_0, %c0_i32_1 : i32, i32, i32
  }
  func.func @transform_29(%arg0: i32) -> (i32, i32, i32) {
    %c0_i32 = arith.constant 0 : i32
    %c0_i32_0 = arith.constant 0 : i32
    %c0_i32_1 = arith.constant 0 : i32
    %c0_i32_2 = arith.constant 0 : i32
    return %c0_i32, %c0_i32_0, %c0_i32_1 : i32, i32, i32
  }
  func.func @transform_30(%arg0: i32) -> (i32, i32, i32) {
    %c0_i32 = arith.constant 0 : i32
    %c0_i32_0 = arith.constant 0 : i32
    %c0_i32_1 = arith.constant 0 : i32
    %c0_i32_2 = arith.constant 0 : i32
    return %c0_i32, %c0_i32_0, %c0_i32_1 : i32, i32, i32
  }
  func.func @transform_31(%arg0: i32) -> (i32, i32, i32) {
    %c0_i32 = arith.constant 0 : i32
    %c0_i32_0 = arith.constant 0 : i32
    %c0_i32_1 = arith.constant 0 : i32
    %c0_i32_2 = arith.constant 0 : i32
    return %c0_i32, %c0_i32_0, %c0_i32_1 : i32, i32, i32
  }
  func.func @transform_32(%arg0: i32) -> (i32, i32) {
    %c0_i32 = arith.constant 0 : i32
    %c0_i32_0 = arith.constant 0 : i32
    %c0_i32_1 = arith.constant 0 : i32
    return %c0_i32, %c0_i32_0 : i32, i32
  }
  func.func @transform_33(%arg0: i32) -> (i32, i32) {
    %c0_i32 = arith.constant 0 : i32
    %c0_i32_0 = arith.constant 0 : i32
    %c0_i32_1 = arith.constant 0 : i32
    return %c0_i32, %c0_i32_0 : i32, i32
  }
  func.func @transform_34(%arg0: i32) -> (i32, i32) {
    %c0_i32 = arith.constant 0 : i32
    %c0_i32_0 = arith.constant 0 : i32
    %c0_i32_1 = arith.constant 0 : i32
    return %c0_i32, %c0_i32_0 : i32, i32
  }
  func.func @transform_35(%arg0: i32) -> (i32, i32) {
    %c0_i32 = arith.constant 0 : i32
    %c0_i32_0 = arith.constant 0 : i32
    %c0_i32_1 = arith.constant 0 : i32
    return %c0_i32, %c0_i32_0 : i32, i32
  }
  func.func @transform_36(%arg0: i32) -> (i32, i32) {
    %c0_i32 = arith.constant 0 : i32
    %c0_i32_0 = arith.constant 0 : i32
    %c0_i32_1 = arith.constant 0 : i32
    return %c0_i32, %c0_i32_0 : i32, i32
  }
  func.func @transform_37(%arg0: i32) -> (i32, i32) {
    %c0_i32 = arith.constant 0 : i32
    %c0_i32_0 = arith.constant 0 : i32
    %c0_i32_1 = arith.constant 0 : i32
    return %c0_i32, %c0_i32_0 : i32, i32
  }
  func.func @transform_38(%arg0: i32) -> (i32, i32) {
    %c0_i32 = arith.constant 0 : i32
    %c0_i32_0 = arith.constant 0 : i32
    %c0_i32_1 = arith.constant 0 : i32
    return %c0_i32, %c0_i32_0 : i32, i32
  }
  func.func @transform_39(%arg0: i32) -> (i32, i32) {
    %c0_i32 = arith.constant 0 : i32
    %c0_i32_0 = arith.constant 0 : i32
    return %arg0, %c0_i32 : i32, i32
  }
}

</mosaic_0001>

<llo_original>
// kernel: actor_forward.1
$region0: #{actor_forward.1}
  #allocation0 [shape = 'u32[]', space=smem, size = 0x4, offset = 0x4, fixed_abs, tag = 'smem constant byte address 0x4 - core index']
  #allocation1 [shape = 'u32[144,128]{1,0:T(1,128)}', space=vmem, size = 0x12000, scoped, tag = 'internal scratch']
  %s0 = inlined_call_operand.smem [shape: u32[40], index: -1, kind: input, shape index: {}]
  %s1 = sld [smem:[%s0]]
  %s2 = scalar_lea.smem %s0, 1
  %s3 = sld [smem:[%s2]]
  %s4 = scalar_lea.smem %s0, 2
  %s5 = sld [smem:[%s4]]
  %s6 = scalar_lea.smem %s0, 3
  %s7 = sld [smem:[%s6]]
  %s8 = scalar_lea.smem %s0, 4
  %s9 = sld [smem:[%s8]]
  %s10 = scalar_lea.smem %s0, 5
  %s11 = sld [smem:[%s10]]
  %s12 = scalar_lea.smem %s0, 6
  %s13 = sld [smem:[%s12]]
  %s14 = scalar_lea.smem %s0, 7
  %s15 = sld [smem:[%s14]]
  %s16 = scalar_lea.smem %s0, 8
  %s17 = sld [smem:[%s16]]
  %s18 = scalar_lea.smem %s0, 9
  %s19 = sld [smem:[%s18]]
  %s20 = scalar_lea.smem %s0, 10
  %s21 = sld [smem:[%s20]]
  %s22 = scalar_lea.smem %s0, 11
  %s23 = sld [smem:[%s22]]
  %s24 = scalar_lea.smem %s0, 12
  %s25 = sld [smem:[%s24]]
  %s26 = scalar_lea.smem %s0, 13
  %s27 = sld [smem:[%s26]]
  %s28 = scalar_lea.smem %s0, 14
  %s29 = sld [smem:[%s28]]
  %s30 = scalar_lea.smem %s0, 15
  %s31 = sld [smem:[%s30]]
  %s32 = scalar_lea.smem %s0, 16
  %s33 = sld [smem:[%s32]]
  %s34 = scalar_lea.smem %s0, 17
  %s35 = sld [smem:[%s34]]
  %s36 = scalar_lea.smem %s0, 18
  %s37 = sld [smem:[%s36]]
  %s38 = scalar_lea.smem %s0, 19
  %s39 = sld [smem:[%s38]]
  %s40 = scalar_lea.smem %s0, 20
  %s41 = sld [smem:[%s40]]
  %s42 = scalar_lea.smem %s0, 21
  %s43 = sld [smem:[%s42]]
  %s44 = scalar_lea.smem %s0, 22
  %s45 = sld [smem:[%s44]]
  %s46 = scalar_lea.smem %s0, 23
  %s47 = sld [smem:[%s46]]
  %s48 = scalar_lea.smem %s0, 24
  %s49 = sld [smem:[%s48]]
  %s50 = scalar_lea.smem %s0, 25
  %s51 = sld [smem:[%s50]]
  %s52 = scalar_lea.smem %s0, 26
  %s53 = sld [smem:[%s52]]
  %s54 = scalar_lea.smem %s0, 27
  %s55 = sld [smem:[%s54]]
  %s56 = scalar_lea.smem %s0, 28
  %s57 = sld [smem:[%s56]]
  %s58 = scalar_lea.smem %s0, 29
  %s59 = sld [smem:[%s58]]
  %s60 = scalar_lea.smem %s0, 30
  %s61 = sld [smem:[%s60]]
  %s62 = scalar_lea.smem %s0, 31
  %s63 = sld [smem:[%s62]]
  %s64 = scalar_lea.smem %s0, 32
  %s65 = sld [smem:[%s64]]
  %s66 = scalar_lea.smem %s0, 33
  %s67 = sld [smem:[%s66]]
  %s68 = scalar_lea.smem %s0, 34
  %s69 = sld [smem:[%s68]]
  %s70 = scalar_lea.smem %s0, 35
  %s71 = sld [smem:[%s70]]
  %s72 = scalar_lea.smem %s0, 36
  %s73 = sld [smem:[%s72]]
  %s74 = scalar_lea.smem %s0, 37
  %s75 = sld [smem:[%s74]]
  %s76 = scalar_lea.smem %s0, 38
  %s77 = sld [smem:[%s76]]
  %s78 = scalar_lea.smem %s0, 39
  %s79 = sld [smem:[%s78]]
  %s80 = sld [smem:[#allocation0]]
  $region189: #{actor_forward.1} parent=0
    _
  %s82 = ssub.s32 1, %s80
  %s83 = scalar_select 0, %s82, %s80
  loop: start=0, step=1, limit=4
  $region2: #{actor_forward.1} parent=0 // loop_pre_header
    _
  $region3: #{actor_forward.1} parent=0 // loop_header
    %s85 = sphi 0, %s89
    %p86 = scmp.ge.s32.totalorder %s85, 4
    %s95 = sphi 0, %s97
    %s98 = sphi 0, %s95
    %s99 = sphi 0, %s98
    %s115 = sphi 0, %s99
    %s121 = sphi 0, %s123
    %s124 = sphi 0, %s121
    %s125 = sphi 0, %s124
    %s141 = sphi 0, %s125
    %s147 = sphi 0, %s149
    %s150 = sphi 0, %s147
    %s151 = sphi 0, %s150
    %s167 = sphi 0, %s151
    %s171 = sphi 0, %s171
    %s173 = sphi 0, %s171
    %s174 = sphi 0, %s173
    %s188 = sphi 0, %s174
    %s192 = sphi 0, %s192
    %s194 = sphi 0, %s192
    %s195 = sphi 0, %s194
    %s209 = sphi 0, %s195
    %s213 = sphi 0, %s213
    %s215 = sphi 0, %s213
    %s216 = sphi 0, %s215
    %s230 = sphi 0, %s216
    %s234 = sphi 0, %s234
    %s236 = sphi 0, %s234
    %s237 = sphi 0, %s236
    %s251 = sphi 0, %s237
    %s255 = sphi 0, %s255
    %s257 = sphi 0, %s255
    %s258 = sphi 0, %s257
    %s272 = sphi 0, %s258
    %s276 = sphi 0, %s276
    %s278 = sphi 0, %s276
    %s279 = sphi 0, %s278
    %s293 = sphi 0, %s279
    %s297 = sphi 0, %s297
    %s299 = sphi 0, %s297
    %s300 = sphi 0, %s299
    %s314 = sphi 0, %s300
    %s318 = sphi 0, %s318
    %s320 = sphi 0, %s318
    %s321 = sphi 0, %s320
    %s335 = sphi 0, %s321
    %s339 = sphi 0, %s339
    %s341 = sphi 0, %s339
    %s342 = sphi 0, %s341
    %s356 = sphi 0, %s342
    %s360 = sphi 0, %s360
    %s362 = sphi 0, %s360
    %s363 = sphi 0, %s362
    %s377 = sphi 0, %s363
    %s381 = sphi 0, %s381
    %s383 = sphi 0, %s381
    %s384 = sphi 0, %s383
    %s398 = sphi 0, %s384
    %s402 = sphi 0, %s402
    %s404 = sphi 0, %s402
    %s405 = sphi 0, %s404
    %s419 = sphi 0, %s405
    %s423 = sphi 0, %s423
    %s425 = sphi 0, %s423
    %s426 = sphi 0, %s425
    %s440 = sphi 0, %s426
    %s444 = sphi 0, %s444
    %s446 = sphi 0, %s444
    %s447 = sphi 0, %s446
    %s461 = sphi 0, %s447
    %s465 = sphi 0, %s465
    %s467 = sphi 0, %s465
    %s468 = sphi 0, %s467
    %s482 = sphi 0, %s468
    %s486 = sphi 0, %s486
    %s488 = sphi 0, %s486
    %s489 = sphi 0, %s488
    %s503 = sphi 0, %s489
    %s507 = sphi 0, %s507
    %s509 = sphi 0, %s507
    %s510 = sphi 0, %s509
    %s524 = sphi 0, %s510
    %s528 = sphi 0, %s528
    %s530 = sphi 0, %s528
    %s531 = sphi 0, %s530
    %s545 = sphi 0, %s531
    %s549 = sphi 0, %s549
    %s551 = sphi 0, %s549
    %s552 = sphi 0, %s551
    %s566 = sphi 0, %s552
    %s570 = sphi 0, %s570
    %s572 = sphi 0, %s570
    %s573 = sphi 0, %s572
    %s587 = sphi 0, %s573
    %s591 = sphi 0, %s591
    %s593 = sphi 0, %s591
    %s594 = sphi 0, %s593
    %s608 = sphi 0, %s594
    %s612 = sphi 0, %s612
    %s614 = sphi 0, %s612
    %s615 = sphi 0, %s614
    %s629 = sphi 0, %s615
    %s633 = sphi 0, %s633
    %s635 = sphi 0, %s633
    %s636 = sphi 0, %s635
    %s650 = sphi 0, %s636
    %s654 = sphi 0, %s654
    %s656 = sphi 0, %s654
    %s657 = sphi 0, %s656
    %s671 = sphi 0, %s657
    %s675 = sphi 0, %s675
    %s677 = sphi 0, %s675
    %s678 = sphi 0, %s677
    %s692 = sphi 0, %s678
    %s696 = sphi 0, %s696
    %s698 = sphi 0, %s696
    %s699 = sphi 0, %s698
    %s713 = sphi 0, %s699
    %s717 = sphi 0, %s717
    %s719 = sphi 0, %s717
    %s720 = sphi 0, %s719
    %s734 = sphi 0, %s720
    %s738 = sphi 0, %s738
    %s740 = sphi 0, %s738
    %s741 = sphi 0, %s740
    %s755 = sphi 0, %s741
    %s759 = sphi 0, %s759
    %s761 = sphi 0, %s759
    %s762 = sphi 0, %s761
    %s776 = sphi 0, %s762
    %s780 = sphi 0, %s780
    %s782 = sphi 0, %s780
    %s783 = sphi 0, %s782
    %s797 = sphi 0, %s783
    %s801 = sphi 0, %s801
    %s803 = sphi 0, %s801
    %s804 = sphi 0, %s803
    %s818 = sphi 0, %s804
    %s822 = sphi 0, %s822
    %s824 = sphi 0, %s822
    %s825 = sphi 0, %s824
    %s839 = sphi 0, %s825
    %s843 = sphi 0, %s843
    %s845 = sphi 0, %s843
    %s846 = sphi 0, %s845
    %s860 = sphi 0, %s846
    %s864 = sphi 0, %s864
    %s866 = sphi 0, %s864
    %s867 = sphi 0, %s866
    %s881 = sphi 0, %s867
    %s885 = sphi 0, %s885
    %s887 = sphi 0, %s885
    %s888 = sphi 0, %s887
    %s902 = sphi 0, %s888
    %s906 = sphi 0, %s906
    %s908 = sphi 0, %s906
    %s909 = sphi 0, %s908
    %s923 = sphi 0, %s909
    %s929 = sphi 0, %s931
    %s932 = sphi 0, %s929
    %s933 = sphi 0, %s932
    %s949 = sphi 0, %s933
  $region4: #{actor_forward.1} parent=0 // loop_header_branch
    %88 = sbr.rel (%p86) target = $region8
  $region5: #{actor_forward.1} parent=0 // loop_body
    %s90 = ssub.s32 %s85, 1
    %s91 = ssub.s32 %s85, 2
    %s92 = sadd.s32 %s85, 1
    %s93 = ssub.s32 %s85, %s92
    %p94 = scmp.eq.s32.totalorder %s93, 0
    %s96 = sadd.s32 %s95, 1
    %s97 = scalar_select %p94, %s95, %s96
    %p100 = pneg %p94
    %p101 = scmp.eq.s32.totalorder %s85, 1
    %p102 = por %p100, %p101
    %p103 = scmp.ne.s32.totalorder %s95, %s98
    %p104 = scmp.eq.s32.totalorder %s85, 0
    %p105 = por %p103, %p104
    %p106 = scmp.ne.s32.totalorder %s95, %s98
    %p107 = scmp.eq.s32.totalorder %s90, 1
    %p108 = por %p106, %p107
    %p109 = scmp.ne.s32.totalorder %s98, %s99
    %p110 = scmp.eq.s32.totalorder %s90, 0
    %p111 = por %p109, %p110
    %p112 = scmp.ne.s32.totalorder %s98, %s99
    %p113 = scmp.eq.s32.totalorder %s91, 1
    %p114 = por %p112, %p113
    %p116 = scmp.ne.s32.totalorder %s99, %s115
    %p117 = scmp.eq.s32.totalorder %s91, 0
    %p118 = por %p116, %p117
    %s119 = ssub.s32 %s85, %s92
    %p120 = scmp.eq.s32.totalorder %s119, 0
    %s122 = sadd.s32 %s121, 1
    %s123 = scalar_select %p120, %s121, %s122
    %p126 = pneg %p120
    %p127 = scmp.eq.s32.totalorder %s85, 1
    %p128 = por %p126, %p127
    %p129 = scmp.ne.s32.totalorder %s121, %s124
    %p130 = scmp.eq.s32.totalorder %s85, 0
    %p131 = por %p129, %p130
    %p132 = scmp.ne.s32.totalorder %s121, %s124
    %p133 = scmp.eq.s32.totalorder %s90, 1
    %p134 = por %p132, %p133
    %p135 = scmp.ne.s32.totalorder %s124, %s125
    %p136 = scmp.eq.s32.totalorder %s90, 0
    %p137 = por %p135, %p136
    %p138 = scmp.ne.s32.totalorder %s124, %s125
    %p139 = scmp.eq.s32.totalorder %s91, 1
    %p140 = por %p138, %p139
    %p142 = scmp.ne.s32.totalorder %s125, %s141
    %p143 = scmp.eq.s32.totalorder %s91, 0
    %p144 = por %p142, %p143
    %s145 = ssub.s32 %s85, %s92
    %p146 = scmp.eq.s32.totalorder %s145, 0
    %s148 = sadd.s32 %s147, 1
    %s149 = scalar_select %p146, %s147, %s148
    %p152 = pneg %p146
    %p153 = scmp.eq.s32.totalorder %s85, 1
    %p154 = por %p152, %p153
    %p155 = scmp.ne.s32.totalorder %s147, %s150
    %p156 = scmp.eq.s32.totalorder %s85, 0
    %p157 = por %p155, %p156
    %p158 = scmp.ne.s32.totalorder %s147, %s150
    %p159 = scmp.eq.s32.totalorder %s90, 1
    %p160 = por %p158, %p159
    %p161 = scmp.ne.s32.totalorder %s150, %s151
    %p162 = scmp.eq.s32.totalorder %s90, 0
    %p163 = por %p161, %p162
    %p164 = scmp.ne.s32.totalorder %s150, %s151
    %p165 = scmp.eq.s32.totalorder %s91, 1
    %p166 = por %p164, %p165
    %p168 = scmp.ne.s32.totalorder %s151, %s167
    %p169 = scmp.eq.s32.totalorder %s91, 0
    %p170 = por %p168, %p169
    %s172 = sadd.s32 %s171, 1
    %p175 = scmp.eq.s32.totalorder %s85, 1
    %p176 = scmp.ne.s32.totalorder %s171, %s173
    %p177 = scmp.eq.s32.totalorder %s85, 0
    %p178 = por %p176, %p177
    %p179 = scmp.ne.s32.totalorder %s171, %s173
    %p180 = scmp.eq.s32.totalorder %s90, 1
    %p181 = por %p179, %p180
    %p182 = scmp.ne.s32.totalorder %s173, %s174
    %p183 = scmp.eq.s32.totalorder %s90, 0
    %p184 = por %p182, %p183
    %p185 = scmp.ne.s32.totalorder %s173, %s174
    %p186 = scmp.eq.s32.totalorder %s91, 1
    %p187 = por %p185, %p186
    %p189 = scmp.ne.s32.totalorder %s174, %s188
    %p190 = scmp.eq.s32.totalorder %s91, 0
    %p191 = por %p189, %p190
    %s193 = sadd.s32 %s192, 1
    %p196 = scmp.eq.s32.totalorder %s85, 1
    %p197 = scmp.ne.s32.totalorder %s192, %s194
    %p198 = scmp.eq.s32.totalorder %s85, 0
    %p199 = por %p197, %p198
    %p200 = scmp.ne.s32.totalorder %s192, %s194
    %p201 = scmp.eq.s32.totalorder %s90, 1
    %p202 = por %p200, %p201
    %p203 = scmp.ne.s32.totalorder %s194, %s195
    %p204 = scmp.eq.s32.totalorder %s90, 0
    %p205 = por %p203, %p204
    %p206 = scmp.ne.s32.totalorder %s194, %s195
    %p207 = scmp.eq.s32.totalorder %s91, 1
    %p208 = por %p206, %p207
    %p210 = scmp.ne.s32.totalorder %s195, %s209
    %p211 = scmp.eq.s32.totalorder %s91, 0
    %p212 = por %p210, %p211
    %s214 = sadd.s32 %s213, 1
    %p217 = scmp.eq.s32.totalorder %s85, 1
    %p218 = scmp.ne.s32.totalorder %s213, %s215
    %p219 = scmp.eq.s32.totalorder %s85, 0
    %p220 = por %p218, %p219
    %p221 = scmp.ne.s32.totalorder %s213, %s215
    %p222 = scmp.eq.s32.totalorder %s90, 1
    %p223 = por %p221, %p222
    %p224 = scmp.ne.s32.totalorder %s215, %s216
    %p225 = scmp.eq.s32.totalorder %s90, 0
    %p226 = por %p224, %p225
    %p227 = scmp.ne.s32.totalorder %s215, %s216
    %p228 = scmp.eq.s32.totalorder %s91, 1
    %p229 = por %p227, %p228
    %p231 = scmp.ne.s32.totalorder %s216, %s230
    %p232 = scmp.eq.s32.totalorder %s91, 0
    %p233 = por %p231, %p232
    %s235 = sadd.s32 %s234, 1
    %p238 = scmp.eq.s32.totalorder %s85, 1
    %p239 = scmp.ne.s32.totalorder %s234, %s236
    %p240 = scmp.eq.s32.totalorder %s85, 0
    %p241 = por %p239, %p240
    %p242 = scmp.ne.s32.totalorder %s234, %s236
    %p243 = scmp.eq.s32.totalorder %s90, 1
    %p244 = por %p242, %p243
    %p245 = scmp.ne.s32.totalorder %s236, %s237
    %p246 = scmp.eq.s32.totalorder %s90, 0
    %p247 = por %p245, %p246
    %p248 = scmp.ne.s32.totalorder %s236, %s237
    %p249 = scmp.eq.s32.totalorder %s91, 1
    %p250 = por %p248, %p249
    %p252 = scmp.ne.s32.totalorder %s237, %s251
    %p253 = scmp.eq.s32.totalorder %s91, 0
    %p254 = por %p252, %p253
    %s256 = sadd.s32 %s255, 1
    %p259 = scmp.eq.s32.totalorder %s85, 1
    %p260 = scmp.ne.s32.totalorder %s255, %s257
    %p261 = scmp.eq.s32.totalorder %s85, 0
    %p262 = por %p260, %p261
    %p263 = scmp.ne.s32.totalorder %s255, %s257
    %p264 = scmp.eq.s32.totalorder %s90, 1
    %p265 = por %p263, %p264
    %p266 = scmp.ne.s32.totalorder %s257, %s258
    %p267 = scmp.eq.s32.totalorder %s90, 0
    %p268 = por %p266, %p267
    %p269 = scmp.ne.s32.totalorder %s257, %s258
    %p270 = scmp.eq.s32.totalorder %s91, 1
    %p271 = por %p269, %p270
    %p273 = scmp.ne.s32.totalorder %s258, %s272
    %p274 = scmp.eq.s32.totalorder %s91, 0
    %p275 = por %p273, %p274
    %s277 = sadd.s32 %s276, 1
    %p280 = scmp.eq.s32.totalorder %s85, 1
    %p281 = scmp.ne.s32.totalorder %s276, %s278
    %p282 = scmp.eq.s32.totalorder %s85, 0
    %p283 = por %p281, %p282
    %p284 = scmp.ne.s32.totalorder %s276, %s278
    %p285 = scmp.eq.s32.totalorder %s90, 1
    %p286 = por %p284, %p285
    %p287 = scmp.ne.s32.totalorder %s278, %s279
    %p288 = scmp.eq.s32.totalorder %s90, 0
    %p289 = por %p287, %p288
    %p290 = scmp.ne.s32.totalorder %s278, %s279
    %p291 = scmp.eq.s32.totalorder %s91, 1
    %p292 = por %p290, %p291
    %p294 = scmp.ne.s32.totalorder %s279, %s293
    %p295 = scmp.eq.s32.totalorder %s91, 0
    %p296 = por %p294, %p295
    %s298 = sadd.s32 %s297, 1
    %p301 = scmp.eq.s32.totalorder %s85, 1
    %p302 = scmp.ne.s32.totalorder %s297, %s299
    %p303 = scmp.eq.s32.totalorder %s85, 0
    %p304 = por %p302, %p303
    %p305 = scmp.ne.s32.totalorder %s297, %s299
    %p306 = scmp.eq.s32.totalorder %s90, 1
    %p307 = por %p305, %p306
    %p308 = scmp.ne.s32.totalorder %s299, %s300
    %p309 = scmp.eq.s32.totalorder %s90, 0
    %p310 = por %p308, %p309
    %p311 = scmp.ne.s32.totalorder %s299, %s300
    %p312 = scmp.eq.s32.totalorder %s91, 1
    %p313 = por %p311, %p312
    %p315 = scmp.ne.s32.totalorder %s300, %s314
    %p316 = scmp.eq.s32.totalorder %s91, 0
    %p317 = por %p315, %p316
    %s319 = sadd.s32 %s318, 1
    %p322 = scmp.eq.s32.totalorder %s85, 1
    %p323 = scmp.ne.s32.totalorder %s318, %s320
    %p324 = scmp.eq.s32.totalorder %s85, 0
    %p325 = por %p323, %p324
    %p326 = scmp.ne.s32.totalorder %s318, %s320
    %p327 = scmp.eq.s32.totalorder %s90, 1
    %p328 = por %p326, %p327
    %p329 = scmp.ne.s32.totalorder %s320, %s321
    %p330 = scmp.eq.s32.totalorder %s90, 0
    %p331 = por %p329, %p330
    %p332 = scmp.ne.s32.totalorder %s320, %s321
    %p333 = scmp.eq.s32.totalorder %s91, 1
    %p334 = por %p332, %p333
    %p336 = scmp.ne.s32.totalorder %s321, %s335
    %p337 = scmp.eq.s32.totalorder %s91, 0
    %p338 = por %p336, %p337
    %s340 = sadd.s32 %s339, 1
    %p343 = scmp.eq.s32.totalorder %s85, 1
    %p344 = scmp.ne.s32.totalorder %s339, %s341
    %p345 = scmp.eq.s32.totalorder %s85, 0
    %p346 = por %p344, %p345
    %p347 = scmp.ne.s32.totalorder %s339, %s341
    %p348 = scmp.eq.s32.totalorder %s90, 1
    %p349 = por %p347, %p348
    %p350 = scmp.ne.s32.totalorder %s341, %s342
    %p351 = scmp.eq.s32.totalorder %s90, 0
    %p352 = por %p350, %p351
    %p353 = scmp.ne.s32.totalorder %s341, %s342
    %p354 = scmp.eq.s32.totalorder %s91, 1
    %p355 = por %p353, %p354
    %p357 = scmp.ne.s32.totalorder %s342, %s356
    %p358 = scmp.eq.s32.totalorder %s91, 0
    %p359 = por %p357, %p358
    %s361 = sadd.s32 %s360, 1
    %p364 = scmp.eq.s32.totalorder %s85, 1
    %p365 = scmp.ne.s32.totalorder %s360, %s362
    %p366 = scmp.eq.s32.totalorder %s85, 0
    %p367 = por %p365, %p366
    %p368 = scmp.ne.s32.totalorder %s360, %s362
    %p369 = scmp.eq.s32.totalorder %s90, 1
    %p370 = por %p368, %p369
    %p371 = scmp.ne.s32.totalorder %s362, %s363
    %p372 = scmp.eq.s32.totalorder %s90, 0
    %p373 = por %p371, %p372
    %p374 = scmp.ne.s32.totalorder %s362, %s363
    %p375 = scmp.eq.s32.totalorder %s91, 1
    %p376 = por %p374, %p375
    %p378 = scmp.ne.s32.totalorder %s363, %s377
    %p379 = scmp.eq.s32.totalorder %s91, 0
    %p380 = por %p378, %p379
    %s382 = sadd.s32 %s381, 1
    %p385 = scmp.eq.s32.totalorder %s85, 1
    %p386 = scmp.ne.s32.totalorder %s381, %s383
    %p387 = scmp.eq.s32.totalorder %s85, 0
    %p388 = por %p386, %p387
    %p389 = scmp.ne.s32.totalorder %s381, %s383
    %p390 = scmp.eq.s32.totalorder %s90, 1
    %p391 = por %p389, %p390
    %p392 = scmp.ne.s32.totalorder %s383, %s384
    %p393 = scmp.eq.s32.totalorder %s90, 0
    %p394 = por %p392, %p393
    %p395 = scmp.ne.s32.totalorder %s383, %s384
    %p396 = scmp.eq.s32.totalorder %s91, 1
    %p397 = por %p395, %p396
    %p399 = scmp.ne.s32.totalorder %s384, %s398
    %p400 = scmp.eq.s32.totalorder %s91, 0
    %p401 = por %p399, %p400
    %s403 = sadd.s32 %s402, 1
    %p406 = scmp.eq.s32.totalorder %s85, 1
    %p407 = scmp.ne.s32.totalorder %s402, %s404
    %p408 = scmp.eq.s32.totalorder %s85, 0
    %p409 = por %p407, %p408
    %p410 = scmp.ne.s32.totalorder %s402, %s404
    %p411 = scmp.eq.s32.totalorder %s90, 1
    %p412 = por %p410, %p411
    %p413 = scmp.ne.s32.totalorder %s404, %s405
    %p414 = scmp.eq.s32.totalorder %s90, 0
    %p415 = por %p413, %p414
    %p416 = scmp.ne.s32.totalorder %s404, %s405
    %p417 = scmp.eq.s32.totalorder %s91, 1
    %p418 = por %p416, %p417
    %p420 = scmp.ne.s32.totalorder %s405, %s419
    %p421 = scmp.eq.s32.totalorder %s91, 0
    %p422 = por %p420, %p421
    %s424 = sadd.s32 %s423, 1
    %p427 = scmp.eq.s32.totalorder %s85, 1
    %p428 = scmp.ne.s32.totalorder %s423, %s425
    %p429 = scmp.eq.s32.totalorder %s85, 0
    %p430 = por %p428, %p429
    %p431 = scmp.ne.s32.totalorder %s423, %s425
    %p432 = scmp.eq.s32.totalorder %s90, 1
    %p433 = por %p431, %p432
    %p434 = scmp.ne.s32.totalorder %s425, %s426
    %p435 = scmp.eq.s32.totalorder %s90, 0
    %p436 = por %p434, %p435
    %p437 = scmp.ne.s32.totalorder %s425, %s426
    %p438 = scmp.eq.s32.totalorder %s91, 1
    %p439 = por %p437, %p438
    %p441 = scmp.ne.s32.totalorder %s426, %s440
    %p442 = scmp.eq.s32.totalorder %s91, 0
    %p443 = por %p441, %p442
    %s445 = sadd.s32 %s444, 1
    %p448 = scmp.eq.s32.totalorder %s85, 1
    %p449 = scmp.ne.s32.totalorder %s444, %s446
    %p450 = scmp.eq.s32.totalorder %s85, 0
    %p451 = por %p449, %p450
    %p452 = scmp.ne.s32.totalorder %s444, %s446
    %p453 = scmp.eq.s32.totalorder %s90, 1
    %p454 = por %p452, %p453
    %p455 = scmp.ne.s32.totalorder %s446, %s447
    %p456 = scmp.eq.s32.totalorder %s90, 0
    %p457 = por %p455, %p456
    %p458 = scmp.ne.s32.totalorder %s446, %s447
    %p459 = scmp.eq.s32.totalorder %s91, 1
    %p460 = por %p458, %p459
    %p462 = scmp.ne.s32.totalorder %s447, %s461
    %p463 = scmp.eq.s32.totalorder %s91, 0
    %p464 = por %p462, %p463
    %s466 = sadd.s32 %s465, 1
    %p469 = scmp.eq.s32.totalorder %s85, 1
    %p470 = scmp.ne.s32.totalorder %s465, %s467
    %p471 = scmp.eq.s32.totalorder %s85, 0
    %p472 = por %p470, %p471
    %p473 = scmp.ne.s32.totalorder %s465, %s467
    %p474 = scmp.eq.s32.totalorder %s90, 1
    %p475 = por %p473, %p474
    %p476 = scmp.ne.s32.totalorder %s467, %s468
    %p477 = scmp.eq.s32.totalorder %s90, 0
    %p478 = por %p476, %p477
    %p479 = scmp.ne.s32.totalorder %s467, %s468
    %p480 = scmp.eq.s32.totalorder %s91, 1
    %p481 = por %p479, %p480
    %p483 = scmp.ne.s32.totalorder %s468, %s482
    %p484 = scmp.eq.s32.totalorder %s91, 0
    %p485 = por %p483, %p484
    %s487 = sadd.s32 %s486, 1
    %p490 = scmp.eq.s32.totalorder %s85, 1
    %p491 = scmp.ne.s32.totalorder %s486, %s488
    %p492 = scmp.eq.s32.totalorder %s85, 0
    %p493 = por %p491, %p492
    %p494 = scmp.ne.s32.totalorder %s486, %s488
    %p495 = scmp.eq.s32.totalorder %s90, 1
    %p496 = por %p494, %p495
    %p497 = scmp.ne.s32.totalorder %s488, %s489
    %p498 = scmp.eq.s32.totalorder %s90, 0
    %p499 = por %p497, %p498
    %p500 = scmp.ne.s32.totalorder %s488, %s489
    %p501 = scmp.eq.s32.totalorder %s91, 1
    %p502 = por %p500, %p501
    %p504 = scmp.ne.s32.totalorder %s489, %s503
    %p505 = scmp.eq.s32.totalorder %s91, 0
    %p506 = por %p504, %p505
    %s508 = sadd.s32 %s507, 1
    %p511 = scmp.eq.s32.totalorder %s85, 1
    %p512 = scmp.ne.s32.totalorder %s507, %s509
    %p513 = scmp.eq.s32.totalorder %s85, 0
    %p514 = por %p512, %p513
    %p515 = scmp.ne.s32.totalorder %s507, %s509
    %p516 = scmp.eq.s32.totalorder %s90, 1
    %p517 = por %p515, %p516
    %p518 = scmp.ne.s32.totalorder %s509, %s510
    %p519 = scmp.eq.s32.totalorder %s90, 0
    %p520 = por %p518, %p519
    %p521 = scmp.ne.s32.totalorder %s509, %s510
    %p522 = scmp.eq.s32.totalorder %s91, 1
    %p523 = por %p521, %p522
    %p525 = scmp.ne.s32.totalorder %s510, %s524
    %p526 = scmp.eq.s32.totalorder %s91, 0
    %p527 = por %p525, %p526
    %s529 = sadd.s32 %s528, 1
    %p532 = scmp.eq.s32.totalorder %s85, 1
    %p533 = scmp.ne.s32.totalorder %s528, %s530
    %p534 = scmp.eq.s32.totalorder %s85, 0
    %p535 = por %p533, %p534
    %p536 = scmp.ne.s32.totalorder %s528, %s530
    %p537 = scmp.eq.s32.totalorder %s90, 1
    %p538 = por %p536, %p537
    %p539 = scmp.ne.s32.totalorder %s530, %s531
    %p540 = scmp.eq.s32.totalorder %s90, 0
    %p541 = por %p539, %p540
    %p542 = scmp.ne.s32.totalorder %s530, %s531
    %p543 = scmp.eq.s32.totalorder %s91, 1
    %p544 = por %p542, %p543
    %p546 = scmp.ne.s32.totalorder %s531, %s545
    %p547 = scmp.eq.s32.totalorder %s91, 0
    %p548 = por %p546, %p547
    %s550 = sadd.s32 %s549, 1
    %p553 = scmp.eq.s32.totalorder %s85, 1
    %p554 = scmp.ne.s32.totalorder %s549, %s551
    %p555 = scmp.eq.s32.totalorder %s85, 0
    %p556 = por %p554, %p555
    %p557 = scmp.ne.s32.totalorder %s549, %s551
    %p558 = scmp.eq.s32.totalorder %s90, 1
    %p559 = por %p557, %p558
    %p560 = scmp.ne.s32.totalorder %s551, %s552
    %p561 = scmp.eq.s32.totalorder %s90, 0
    %p562 = por %p560, %p561
    %p563 = scmp.ne.s32.totalorder %s551, %s552
    %p564 = scmp.eq.s32.totalorder %s91, 1
    %p565 = por %p563, %p564
    %p567 = scmp.ne.s32.totalorder %s552, %s566
    %p568 = scmp.eq.s32.totalorder %s91, 0
    %p569 = por %p567, %p568
    %s571 = sadd.s32 %s570, 1
    %p574 = scmp.eq.s32.totalorder %s85, 1
    %p575 = scmp.ne.s32.totalorder %s570, %s572
    %p576 = scmp.eq.s32.totalorder %s85, 0
    %p577 = por %p575, %p576
    %p578 = scmp.ne.s32.totalorder %s570, %s572
    %p579 = scmp.eq.s32.totalorder %s90, 1
    %p580 = por %p578, %p579
    %p581 = scmp.ne.s32.totalorder %s572, %s573
    %p582 = scmp.eq.s32.totalorder %s90, 0
    %p583 = por %p581, %p582
    %p584 = scmp.ne.s32.totalorder %s572, %s573
    %p585 = scmp.eq.s32.totalorder %s91, 1
    %p586 = por %p584, %p585
    %p588 = scmp.ne.s32.totalorder %s573, %s587
    %p589 = scmp.eq.s32.totalorder %s91, 0
    %p590 = por %p588, %p589
    %s592 = sadd.s32 %s591, 1
    %p595 = scmp.eq.s32.totalorder %s85, 1
    %p596 = scmp.ne.s32.totalorder %s591, %s593
    %p597 = scmp.eq.s32.totalorder %s85, 0
    %p598 = por %p596, %p597
    %p599 = scmp.ne.s32.totalorder %s591, %s593
    %p600 = scmp.eq.s32.totalorder %s90, 1
    %p601 = por %p599, %p600
    %p602 = scmp.ne.s32.totalorder %s593, %s594
    %p603 = scmp.eq.s32.totalorder %s90, 0
    %p604 = por %p602, %p603
    %p605 = scmp.ne.s32.totalorder %s593, %s594
    %p606 = scmp.eq.s32.totalorder %s91, 1
    %p607 = por %p605, %p606
    %p609 = scmp.ne.s32.totalorder %s594, %s608
    %p610 = scmp.eq.s32.totalorder %s91, 0
    %p611 = por %p609, %p610
    %s613 = sadd.s32 %s612, 1
    %p616 = scmp.eq.s32.totalorder %s85, 1
    %p617 = scmp.ne.s32.totalorder %s612, %s614
    %p618 = scmp.eq.s32.totalorder %s85, 0
    %p619 = por %p617, %p618
    %p620 = scmp.ne.s32.totalorder %s612, %s614
    %p621 = scmp.eq.s32.totalorder %s90, 1
    %p622 = por %p620, %p621
    %p623 = scmp.ne.s32.totalorder %s614, %s615
    %p624 = scmp.eq.s32.totalorder %s90, 0
    %p625 = por %p623, %p624
    %p626 = scmp.ne.s32.totalorder %s614, %s615
    %p627 = scmp.eq.s32.totalorder %s91, 1
    %p628 = por %p626, %p627
    %p630 = scmp.ne.s32.totalorder %s615, %s629
    %p631 = scmp.eq.s32.totalorder %s91, 0
    %p632 = por %p630, %p631
    %s634 = sadd.s32 %s633, 1
    %p637 = scmp.eq.s32.totalorder %s85, 1
    %p638 = scmp.ne.s32.totalorder %s633, %s635
    %p639 = scmp.eq.s32.totalorder %s85, 0
    %p640 = por %p638, %p639
    %p641 = scmp.ne.s32.totalorder %s633, %s635
    %p642 = scmp.eq.s32.totalorder %s90, 1
    %p643 = por %p641, %p642
    %p644 = scmp.ne.s32.totalorder %s635, %s636
    %p645 = scmp.eq.s32.totalorder %s90, 0
    %p646 = por %p644, %p645
    %p647 = scmp.ne.s32.totalorder %s635, %s636
    %p648 = scmp.eq.s32.totalorder %s91, 1
    %p649 = por %p647, %p648
    %p651 = scmp.ne.s32.totalorder %s636, %s650
    %p652 = scmp.eq.s32.totalorder %s91, 0
    %p653 = por %p651, %p652
    %s655 = sadd.s32 %s654, 1
    %p658 = scmp.eq.s32.totalorder %s85, 1
    %p659 = scmp.ne.s32.totalorder %s654, %s656
    %p660 = scmp.eq.s32.totalorder %s85, 0
    %p661 = por %p659, %p660
    %p662 = scmp.ne.s32.totalorder %s654, %s656
    %p663 = scmp.eq.s32.totalorder %s90, 1
    %p664 = por %p662, %p663
    %p665 = scmp.ne.s32.totalorder %s656, %s657
    %p666 = scmp.eq.s32.totalorder %s90, 0
    %p667 = por %p665, %p666
    %p668 = scmp.ne.s32.totalorder %s656, %s657
    %p669 = scmp.eq.s32.totalorder %s91, 1
    %p670 = por %p668, %p669
    %p672 = scmp.ne.s32.totalorder %s657, %s671
    %p673 = scmp.eq.s32.totalorder %s91, 0
    %p674 = por %p672, %p673
    %s676 = sadd.s32 %s675, 1
    %p679 = scmp.eq.s32.totalorder %s85, 1
    %p680 = scmp.ne.s32.totalorder %s675, %s677
    %p681 = scmp.eq.s32.totalorder %s85, 0
    %p682 = por %p680, %p681
    %p683 = scmp.ne.s32.totalorder %s675, %s677
    %p684 = scmp.eq.s32.totalorder %s90, 1
    %p685 = por %p683, %p684
    %p686 = scmp.ne.s32.totalorder %s677, %s678
    %p687 = scmp.eq.s32.totalorder %s90, 0
    %p688 = por %p686, %p687
    %p689 = scmp.ne.s32.totalorder %s677, %s678
    %p690 = scmp.eq.s32.totalorder %s91, 1
    %p691 = por %p689, %p690
    %p693 = scmp.ne.s32.totalorder %s678, %s692
    %p694 = scmp.eq.s32.totalorder %s91, 0
    %p695 = por %p693, %p694
    %s697 = sadd.s32 %s696, 1
    %p700 = scmp.eq.s32.totalorder %s85, 1
    %p701 = scmp.ne.s32.totalorder %s696, %s698
    %p702 = scmp.eq.s32.totalorder %s85, 0
    %p703 = por %p701, %p702
    %p704 = scmp.ne.s32.totalorder %s696, %s698
    %p705 = scmp.eq.s32.totalorder %s90, 1
    %p706 = por %p704, %p705
    %p707 = scmp.ne.s32.totalorder %s698, %s699
    %p708 = scmp.eq.s32.totalorder %s90, 0
    %p709 = por %p707, %p708
    %p710 = scmp.ne.s32.totalorder %s698, %s699
    %p711 = scmp.eq.s32.totalorder %s91, 1
    %p712 = por %p710, %p711
    %p714 = scmp.ne.s32.totalorder %s699, %s713
    %p715 = scmp.eq.s32.totalorder %s91, 0
    %p716 = por %p714, %p715
    %s718 = sadd.s32 %s717, 1
    %p721 = scmp.eq.s32.totalorder %s85, 1
    %p722 = scmp.ne.s32.totalorder %s717, %s719
    %p723 = scmp.eq.s32.totalorder %s85, 0
    %p724 = por %p722, %p723
    %p725 = scmp.ne.s32.totalorder %s717, %s719
    %p726 = scmp.eq.s32.totalorder %s90, 1
    %p727 = por %p725, %p726
    %p728 = scmp.ne.s32.totalorder %s719, %s720
    %p729 = scmp.eq.s32.totalorder %s90, 0
    %p730 = por %p728, %p729
    %p731 = scmp.ne.s32.totalorder %s719, %s720
    %p732 = scmp.eq.s32.totalorder %s91, 1
    %p733 = por %p731, %p732
    %p735 = scmp.ne.s32.totalorder %s720, %s734
    %p736 = scmp.eq.s32.totalorder %s91, 0
    %p737 = por %p735, %p736
    %s739 = sadd.s32 %s738, 1
    %p742 = scmp.eq.s32.totalorder %s85, 1
    %p743 = scmp.ne.s32.totalorder %s738, %s740
    %p744 = scmp.eq.s32.totalorder %s85, 0
    %p745 = por %p743, %p744
    %p746 = scmp.ne.s32.totalorder %s738, %s740
    %p747 = scmp.eq.s32.totalorder %s90, 1
    %p748 = por %p746, %p747
    %p749 = scmp.ne.s32.totalorder %s740, %s741
    %p750 = scmp.eq.s32.totalorder %s90, 0
    %p751 = por %p749, %p750
    %p752 = scmp.ne.s32.totalorder %s740, %s741
    %p753 = scmp.eq.s32.totalorder %s91, 1
    %p754 = por %p752, %p753
    %p756 = scmp.ne.s32.totalorder %s741, %s755
    %p757 = scmp.eq.s32.totalorder %s91, 0
    %p758 = por %p756, %p757
    %s760 = sadd.s32 %s759, 1
    %p763 = scmp.eq.s32.totalorder %s85, 1
    %p764 = scmp.ne.s32.totalorder %s759, %s761
    %p765 = scmp.eq.s32.totalorder %s85, 0
    %p766 = por %p764, %p765
    %p767 = scmp.ne.s32.totalorder %s759, %s761
    %p768 = scmp.eq.s32.totalorder %s90, 1
    %p769 = por %p767, %p768
    %p770 = scmp.ne.s32.totalorder %s761, %s762
    %p771 = scmp.eq.s32.totalorder %s90, 0
    %p772 = por %p770, %p771
    %p773 = scmp.ne.s32.totalorder %s761, %s762
    %p774 = scmp.eq.s32.totalorder %s91, 1
    %p775 = por %p773, %p774
    %p777 = scmp.ne.s32.totalorder %s762, %s776
    %p778 = scmp.eq.s32.totalorder %s91, 0
    %p779 = por %p777, %p778
    %s781 = sadd.s32 %s780, 1
    %p784 = scmp.eq.s32.totalorder %s85, 1
    %p785 = scmp.ne.s32.totalorder %s780, %s782
    %p786 = scmp.eq.s32.totalorder %s85, 0
    %p787 = por %p785, %p786
    %p788 = scmp.ne.s32.totalorder %s780, %s782
    %p789 = scmp.eq.s32.totalorder %s90, 1
    %p790 = por %p788, %p789
    %p791 = scmp.ne.s32.totalorder %s782, %s783
    %p792 = scmp.eq.s32.totalorder %s90, 0
    %p793 = por %p791, %p792
    %p794 = scmp.ne.s32.totalorder %s782, %s783
    %p795 = scmp.eq.s32.totalorder %s91, 1
    %p796 = por %p794, %p795
    %p798 = scmp.ne.s32.totalorder %s783, %s797
    %p799 = scmp.eq.s32.totalorder %s91, 0
    %p800 = por %p798, %p799
    %s802 = sadd.s32 %s801, 1
    %p805 = scmp.eq.s32.totalorder %s85, 1
    %p806 = scmp.ne.s32.totalorder %s801, %s803
    %p807 = scmp.eq.s32.totalorder %s85, 0
    %p808 = por %p806, %p807
    %p809 = scmp.ne.s32.totalorder %s801, %s803
    %p810 = scmp.eq.s32.totalorder %s90, 1
    %p811 = por %p809, %p810
    %p812 = scmp.ne.s32.totalorder %s803, %s804
    %p813 = scmp.eq.s32.totalorder %s90, 0
    %p814 = por %p812, %p813
    %p815 = scmp.ne.s32.totalorder %s803, %s804
    %p816 = scmp.eq.s32.totalorder %s91, 1
    %p817 = por %p815, %p816
    %p819 = scmp.ne.s32.totalorder %s804, %s818
    %p820 = scmp.eq.s32.totalorder %s91, 0
    %p821 = por %p819, %p820
    %s823 = sadd.s32 %s822, 1
    %p826 = scmp.eq.s32.totalorder %s85, 1
    %p827 = scmp.ne.s32.totalorder %s822, %s824
    %p828 = scmp.eq.s32.totalorder %s85, 0
    %p829 = por %p827, %p828
    %p830 = scmp.ne.s32.totalorder %s822, %s824
    %p831 = scmp.eq.s32.totalorder %s90, 1
    %p832 = por %p830, %p831
    %p833 = scmp.ne.s32.totalorder %s824, %s825
    %p834 = scmp.eq.s32.totalorder %s90, 0
    %p835 = por %p833, %p834
    %p836 = scmp.ne.s32.totalorder %s824, %s825
    %p837 = scmp.eq.s32.totalorder %s91, 1
    %p838 = por %p836, %p837
    %p840 = scmp.ne.s32.totalorder %s825, %s839
    %p841 = scmp.eq.s32.totalorder %s91, 0
    %p842 = por %p840, %p841
    %s844 = sadd.s32 %s843, 1
    %p847 = scmp.eq.s32.totalorder %s85, 1
    %p848 = scmp.ne.s32.totalorder %s843, %s845
    %p849 = scmp.eq.s32.totalorder %s85, 0
    %p850 = por %p848, %p849
    %p851 = scmp.ne.s32.totalorder %s843, %s845
    %p852 = scmp.eq.s32.totalorder %s90, 1
    %p853 = por %p851, %p852
    %p854 = scmp.ne.s32.totalorder %s845, %s846
    %p855 = scmp.eq.s32.totalorder %s90, 0
    %p856 = por %p854, %p855
    %p857 = scmp.ne.s32.totalorder %s845, %s846
    %p858 = scmp.eq.s32.totalorder %s91, 1
    %p859 = por %p857, %p858
    %p861 = scmp.ne.s32.totalorder %s846, %s860
    %p862 = scmp.eq.s32.totalorder %s91, 0
    %p863 = por %p861, %p862
    %s865 = sadd.s32 %s864, 1
    %p868 = scmp.eq.s32.totalorder %s85, 1
    %p869 = scmp.ne.s32.totalorder %s864, %s866
    %p870 = scmp.eq.s32.totalorder %s85, 0
    %p871 = por %p869, %p870
    %p872 = scmp.ne.s32.totalorder %s864, %s866
    %p873 = scmp.eq.s32.totalorder %s90, 1
    %p874 = por %p872, %p873
    %p875 = scmp.ne.s32.totalorder %s866, %s867
    %p876 = scmp.eq.s32.totalorder %s90, 0
    %p877 = por %p875, %p876
    %p878 = scmp.ne.s32.totalorder %s866, %s867
    %p879 = scmp.eq.s32.totalorder %s91, 1
    %p880 = por %p878, %p879
    %p882 = scmp.ne.s32.totalorder %s867, %s881
    %p883 = scmp.eq.s32.totalorder %s91, 0
    %p884 = por %p882, %p883
    %s886 = sadd.s32 %s885, 1
    %p889 = scmp.eq.s32.totalorder %s85, 1
    %p890 = scmp.ne.s32.totalorder %s885, %s887
    %p891 = scmp.eq.s32.totalorder %s85, 0
    %p892 = por %p890, %p891
    %p893 = scmp.ne.s32.totalorder %s885, %s887
    %p894 = scmp.eq.s32.totalorder %s90, 1
    %p895 = por %p893, %p894
    %p896 = scmp.ne.s32.totalorder %s887, %s888
    %p897 = scmp.eq.s32.totalorder %s90, 0
    %p898 = por %p896, %p897
    %p899 = scmp.ne.s32.totalorder %s887, %s888
    %p900 = scmp.eq.s32.totalorder %s91, 1
    %p901 = por %p899, %p900
    %p903 = scmp.ne.s32.totalorder %s888, %s902
    %p904 = scmp.eq.s32.totalorder %s91, 0
    %p905 = por %p903, %p904
    %s907 = sadd.s32 %s906, 1
    %p910 = scmp.eq.s32.totalorder %s85, 1
    %p911 = scmp.ne.s32.totalorder %s906, %s908
    %p912 = scmp.eq.s32.totalorder %s85, 0
    %p913 = por %p911, %p912
    %p914 = scmp.ne.s32.totalorder %s906, %s908
    %p915 = scmp.eq.s32.totalorder %s90, 1
    %p916 = por %p914, %p915
    %p917 = scmp.ne.s32.totalorder %s908, %s909
    %p918 = scmp.eq.s32.totalorder %s90, 0
    %p919 = por %p917, %p918
    %p920 = scmp.ne.s32.totalorder %s908, %s909
    %p921 = scmp.eq.s32.totalorder %s91, 1
    %p922 = por %p920, %p921
    %p924 = scmp.ne.s32.totalorder %s909, %s923
    %p925 = scmp.eq.s32.totalorder %s91, 0
    %p926 = por %p924, %p925
    %s927 = ssub.s32 %s85, %s92
    %p928 = scmp.eq.s32.totalorder %s927, 0
    %s930 = sadd.s32 %s929, 1
    %s931 = scalar_select %p928, %s929, %s930
    %p934 = pneg %p928
    %p935 = scmp.eq.s32.totalorder %s85, 1
    %p936 = por %p934, %p935
    %p937 = scmp.ne.s32.totalorder %s929, %s932
    %p938 = scmp.eq.s32.totalorder %s85, 0
    %p939 = por %p937, %p938
    %p940 = scmp.ne.s32.totalorder %s929, %s932
    %p941 = scmp.eq.s32.totalorder %s90, 1
    %p942 = por %p940, %p941
    %p943 = scmp.ne.s32.totalorder %s932, %s933
    %p944 = scmp.eq.s32.totalorder %s90, 0
    %p945 = por %p943, %p944
    %p946 = scmp.ne.s32.totalorder %s932, %s933
    %p947 = scmp.eq.s32.totalorder %s91, 1
    %p948 = por %p946, %p947
    %p950 = scmp.ne.s32.totalorder %s933, %s949
    %p951 = scmp.eq.s32.totalorder %s91, 0
    %p952 = por %p950, %p951
    %p953 = scmp.le.s32.totalorder 1, %s85
    %p954 = scmp.lt.s32.totalorder %s85, 3
    %p955 = pnand %p953, %p954
    %p956 = pneg %p955
    // Predicated region
    $region9: #{actor_forward.1} parent=5 // pred_check
      _
    $region10: #{actor_forward.1} parent=5 // pred_check_branch
      %958 = sbr.rel (%p955) target = $region12
    $region11: #{actor_forward.1} parent=5 // pred_region
      %s959 = ssub.s32 %s85, 1
      // Predicated region
      $region13: #{actor_forward.1} parent=11 // pred_check
        %p960 = pneg %p184
      $region14: #{actor_forward.1} parent=11 // pred_check_branch
        %962 = sbr.rel (%p960) target = $region16
      $region15: #{actor_forward.1} parent=11 // pred_region
        _
      $region16: #{actor_forward.1} parent=11 // pred_fallthru
        _
      // Predicated region
      $region17: #{actor_forward.1} parent=11 // pred_check
        %p963 = pneg %p205
      $region18: #{actor_forward.1} parent=11 // pred_check_branch
        %965 = sbr.rel (%p963) target = $region20
      $region19: #{actor_forward.1} parent=11 // pred_region
        _
      $region20: #{actor_forward.1} parent=11 // pred_fallthru
        _
      // Predicated region
      $region21: #{actor_forward.1} parent=11 // pred_check
        %p966 = pneg %p226
      $region22: #{actor_forward.1} parent=11 // pred_check_branch
        %968 = sbr.rel (%p966) target = $region24
      $region23: #{actor_forward.1} parent=11 // pred_region
        _
      $region24: #{actor_forward.1} parent=11 // pred_fallthru
        _
      // Predicated region
      $region25: #{actor_forward.1} parent=11 // pred_check
        %p969 = pneg %p247
      $region26: #{actor_forward.1} parent=11 // pred_check_branch
        %971 = sbr.rel (%p969) target = $region28
      $region27: #{actor_forward.1} parent=11 // pred_region
        _
      $region28: #{actor_forward.1} parent=11 // pred_fallthru
        _
      // Predicated region
      $region29: #{actor_forward.1} parent=11 // pred_check
        %p972 = pneg %p268
      $region30: #{actor_forward.1} parent=11 // pred_check_branch
        %974 = sbr.rel (%p972) target = $region32
      $region31: #{actor_forward.1} parent=11 // pred_region
        _
      $region32: #{actor_forward.1} parent=11 // pred_fallthru
        _
      // Predicated region
      $region33: #{actor_forward.1} parent=11 // pred_check
        %p975 = pneg %p289
      $region34: #{actor_forward.1} parent=11 // pred_check_branch
        %977 = sbr.rel (%p975) target = $region36
      $region35: #{actor_forward.1} parent=11 // pred_region
        _
      $region36: #{actor_forward.1} parent=11 // pred_fallthru
        _
      // Predicated region
      $region37: #{actor_forward.1} parent=11 // pred_check
        %p978 = pneg %p310
      $region38: #{actor_forward.1} parent=11 // pred_check_branch
        %980 = sbr.rel (%p978) target = $region40
      $region39: #{actor_forward.1} parent=11 // pred_region
        _
      $region40: #{actor_forward.1} parent=11 // pred_fallthru
        _
      // Predicated region
      $region41: #{actor_forward.1} parent=11 // pred_check
        %p981 = pneg %p331
      $region42: #{actor_forward.1} parent=11 // pred_check_branch
        %983 = sbr.rel (%p981) target = $region44
      $region43: #{actor_forward.1} parent=11 // pred_region
        _
      $region44: #{actor_forward.1} parent=11 // pred_fallthru
        _
      // Predicated region
      $region45: #{actor_forward.1} parent=11 // pred_check
        %p984 = pneg %p352
      $region46: #{actor_forward.1} parent=11 // pred_check_branch
        %986 = sbr.rel (%p984) target = $region48
      $region47: #{actor_forward.1} parent=11 // pred_region
        _
      $region48: #{actor_forward.1} parent=11 // pred_fallthru
        _
      // Predicated region
      $region49: #{actor_forward.1} parent=11 // pred_check
        %p987 = pneg %p373
      $region50: #{actor_forward.1} parent=11 // pred_check_branch
        %989 = sbr.rel (%p987) target = $region52
      $region51: #{actor_forward.1} parent=11 // pred_region
        _
      $region52: #{actor_forward.1} parent=11 // pred_fallthru
        _
      // Predicated region
      $region53: #{actor_forward.1} parent=11 // pred_check
        %p990 = pneg %p394
      $region54: #{actor_forward.1} parent=11 // pred_check_branch
        %992 = sbr.rel (%p990) target = $region56
      $region55: #{actor_forward.1} parent=11 // pred_region
        _
      $region56: #{actor_forward.1} parent=11 // pred_fallthru
        _
      // Predicated region
      $region57: #{actor_forward.1} parent=11 // pred_check
        %p993 = pneg %p415
      $region58: #{actor_forward.1} parent=11 // pred_check_branch
        %995 = sbr.rel (%p993) target = $region60
      $region59: #{actor_forward.1} parent=11 // pred_region
        _
      $region60: #{actor_forward.1} parent=11 // pred_fallthru
        _
      // Predicated region
      $region61: #{actor_forward.1} parent=11 // pred_check
        %p996 = pneg %p436
      $region62: #{actor_forward.1} parent=11 // pred_check_branch
        %998 = sbr.rel (%p996) target = $region64
      $region63: #{actor_forward.1} parent=11 // pred_region
        _
      $region64: #{actor_forward.1} parent=11 // pred_fallthru
        _
      // Predicated region
      $region65: #{actor_forward.1} parent=11 // pred_check
        %p999 = pneg %p457
      $region66: #{actor_forward.1} parent=11 // pred_check_branch
        %1001 = sbr.rel (%p999) target = $region68
      $region67: #{actor_forward.1} parent=11 // pred_region
        _
      $region68: #{actor_forward.1} parent=11 // pred_fallthru
        _
      // Predicated region
      $region69: #{actor_forward.1} parent=11 // pred_check
        %p1002 = pneg %p478
      $region70: #{actor_forward.1} parent=11 // pred_check_branch
        %1004 = sbr.rel (%p1002) target = $region72
      $region71: #{actor_forward.1} parent=11 // pred_region
        _
      $region72: #{actor_forward.1} parent=11 // pred_fallthru
        _
      // Predicated region
      $region73: #{actor_forward.1} parent=11 // pred_check
        %p1005 = pneg %p499
      $region74: #{actor_forward.1} parent=11 // pred_check_branch
        %1007 = sbr.rel (%p1005) target = $region76
      $region75: #{actor_forward.1} parent=11 // pred_region
        _
      $region76: #{actor_forward.1} parent=11 // pred_fallthru
        _
      // Predicated region
      $region77: #{actor_forward.1} parent=11 // pred_check
        %p1008 = pneg %p520
      $region78: #{actor_forward.1} parent=11 // pred_check_branch
        %1010 = sbr.rel (%p1008) target = $region80
      $region79: #{actor_forward.1} parent=11 // pred_region
        _
      $region80: #{actor_forward.1} parent=11 // pred_fallthru
        _
      // Predicated region
      $region81: #{actor_forward.1} parent=11 // pred_check
        %p1011 = pneg %p541
      $region82: #{actor_forward.1} parent=11 // pred_check_branch
        %1013 = sbr.rel (%p1011) target = $region84
      $region83: #{actor_forward.1} parent=11 // pred_region
        _
      $region84: #{actor_forward.1} parent=11 // pred_fallthru
        _
      // Predicated region
      $region85: #{actor_forward.1} parent=11 // pred_check
        %p1014 = pneg %p562
      $region86: #{actor_forward.1} parent=11 // pred_check_branch
        %1016 = sbr.rel (%p1014) target = $region88
      $region87: #{actor_forward.1} parent=11 // pred_region
        _
      $region88: #{actor_forward.1} parent=11 // pred_fallthru
        _
      // Predicated region
      $region89: #{actor_forward.1} parent=11 // pred_check
        %p1017 = pneg %p583
      $region90: #{actor_forward.1} parent=11 // pred_check_branch
        %1019 = sbr.rel (%p1017) target = $region92
      $region91: #{actor_forward.1} parent=11 // pred_region
        _
      $region92: #{actor_forward.1} parent=11 // pred_fallthru
        _
      // Predicated region
      $region93: #{actor_forward.1} parent=11 // pred_check
        %p1020 = pneg %p604
      $region94: #{actor_forward.1} parent=11 // pred_check_branch
        %1022 = sbr.rel (%p1020) target = $region96
      $region95: #{actor_forward.1} parent=11 // pred_region
        _
      $region96: #{actor_forward.1} parent=11 // pred_fallthru
        _
      // Predicated region
      $region97: #{actor_forward.1} parent=11 // pred_check
        %p1023 = pneg %p625
      $region98: #{actor_forward.1} parent=11 // pred_check_branch
        %1025 = sbr.rel (%p1023) target = $region100
      $region99: #{actor_forward.1} parent=11 // pred_region
        _
      $region100: #{actor_forward.1} parent=11 // pred_fallthru
        _
      // Predicated region
      $region101: #{actor_forward.1} parent=11 // pred_check
        %p1026 = pneg %p646
      $region102: #{actor_forward.1} parent=11 // pred_check_branch
        %1028 = sbr.rel (%p1026) target = $region104
      $region103: #{actor_forward.1} parent=11 // pred_region
        _
      $region104: #{actor_forward.1} parent=11 // pred_fallthru
        _
      // Predicated region
      $region105: #{actor_forward.1} parent=11 // pred_check
        %p1029 = pneg %p667
      $region106: #{actor_forward.1} parent=11 // pred_check_branch
        %1031 = sbr.rel (%p1029) target = $region108
      $region107: #{actor_forward.1} parent=11 // pred_region
        _
      $region108: #{actor_forward.1} parent=11 // pred_fallthru
        _
      // Predicated region
      $region109: #{actor_forward.1} parent=11 // pred_check
        %p1032 = pneg %p688
      $region110: #{actor_forward.1} parent=11 // pred_check_branch
        %1034 = sbr.rel (%p1032) target = $region112
      $region111: #{actor_forward.1} parent=11 // pred_region
        _
      $region112: #{actor_forward.1} parent=11 // pred_fallthru
        _
      // Predicated region
      $region113: #{actor_forward.1} parent=11 // pred_check
        %p1035 = pneg %p709
      $region114: #{actor_forward.1} parent=11 // pred_check_branch
        %1037 = sbr.rel (%p1035) target = $region116
      $region115: #{actor_forward.1} parent=11 // pred_region
        _
      $region116: #{actor_forward.1} parent=11 // pred_fallthru
        _
      // Predicated region
      $region117: #{actor_forward.1} parent=11 // pred_check
        %p1038 = pneg %p730
      $region118: #{actor_forward.1} parent=11 // pred_check_branch
        %1040 = sbr.rel (%p1038) target = $region120
      $region119: #{actor_forward.1} parent=11 // pred_region
        _
      $region120: #{actor_forward.1} parent=11 // pred_fallthru
        _
      // Predicated region
      $region121: #{actor_forward.1} parent=11 // pred_check
        %p1041 = pneg %p751
      $region122: #{actor_forward.1} parent=11 // pred_check_branch
        %1043 = sbr.rel (%p1041) target = $region124
      $region123: #{actor_forward.1} parent=11 // pred_region
        _
      $region124: #{actor_forward.1} parent=11 // pred_fallthru
        _
      // Predicated region
      $region125: #{actor_forward.1} parent=11 // pred_check
        %p1044 = pneg %p772
      $region126: #{actor_forward.1} parent=11 // pred_check_branch
        %1046 = sbr.rel (%p1044) target = $region128
      $region127: #{actor_forward.1} parent=11 // pred_region
        _
      $region128: #{actor_forward.1} parent=11 // pred_fallthru
        _
      // Predicated region
      $region129: #{actor_forward.1} parent=11 // pred_check
        %p1047 = pneg %p793
      $region130: #{actor_forward.1} parent=11 // pred_check_branch
        %1049 = sbr.rel (%p1047) target = $region132
      $region131: #{actor_forward.1} parent=11 // pred_region
        _
      $region132: #{actor_forward.1} parent=11 // pred_fallthru
        _
      // Predicated region
      $region133: #{actor_forward.1} parent=11 // pred_check
        %p1050 = pneg %p814
      $region134: #{actor_forward.1} parent=11 // pred_check_branch
        %1052 = sbr.rel (%p1050) target = $region136
      $region135: #{actor_forward.1} parent=11 // pred_region
        _
      $region136: #{actor_forward.1} parent=11 // pred_fallthru
        _
      // Predicated region
      $region137: #{actor_forward.1} parent=11 // pred_check
        %p1053 = pneg %p835
      $region138: #{actor_forward.1} parent=11 // pred_check_branch
        %1055 = sbr.rel (%p1053) target = $region140
      $region139: #{actor_forward.1} parent=11 // pred_region
        _
      $region140: #{actor_forward.1} parent=11 // pred_fallthru
        _
      // Predicated region
      $region141: #{actor_forward.1} parent=11 // pred_check
        %p1056 = pneg %p856
      $region142: #{actor_forward.1} parent=11 // pred_check_branch
        %1058 = sbr.rel (%p1056) target = $region144
      $region143: #{actor_forward.1} parent=11 // pred_region
        _
      $region144: #{actor_forward.1} parent=11 // pred_fallthru
        _
      // Predicated region
      $region145: #{actor_forward.1} parent=11 // pred_check
        %p1059 = pneg %p877
      $region146: #{actor_forward.1} parent=11 // pred_check_branch
        %1061 = sbr.rel (%p1059) target = $region148
      $region147: #{actor_forward.1} parent=11 // pred_region
        _
      $region148: #{actor_forward.1} parent=11 // pred_fallthru
        _
      // Predicated region
      $region149: #{actor_forward.1} parent=11 // pred_check
        %p1062 = pneg %p898
      $region150: #{actor_forward.1} parent=11 // pred_check_branch
        %1064 = sbr.rel (%p1062) target = $region152
      $region151: #{actor_forward.1} parent=11 // pred_region
        _
      $region152: #{actor_forward.1} parent=11 // pred_fallthru
        _
      // Predicated region
      $region153: #{actor_forward.1} parent=11 // pred_check
        %p1065 = pneg %p919
      $region154: #{actor_forward.1} parent=11 // pred_check_branch
        %1067 = sbr.rel (%p1065) target = $region156
      $region155: #{actor_forward.1} parent=11 // pred_region
        _
      $region156: #{actor_forward.1} parent=11 // pred_fallthru
        _
    $region12: #{actor_forward.1} parent=5 // pred_fallthru
      _
    %p1068 = scmp.lt.s32.totalorder %s85, 2
    // Predicated region
    $region157: #{actor_forward.1} parent=5 // pred_check
      %p1069 = pneg %p1068
    $region158: #{actor_forward.1} parent=5 // pred_check_branch
      %1071 = sbr.rel (%p1069) target = $region160
    $region159: #{actor_forward.1} parent=5 // pred_region
      // Predicated region
      $region161: #{actor_forward.1} parent=159 // pred_check
        %p1072 = pneg %p105
      $region162: #{actor_forward.1} parent=159 // pred_check_branch
        %1074 = sbr.rel (%p1072) target = $region164
      $region163: #{actor_forward.1} parent=159 // pred_region
        %p1075 = scmp.lt.s32.totalorder %s85, 1
        %s1076 = scalar_select %p1075, %s85, 1
        %s1077 = smul.addr %s1076, 8
        %s1078 = scalar_lea.vmem %s1, %s1077
      $region164: #{actor_forward.1} parent=159 // pred_fallthru
        _
      // Predicated region
      $region165: #{actor_forward.1} parent=159 // pred_check
        %p1079 = pneg %p131
      $region166: #{actor_forward.1} parent=159 // pred_check_branch
        %1081 = sbr.rel (%p1079) target = $region168
      $region167: #{actor_forward.1} parent=159 // pred_region
        %p1082 = scmp.lt.s32.totalorder %s85, 1
        %s1083 = scalar_select %p1082, %s85, 1
        %s1084 = smul.addr %s1083, 8
        %s1085 = scalar_lea.vmem %s3, %s1084
      $region168: #{actor_forward.1} parent=159 // pred_fallthru
        _
      // Predicated region
      $region169: #{actor_forward.1} parent=159 // pred_check
        %p1086 = pneg %p157
      $region170: #{actor_forward.1} parent=159 // pred_check_branch
        %1088 = sbr.rel (%p1086) target = $region172
      $region171: #{actor_forward.1} parent=159 // pred_region
        %p1089 = scmp.lt.s32.totalorder %s85, 1
        %s1090 = scalar_select %p1089, %s85, 1
        %s1091 = scalar_lea.vmem %s5, %s1090
      $region172: #{actor_forward.1} parent=159 // pred_fallthru
        _
    $region160: #{actor_forward.1} parent=5 // pred_fallthru
      _
    %p1092 = scmp.le.s32.totalorder 1, %s85
    %p1093 = scmp.lt.s32.totalorder %s85, 3
    %p1094 = pnand %p1092, %p1093
    %p1095 = pneg %p1094
    // Predicated region
    $region173: #{actor_forward.1} parent=5 // pred_check
      _
    $region174: #{actor_forward.1} parent=5 // pred_check_branch
      %1097 = sbr.rel (%p1094) target = $region176
    $region175: #{actor_forward.1} parent=5 // pred_region
      %s1098 = ssub.s32 %s85, 1
      %p1099 = scmp.lt.s32.totalorder %s90, 1
      %s1100 = scalar_select %p1099, %s90, 1
      %s1101 = smul.addr %s1100, 8
      %s1102 = scalar_lea.vmem %s1, %s1101
      %p1103 = pneg %p111
      %p1104 = pneg %p108
      %p1105 = scmp.lt.s32.totalorder %s90, 1
      %s1106 = scalar_select %p1105, %s90, 1
      %s1107 = smul.addr %s1106, 8
      %s1108 = scalar_lea.vmem %s3, %s1107
      %p1109 = pneg %p137
      %p1110 = pneg %p134
      %p1111 = scmp.lt.s32.totalorder %s90, 1
      %s1112 = scalar_select %p1111, %s90, 1
      %s1113 = scalar_lea.vmem %s5, %s1112
      %p1114 = pneg %p163
      %p1115 = pneg %p160
      %p1116 = pneg %p184
      %p1117 = pneg %p181
      %p1118 = pneg %p205
      %p1119 = pneg %p202
      %p1120 = pneg %p226
      %p1121 = pneg %p223
      %p1122 = pneg %p247
      %p1123 = pneg %p244
      %p1124 = pneg %p268
      %p1125 = pneg %p265
      %p1126 = pneg %p289
      %p1127 = pneg %p286
      %p1128 = pneg %p310
      %p1129 = pneg %p307
      %p1130 = pneg %p331
      %p1131 = pneg %p328
      %p1132 = pneg %p352
      %p1133 = pneg %p349
      %p1134 = pneg %p373
      %p1135 = pneg %p370
      %p1136 = pneg %p394
      %p1137 = pneg %p391
      %p1138 = pneg %p415
      %p1139 = pneg %p412
      %p1140 = pneg %p436
      %p1141 = pneg %p433
      %p1142 = pneg %p457
      %p1143 = pneg %p454
      %p1144 = pneg %p478
      %p1145 = pneg %p475
      %p1146 = pneg %p499
      %p1147 = pneg %p496
      %p1148 = pneg %p520
      %p1149 = pneg %p517
      %p1150 = pneg %p541
      %p1151 = pneg %p538
      %p1152 = pneg %p562
      %p1153 = pneg %p559
      %p1154 = pneg %p583
      %p1155 = pneg %p580
      %p1156 = pneg %p604
      %p1157 = pneg %p601
      %p1158 = pneg %p625
      %p1159 = pneg %p622
      %p1160 = pneg %p646
      %p1161 = pneg %p643
      %p1162 = pneg %p667
      %p1163 = pneg %p664
      %p1164 = pneg %p688
      %p1165 = pneg %p685
      %p1166 = pneg %p709
      %p1167 = pneg %p706
      %p1168 = pneg %p730
      %p1169 = pneg %p727
      %p1170 = pneg %p751
      %p1171 = pneg %p748
      %p1172 = pneg %p772
      %p1173 = pneg %p769
      %p1174 = pneg %p793
      %p1175 = pneg %p790
      %p1176 = pneg %p814
      %p1177 = pneg %p811
      %p1178 = pneg %p835
      %p1179 = pneg %p832
      %p1180 = pneg %p856
      %p1181 = pneg %p853
      %p1182 = pneg %p877
      %p1183 = pneg %p874
      %p1184 = pneg %p898
      %p1185 = pneg %p895
      %p1186 = pneg %p919
      %p1187 = pneg %p916
      %p1188 = pneg %p945
      %p1189 = pneg %p942
      %p1190 = scmp.lt.s32.totalorder %s90, 1
      %s1191 = scalar_select %p1190, %s90, 1
      %s1192 = smul.addr %s1191, 8
      %s1193 = scalar_lea.vmem %s79, %s1192
      %p1194 = scmp.lt.s32.totalorder %s90, 1
      %s1195 = scalar_select %p1194, %s90, 1
      %s1196 = smul.addr %s1195, 8
      %s1197 = scalar_lea.vmem %s1, %s1196
      %p1198 = scmp.lt.s32.totalorder %s90, 1
      %s1199 = scalar_select %p1198, %s90, 1
      %s1200 = smul.addr %s1199, 8
      %s1201 = scalar_lea.vmem %s3, %s1200
      %p1202 = scmp.lt.s32.totalorder %s90, 1
      %s1203 = scalar_select %p1202, %s90, 1
      %s1204 = scalar_lea.vmem %s5, %s1203
      %p1205 = scmp.lt.s32.totalorder %s90, 1
      %s1206 = scalar_select %p1205, %s90, 1
      %s1207 = smul.addr %s1206, 8
      %s1208 = scalar_lea.vmem %s79, %s1207
      %v1210 = vld [vmem:[%s7] sm:$0xf]
      %v1211 = vld [vmem:[%s7 + $0x4] sm:$0xf]
      %v1212 = vld [vmem:[%s7 + $0x8] sm:$0xf]
      %v1213 = vld [vmem:[%s7 + $0xc] sm:$0xf]
      %v1214 = vld [vmem:[%s7 + $0x10] sm:$0xf]
      %v1215 = vld [vmem:[%s7 + $0x14] sm:$0xf]
      %v1216 = vld [vmem:[%s7 + $0x18] sm:$0xf]
      %v1217 = vld [vmem:[%s7 + $0x1c] sm:$0xf]
      %v1218 = vld [vmem:[%s7 + $0x20] sm:$0xf]
      %v1219 = vld [vmem:[%s7 + $0x24] sm:$0xf]
      %v1220 = vld [vmem:[%s7 + $0x28] sm:$0xf]
      %v1221 = vld [vmem:[%s7 + $0x2c] sm:$0xf]
      %v1222 = vld [vmem:[%s7 + $0x30] sm:$0xf]
      %v1223 = vld [vmem:[%s7 + $0x34] sm:$0xf]
      %v1224 = vld [vmem:[%s7 + $0x38] sm:$0xf]
      %v1225 = vld [vmem:[%s7 + $0x3c] sm:$0xf]
      %v1226 = vld [vmem:[%s1197] sm:$0xff]
      %v1227 = vlaneseq
      %v1228 = vand.u32 %v1227, 127
      %1229 = vset.pattern.permute.xlu0 0
      %1230 = vperm.xlu0 %1229, %v1226
      %v1231 = vpop.permute.xlu0 %1230
      %vm1232 = vcmp.eq.s32.totalorder %v1228, %v1231
      %v1233 = vsel %vm1232, 1, 0
      %v1234 = vcvt.s32.f32 %v1233
      %v1235 = vpack.c.bf16 %v1234, %v1234
      %v1236 = vld [vmem:[%s9] sm:$0xff]
      %v1253 = vunpack.c.l.b16 %v1210
      %v1254 = vunpack.c.l.b16 %v1211
      %v1255 = vunpack.c.l.b16 %v1212
      %v1256 = vunpack.c.l.b16 %v1213
      %v1257 = vunpack.c.l.b16 %v1214
      %v1258 = vunpack.c.l.b16 %v1215
      %v1259 = vunpack.c.l.b16 %v1216
      %v1260 = vunpack.c.l.b16 %v1217
      %v1261 = vunpack.c.l.b16 %v1218
      %v1262 = vunpack.c.l.b16 %v1219
      %v1263 = vunpack.c.l.b16 %v1220
      %v1264 = vunpack.c.l.b16 %v1221
      %v1265 = vunpack.c.l.b16 %v1222
      %v1266 = vunpack.c.l.b16 %v1223
      %v1267 = vunpack.c.l.b16 %v1224
      %v1268 = vunpack.c.l.b16 %v1225
      %v1269 = vpack.c.b16 %v1254, %v1253
      %v1270 = vpack.c.b16 %v1256, %v1255
      %v1271 = vpack.c.b16 %v1258, %v1257
      %v1272 = vpack.c.b16 %v1260, %v1259
      %v1273 = vpack.c.b16 %v1262, %v1261
      %v1274 = vpack.c.b16 %v1264, %v1263
      %v1275 = vpack.c.b16 %v1266, %v1265
      %v1276 = vpack.c.b16 %v1268, %v1267
      %1285 = vmatprep.subr.bf16.mxu0 0
      %1286 = vmatpush1.bf16.msra.mxu0 %v1276
      %1287 = vmatprep.subr.bf16.mxu0 0
      %1288 = vmatpush1.bf16.msra.mxu0 %v1275
      %1289 = vmatprep.subr.bf16.mxu0 0
      %1290 = vmatpush1.bf16.msra.mxu0 %v1274
      %1291 = vmatprep.subr.bf16.mxu0 0
      %1292 = vmatpush1.bf16.msra.mxu0 %v1273
      %1293 = vmatprep.subr.bf16.mxu0 0
      %1294 = vmatpush1.bf16.msra.mxu0 %v1272
      %1295 = vmatprep.subr.bf16.mxu0 0
      %1296 = vmatpush1.bf16.msra.mxu0 %v1271
      %1297 = vmatprep.subr.bf16.mxu0 0
      %1298 = vmatpush1.bf16.msra.mxu0 %v1270
      %1299 = vmatprep.subr.bf16.mxu0 0
      %1300 = vmatpush1.bf16.msra.mxu0 %v1269
      %1301 = vmatprep.subr.bf16.mxu0 0
      %1302 = vmatpush2.bf16.msra.mxu0 0
      %1303 = vmatprep.subr.bf16.mxu0 0
      %1304 = vmatpush2.bf16.msra.mxu0 0
      %1305 = vmatprep.subr.bf16.mxu0 0
      %1306 = vmatpush2.bf16.msra.mxu0 0
      %1307 = vmatprep.subr.bf16.mxu0 0
      %1308 = vmatpush2.bf16.msra.mxu0 0
      %1309 = vmatprep.subr.bf16.mxu0 0
      %1310 = vmatpush2.bf16.msra.mxu0 0
      %1311 = vmatprep.subr.bf16.mxu0 0
      %1312 = vmatpush2.bf16.msra.mxu0 0
      %1313 = vmatprep.subr.bf16.mxu0 0
      %1314 = vmatpush2.bf16.msra.mxu0 0
      %1315 = vmatprep.subr.bf16.mxu0 0
      %1316 = vmatpush2.bf16.msra.mxu0 0
      %1317 = vmatprep.mubr.bf16.mxu0 0
      %1318 = vmatmul.mubr.bf16.gmra.mxu0 %v1235
      %v1319 = vpop.f32.mrf.mxu0
      %v1320 = vadd.f32 %v1236, %v1319
      %v1321 = vpop.f32.mrf.mxu0
      %v1322 = vpop.f32.mrf.mxu0
      %v1323 = vpop.f32.mrf.mxu0
      %1324 = vdwg.mxu0
      %v1325 = vld [vmem:[%s1204] sm:$0x1]
      %v1326 = vlaneseq
      %v1327 = vshrl.u32 %v1326, 7
      %vm1328 = vcmp.le.s32.totalorder %v1228, %v1327
      %v1329 = vsel %vm1328, 0.0, -1e+09
      %v1330 = vsub.f32 1.0, %v1325
      %v1331 = vmul.f32 %v1330, -1e+09
      %v1333 = vlaneseq
      %v1334 = vshrl.u32 %v1333, 7
      %v1335 = vsub.s32 0, %v1334
      %v1336 = vrot.slane %v1331, %v1335
      %v1338 = vadd.f32 %v1329, %v1336
      %v1339 = vld [vmem:[%s15] sm:$0x1]
      %v1340 = vld [vmem:[%s17] sm:$0x1]
      %vm1341 = vcmask 261120
      %v1342 = vsel %vm1341, %v1320, 0.0
      %1343 = vadd.xlane.f32.xlu0 %v1342
      %v1344 = vpop.xlane.xlu0 %1343
      %v1345 = vrcp.pop 32.0
      %v1346 = vmul.f32 %v1344, %v1345
      %v1347 = vsub.f32 %v1320, %v1346
      %v1348 = vmul.f32 %v1347, %v1347
      %v1349 = vsel %vm1341, %v1348, 0.0
      %1350 = vadd.xlane.f32.xlu0 %v1349
      %v1351 = vpop.xlane.xlu0 %1350
      %v1352 = vmul.f32 %v1351, %v1345
      %v1353 = vadd.f32 %v1352, 1e-05
      %v1354 = vrsqrt.pop %v1353
      %v1355 = vmul.f32 %v1347, %v1354
      %v1357 = vlaneseq
      %v1358 = vshrl.u32 %v1357, 7
      %v1359 = vsub.s32 0, %v1358
      %v1360 = vrot.slane %v1339, %v1359
      %v1362 = vmul.f32 %v1355, %v1360
      %v1364 = vlaneseq
      %v1365 = vshrl.u32 %v1364, 7
      %v1366 = vsub.s32 0, %v1365
      %v1367 = vrot.slane %v1340, %v1366
      %v1369 = vadd.f32 %v1362, %v1367
      %v1370 = vpack.c.bf16 %v1369, %v1369
      %v1371 = vld [vmem:[%s19] sm:$0xf]
      %v1372 = vld [vmem:[%s19 + $0x4] sm:$0xf]
      %v1373 = vld [vmem:[%s19 + $0x8] sm:$0xf]
      %v1374 = vld [vmem:[%s19 + $0xc] sm:$0xf]
      %v1375 = vld [vmem:[%s25] sm:$0x1]
      %v1377 = vlaneseq
      %v1378 = vshrl.u32 %v1377, 7
      %v1379 = vsub.s32 0, %v1378
      %v1380 = vrot.slane %v1375, %v1379
      %v1386 = vunpack.c.l.b16 %v1371
      %v1387 = vunpack.c.l.b16 %v1372
      %v1388 = vunpack.c.l.b16 %v1373
      %v1389 = vunpack.c.l.b16 %v1374
      %v1390 = vpack.c.b16 %v1387, %v1386
      %v1391 = vpack.c.b16 %v1389, %v1388
      %v1395 = vsel %vm1341, %v1370, 0
      %1397 = vmatprep.subr.bf16.mxu0 0
      %1398 = vmatpush1.bf16.msra.mxu0 0
      %1399 = vmatprep.subr.bf16.mxu0 0
      %1400 = vmatpush1.bf16.msra.mxu0 0
      %1401 = vmatprep.subr.bf16.mxu0 0
      %1402 = vmatpush1.bf16.msra.mxu0 0
      %1403 = vmatprep.subr.bf16.mxu0 0
      %1404 = vmatpush1.bf16.msra.mxu0 0
      %1405 = vmatprep.subr.bf16.mxu0 0
      %1406 = vmatpush1.bf16.msra.mxu0 0
      %1407 = vmatprep.subr.bf16.mxu0 0
      %1408 = vmatpush1.bf16.msra.mxu0 0
      %1409 = vmatprep.subr.bf16.mxu0 0
      %1410 = vmatpush1.bf16.msra.mxu0 %v1391
      %1411 = vmatprep.subr.bf16.mxu0 0
      %1412 = vmatpush1.bf16.msra.mxu0 %v1390
      %1413 = vmatprep.subr.bf16.mxu0 0
      %1414 = vmatpush2.bf16.msra.mxu0 0
      %1415 = vmatprep.subr.bf16.mxu0 0
      %1416 = vmatpush2.bf16.msra.mxu0 0
      %1417 = vmatprep.subr.bf16.mxu0 0
      %1418 = vmatpush2.bf16.msra.mxu0 0
      %1419 = vmatprep.subr.bf16.mxu0 0
      %1420 = vmatpush2.bf16.msra.mxu0 0
      %1421 = vmatprep.subr.bf16.mxu0 0
      %1422 = vmatpush2.bf16.msra.mxu0 0
      %1423 = vmatprep.subr.bf16.mxu0 0
      %1424 = vmatpush2.bf16.msra.mxu0 0
      %1425 = vmatprep.subr.bf16.mxu0 0
      %1426 = vmatpush2.bf16.msra.mxu0 0
      %1427 = vmatprep.subr.bf16.mxu0 0
      %1428 = vmatpush2.bf16.msra.mxu0 0
      %1429 = vmatprep.mubr.bf16.mxu0 0
      %1430 = vmatmul.mubr.bf16.gmra.mxu0 %v1395
      %v1431 = vpop.f32.mrf.mxu0
      %v1432 = vadd.f32 %v1380, %v1431
      %v1433 = vpop.f32.mrf.mxu0
      %v1434 = vpop.f32.mrf.mxu0
      %v1435 = vpop.f32.mrf.mxu0
      %1436 = vdwg.mxu0
      %v1437 = vld [vmem:[%s21] sm:$0xf]
      %v1438 = vld [vmem:[%s21 + $0x4] sm:$0xf]
      %v1439 = vld [vmem:[%s21 + $0x8] sm:$0xf]
      %v1440 = vld [vmem:[%s21 + $0xc] sm:$0xf]
      %v1441 = vld [vmem:[%s27] sm:$0x1]
      %v1443 = vlaneseq
      %v1444 = vshrl.u32 %v1443, 7
      %v1445 = vsub.s32 0, %v1444
      %v1446 = vrot.slane %v1441, %v1445
      %v1452 = vunpack.c.l.b16 %v1437
      %v1453 = vunpack.c.l.b16 %v1438
      %v1454 = vunpack.c.l.b16 %v1439
      %v1455 = vunpack.c.l.b16 %v1440
      %v1456 = vpack.c.b16 %v1453, %v1452
      %v1457 = vpack.c.b16 %v1455, %v1454
      %1460 = vmatprep.subr.bf16.mxu0 0
      %1461 = vmatpush1.bf16.msra.mxu0 0
      %1462 = vmatprep.subr.bf16.mxu0 0
      %1463 = vmatpush1.bf16.msra.mxu0 0
      %1464 = vmatprep.subr.bf16.mxu0 0
      %1465 = vmatpush1.bf16.msra.mxu0 0
      %1466 = vmatprep.subr.bf16.mxu0 0
      %1467 = vmatpush1.bf16.msra.mxu0 0
      %1468 = vmatprep.subr.bf16.mxu0 0
      %1469 = vmatpush1.bf16.msra.mxu0 0
      %1470 = vmatprep.subr.bf16.mxu0 0
      %1471 = vmatpush1.bf16.msra.mxu0 0
      %1472 = vmatprep.subr.bf16.mxu0 0
      %1473 = vmatpush1.bf16.msra.mxu0 %v1457
      %1474 = vmatprep.subr.bf16.mxu0 0
      %1475 = vmatpush1.bf16.msra.mxu0 %v1456
      %1476 = vmatprep.subr.bf16.mxu0 0
      %1477 = vmatpush2.bf16.msra.mxu0 0
      %1478 = vmatprep.subr.bf16.mxu0 0
      %1479 = vmatpush2.bf16.msra.mxu0 0
      %1480 = vmatprep.subr.bf16.mxu0 0
      %1481 = vmatpush2.bf16.msra.mxu0 0
      %1482 = vmatprep.subr.bf16.mxu0 0
      %1483 = vmatpush2.bf16.msra.mxu0 0
      %1484 = vmatprep.subr.bf16.mxu0 0
      %1485 = vmatpush2.bf16.msra.mxu0 0
      %1486 = vmatprep.subr.bf16.mxu0 0
      %1487 = vmatpush2.bf16.msra.mxu0 0
      %1488 = vmatprep.subr.bf16.mxu0 0
      %1489 = vmatpush2.bf16.msra.mxu0 0
      %1490 = vmatprep.subr.bf16.mxu0 0
      %1491 = vmatpush2.bf16.msra.mxu0 0
      %1492 = vmatprep.mubr.bf16.mxu0 0
      %1493 = vmatmul.mubr.bf16.gmra.mxu0 %v1395
      %v1494 = vpop.f32.mrf.mxu0
      %v1495 = vadd.f32 %v1446, %v1494
      %v1496 = vpop.f32.mrf.mxu0
      %v1497 = vpop.f32.mrf.mxu0
      %v1498 = vpop.f32.mrf.mxu0
      %1499 = vdwg.mxu0
      %v1500 = vld [vmem:[%s23] sm:$0xf]
      %v1501 = vld [vmem:[%s23 + $0x4] sm:$0xf]
      %v1502 = vld [vmem:[%s23 + $0x8] sm:$0xf]
      %v1503 = vld [vmem:[%s23 + $0xc] sm:$0xf]
      %v1504 = vld [vmem:[%s29] sm:$0x1]
      %v1506 = vlaneseq
      %v1507 = vshrl.u32 %v1506, 7
      %v1508 = vsub.s32 0, %v1507
      %v1509 = vrot.slane %v1504, %v1508
      %v1515 = vunpack.c.l.b16 %v1500
      %v1516 = vunpack.c.l.b16 %v1501
      %v1517 = vunpack.c.l.b16 %v1502
      %v1518 = vunpack.c.l.b16 %v1503
      %v1519 = vpack.c.b16 %v1516, %v1515
      %v1520 = vpack.c.b16 %v1518, %v1517
      %1523 = vmatprep.subr.bf16.mxu0 0
      %1524 = vmatpush1.bf16.msra.mxu0 0
      %1525 = vmatprep.subr.bf16.mxu0 0
      %1526 = vmatpush1.bf16.msra.mxu0 0
      %1527 = vmatprep.subr.bf16.mxu0 0
      %1528 = vmatpush1.bf16.msra.mxu0 0
      %1529 = vmatprep.subr.bf16.mxu0 0
      %1530 = vmatpush1.bf16.msra.mxu0 0
      %1531 = vmatprep.subr.bf16.mxu0 0
      %1532 = vmatpush1.bf16.msra.mxu0 0
      %1533 = vmatprep.subr.bf16.mxu0 0
      %1534 = vmatpush1.bf16.msra.mxu0 0
      %1535 = vmatprep.subr.bf16.mxu0 0
      %1536 = vmatpush1.bf16.msra.mxu0 %v1520
      %1537 = vmatprep.subr.bf16.mxu0 0
      %1538 = vmatpush1.bf16.msra.mxu0 %v1519
      %1539 = vmatprep.subr.bf16.mxu0 0
      %1540 = vmatpush2.bf16.msra.mxu0 0
      %1541 = vmatprep.subr.bf16.mxu0 0
      %1542 = vmatpush2.bf16.msra.mxu0 0
      %1543 = vmatprep.subr.bf16.mxu0 0
      %1544 = vmatpush2.bf16.msra.mxu0 0
      %1545 = vmatprep.subr.bf16.mxu0 0
      %1546 = vmatpush2.bf16.msra.mxu0 0
      %1547 = vmatprep.subr.bf16.mxu0 0
      %1548 = vmatpush2.bf16.msra.mxu0 0
      %1549 = vmatprep.subr.bf16.mxu0 0
      %1550 = vmatpush2.bf16.msra.mxu0 0
      %1551 = vmatprep.subr.bf16.mxu0 0
      %1552 = vmatpush2.bf16.msra.mxu0 0
      %1553 = vmatprep.subr.bf16.mxu0 0
      %1554 = vmatpush2.bf16.msra.mxu0 0
      %1555 = vmatprep.mubr.bf16.mxu0 0
      %1556 = vmatmul.mubr.bf16.gmra.mxu0 %v1395
      %v1557 = vpop.f32.mrf.mxu0
      %v1558 = vadd.f32 %v1509, %v1557
      %v1559 = vpop.f32.mrf.mxu0
      %v1560 = vpop.f32.mrf.mxu0
      %v1561 = vpop.f32.mrf.mxu0
      %1562 = vdwg.mxu0
      %v1563 = vpack.c.bf16 %v1432, %v1432
      %v1564 = vpack.c.bf16 %v1495, %v1495
      %vm1565 = vcmask 130048
      %v1567 = vsel %vm1565, %v1563, 0
      %v1570 = vsel %vm1565, %v1564, 0
      %1572 = vmatprep.subr.bf16.mxu0 0
      %1573 = vmatpush1.bf16.xpose.msra.mxu0 0
      %1574 = vmatprep.subr.bf16.mxu0 0
      %1575 = vmatpush1.bf16.xpose.msra.mxu0 0
      %1576 = vmatprep.subr.bf16.mxu0 0
      %1577 = vmatpush1.bf16.xpose.msra.mxu0 0
      %1578 = vmatprep.subr.bf16.mxu0 0
      %1579 = vmatpush1.bf16.xpose.msra.mxu0 0
      %1580 = vmatprep.subr.bf16.mxu0 0
      %1581 = vmatpush1.bf16.xpose.msra.mxu0 0
      %1582 = vmatprep.subr.bf16.mxu0 0
      %1583 = vmatpush1.bf16.xpose.msra.mxu0 0
      %1584 = vmatprep.subr.bf16.mxu0 0
      %1585 = vmatpush1.bf16.xpose.msra.mxu0 0
      %1586 = vmatprep.subr.bf16.mxu0 0
      %1587 = vmatpush1.bf16.xpose.msra.mxu0 %v1570
      %1588 = vmatprep.subr.bf16.mxu0 0
      %1589 = vmatpush2.bf16.xpose.msra.mxu0 0
      %1590 = vmatprep.subr.bf16.mxu0 0
      %1591 = vmatpush2.bf16.xpose.msra.mxu0 0
      %1592 = vmatprep.subr.bf16.mxu0 0
      %1593 = vmatpush2.bf16.xpose.msra.mxu0 0
      %1594 = vmatprep.subr.bf16.mxu0 0
      %1595 = vmatpush2.bf16.xpose.msra.mxu0 0
      %1596 = vmatprep.subr.bf16.mxu0 0
      %1597 = vmatpush2.bf16.xpose.msra.mxu0 0
      %1598 = vmatprep.subr.bf16.mxu0 0
      %1599 = vmatpush2.bf16.xpose.msra.mxu0 0
      %1600 = vmatprep.subr.bf16.mxu0 0
      %1601 = vmatpush2.bf16.xpose.msra.mxu0 0
      %1602 = vmatprep.subr.bf16.mxu0 0
      %1603 = vmatpush2.bf16.xpose.msra.mxu0 0
      %1604 = vmatprep.mubr.bf16.mxu0 0
      %1605 = vmatmul.mubr.bf16.gmra.mxu0 %v1567
      %v1606 = vpop.f32.mrf.mxu0
      %v1607 = vadd.f32 0.0, %v1606
      %v1608 = vpop.f32.mrf.mxu0
      %v1609 = vpop.f32.mrf.mxu0
      %v1610 = vpop.f32.mrf.mxu0
      %1611 = vdwg.mxu0
      %s1612 = scalar_lea.vmem %s19, 16
      %v1613 = vld [vmem:[%s1612] sm:$0xf]
      %v1614 = vld [vmem:[%s1612 + $0x4] sm:$0xf]
      %v1615 = vld [vmem:[%s1612 + $0x8] sm:$0xf]
      %v1616 = vld [vmem:[%s1612 + $0xc] sm:$0xf]
      %s1617 = scalar_lea.vmem %s25, 1
      %v1618 = vld [vmem:[%s1617] sm:$0x1]
      %v1620 = vlaneseq
      %v1621 = vshrl.u32 %v1620, 7
      %v1622 = vsub.s32 0, %v1621
      %v1623 = vrot.slane %v1618, %v1622
      %v1629 = vunpack.c.l.b16 %v1613
      %v1630 = vunpack.c.l.b16 %v1614
      %v1631 = vunpack.c.l.b16 %v1615
      %v1632 = vunpack.c.l.b16 %v1616
      %v1633 = vpack.c.b16 %v1630, %v1629
      %v1634 = vpack.c.b16 %v1632, %v1631
      %1637 = vmatprep.subr.bf16.mxu0 0
      %1638 = vmatpush1.bf16.msra.mxu0 0
      %1639 = vmatprep.subr.bf16.mxu0 0
      %1640 = vmatpush1.bf16.msra.mxu0 0
      %1641 = vmatprep.subr.bf16.mxu0 0
      %1642 = vmatpush1.bf16.msra.mxu0 0
      %1643 = vmatprep.subr.bf16.mxu0 0
      %1644 = vmatpush1.bf16.msra.mxu0 0
      %1645 = vmatprep.subr.bf16.mxu0 0
      %1646 = vmatpush1.bf16.msra.mxu0 0
      %1647 = vmatprep.subr.bf16.mxu0 0
      %1648 = vmatpush1.bf16.msra.mxu0 0
      %1649 = vmatprep.subr.bf16.mxu0 0
      %1650 = vmatpush1.bf16.msra.mxu0 %v1634
      %1651 = vmatprep.subr.bf16.mxu0 0
      %1652 = vmatpush1.bf16.msra.mxu0 %v1633
      %1653 = vmatprep.subr.bf16.mxu0 0
      %1654 = vmatpush2.bf16.msra.mxu0 0
      %1655 = vmatprep.subr.bf16.mxu0 0
      %1656 = vmatpush2.bf16.msra.mxu0 0
      %1657 = vmatprep.subr.bf16.mxu0 0
      %1658 = vmatpush2.bf16.msra.mxu0 0
      %1659 = vmatprep.subr.bf16.mxu0 0
      %1660 = vmatpush2.bf16.msra.mxu0 0
      %1661 = vmatprep.subr.bf16.mxu0 0
      %1662 = vmatpush2.bf16.msra.mxu0 0
      %1663 = vmatprep.subr.bf16.mxu0 0
      %1664 = vmatpush2.bf16.msra.mxu0 0
      %1665 = vmatprep.subr.bf16.mxu0 0
      %1666 = vmatpush2.bf16.msra.mxu0 0
      %1667 = vmatprep.subr.bf16.mxu0 0
      %1668 = vmatpush2.bf16.msra.mxu0 0
      %1669 = vmatprep.mubr.bf16.mxu0 0
      %1670 = vmatmul.mubr.bf16.gmra.mxu0 %v1395
      %v1671 = vpop.f32.mrf.mxu0
      %v1672 = vadd.f32 %v1623, %v1671
      %v1673 = vpop.f32.mrf.mxu0
      %v1674 = vpop.f32.mrf.mxu0
      %v1675 = vpop.f32.mrf.mxu0
      %1676 = vdwg.mxu0
      %s1677 = scalar_lea.vmem %s21, 16
      %v1678 = vld [vmem:[%s1677] sm:$0xf]
      %v1679 = vld [vmem:[%s1677 + $0x4] sm:$0xf]
      %v1680 = vld [vmem:[%s1677 + $0x8] sm:$0xf]
      %v1681 = vld [vmem:[%s1677 + $0xc] sm:$0xf]
      %s1682 = scalar_lea.vmem %s27, 1
      %v1683 = vld [vmem:[%s1682] sm:$0x1]
      %v1685 = vlaneseq
      %v1686 = vshrl.u32 %v1685, 7
      %v1687 = vsub.s32 0, %v1686
      %v1688 = vrot.slane %v1683, %v1687
      %v1694 = vunpack.c.l.b16 %v1678
      %v1695 = vunpack.c.l.b16 %v1679
      %v1696 = vunpack.c.l.b16 %v1680
      %v1697 = vunpack.c.l.b16 %v1681
      %v1698 = vpack.c.b16 %v1695, %v1694
      %v1699 = vpack.c.b16 %v1697, %v1696
      %1702 = vmatprep.subr.bf16.mxu0 0
      %1703 = vmatpush1.bf16.msra.mxu0 0
      %1704 = vmatprep.subr.bf16.mxu0 0
      %1705 = vmatpush1.bf16.msra.mxu0 0
      %1706 = vmatprep.subr.bf16.mxu0 0
      %1707 = vmatpush1.bf16.msra.mxu0 0
      %1708 = vmatprep.subr.bf16.mxu0 0
      %1709 = vmatpush1.bf16.msra.mxu0 0
      %1710 = vmatprep.subr.bf16.mxu0 0
      %1711 = vmatpush1.bf16.msra.mxu0 0
      %1712 = vmatprep.subr.bf16.mxu0 0
      %1713 = vmatpush1.bf16.msra.mxu0 0
      %1714 = vmatprep.subr.bf16.mxu0 0
      %1715 = vmatpush1.bf16.msra.mxu0 %v1699
      %1716 = vmatprep.subr.bf16.mxu0 0
      %1717 = vmatpush1.bf16.msra.mxu0 %v1698
      %1718 = vmatprep.subr.bf16.mxu0 0
      %1719 = vmatpush2.bf16.msra.mxu0 0
      %1720 = vmatprep.subr.bf16.mxu0 0
      %1721 = vmatpush2.bf16.msra.mxu0 0
      %1722 = vmatprep.subr.bf16.mxu0 0
      %1723 = vmatpush2.bf16.msra.mxu0 0
      %1724 = vmatprep.subr.bf16.mxu0 0
      %1725 = vmatpush2.bf16.msra.mxu0 0
      %1726 = vmatprep.subr.bf16.mxu0 0
      %1727 = vmatpush2.bf16.msra.mxu0 0
      %1728 = vmatprep.subr.bf16.mxu0 0
      %1729 = vmatpush2.bf16.msra.mxu0 0
      %1730 = vmatprep.subr.bf16.mxu0 0
      %1731 = vmatpush2.bf16.msra.mxu0 0
      %1732 = vmatprep.subr.bf16.mxu0 0
      %1733 = vmatpush2.bf16.msra.mxu0 0
      %1734 = vmatprep.mubr.bf16.mxu0 0
      %1735 = vmatmul.mubr.bf16.gmra.mxu0 %v1395
      %v1736 = vpop.f32.mrf.mxu0
      %v1737 = vadd.f32 %v1688, %v1736
      %v1738 = vpop.f32.mrf.mxu0
      %v1739 = vpop.f32.mrf.mxu0
      %v1740 = vpop.f32.mrf.mxu0
      %1741 = vdwg.mxu0
      %s1742 = scalar_lea.vmem %s23, 16
      %v1743 = vld [vmem:[%s1742] sm:$0xf]
      %v1744 = vld [vmem:[%s1742 + $0x4] sm:$0xf]
      %v1745 = vld [vmem:[%s1742 + $0x8] sm:$0xf]
      %v1746 = vld [vmem:[%s1742 + $0xc] sm:$0xf]
      %s1747 = scalar_lea.vmem %s29, 1
      %v1748 = vld [vmem:[%s1747] sm:$0x1]
      %v1750 = vlaneseq
      %v1751 = vshrl.u32 %v1750, 7
      %v1752 = vsub.s32 0, %v1751
      %v1753 = vrot.slane %v1748, %v1752
      %v1759 = vunpack.c.l.b16 %v1743
      %v1760 = vunpack.c.l.b16 %v1744
      %v1761 = vunpack.c.l.b16 %v1745
      %v1762 = vunpack.c.l.b16 %v1746
      %v1763 = vpack.c.b16 %v1760, %v1759
      %v1764 = vpack.c.b16 %v1762, %v1761
      %1767 = vmatprep.subr.bf16.mxu0 0
      %1768 = vmatpush1.bf16.msra.mxu0 0
      %1769 = vmatprep.subr.bf16.mxu0 0
      %1770 = vmatpush1.bf16.msra.mxu0 0
      %1771 = vmatprep.subr.bf16.mxu0 0
      %1772 = vmatpush1.bf16.msra.mxu0 0
      %1773 = vmatprep.subr.bf16.mxu0 0
      %1774 = vmatpush1.bf16.msra.mxu0 0
      %1775 = vmatprep.subr.bf16.mxu0 0
      %1776 = vmatpush1.bf16.msra.mxu0 0
      %1777 = vmatprep.subr.bf16.mxu0 0
      %1778 = vmatpush1.bf16.msra.mxu0 0
      %1779 = vmatprep.subr.bf16.mxu0 0
      %1780 = vmatpush1.bf16.msra.mxu0 %v1764
      %1781 = vmatprep.subr.bf16.mxu0 0
      %1782 = vmatpush1.bf16.msra.mxu0 %v1763
      %1783 = vmatprep.subr.bf16.mxu0 0
      %1784 = vmatpush2.bf16.msra.mxu0 0
      %1785 = vmatprep.subr.bf16.mxu0 0
      %1786 = vmatpush2.bf16.msra.mxu0 0
      %1787 = vmatprep.subr.bf16.mxu0 0
      %1788 = vmatpush2.bf16.msra.mxu0 0
      %1789 = vmatprep.subr.bf16.mxu0 0
      %1790 = vmatpush2.bf16.msra.mxu0 0
      %1791 = vmatprep.subr.bf16.mxu0 0
      %1792 = vmatpush2.bf16.msra.mxu0 0
      %1793 = vmatprep.subr.bf16.mxu0 0
      %1794 = vmatpush2.bf16.msra.mxu0 0
      %1795 = vmatprep.subr.bf16.mxu0 0
      %1796 = vmatpush2.bf16.msra.mxu0 0
      %1797 = vmatprep.subr.bf16.mxu0 0
      %1798 = vmatpush2.bf16.msra.mxu0 0
      %1799 = vmatprep.mubr.bf16.mxu0 0
      %1800 = vmatmul.mubr.bf16.gmra.mxu0 %v1395
      %v1801 = vpop.f32.mrf.mxu0
      %v1802 = vadd.f32 %v1753, %v1801
      %v1803 = vpop.f32.mrf.mxu0
      %v1804 = vpop.f32.mrf.mxu0
      %v1805 = vpop.f32.mrf.mxu0
      %1806 = vdwg.mxu0
      %v1807 = vpack.c.bf16 %v1672, %v1672
      %v1808 = vpack.c.bf16 %v1737, %v1737
      %v1810 = vsel %vm1565, %v1807, 0
      %v1813 = vsel %vm1565, %v1808, 0
      %1815 = vmatprep.subr.bf16.mxu0 0
      %1816 = vmatpush1.bf16.xpose.msra.mxu0 0
      %1817 = vmatprep.subr.bf16.mxu0 0
      %1818 = vmatpush1.bf16.xpose.msra.mxu0 0
      %1819 = vmatprep.subr.bf16.mxu0 0
      %1820 = vmatpush1.bf16.xpose.msra.mxu0 0
      %1821 = vmatprep.subr.bf16.mxu0 0
      %1822 = vmatpush1.bf16.xpose.msra.mxu0 0
      %1823 = vmatprep.subr.bf16.mxu0 0
      %1824 = vmatpush1.bf16.xpose.msra.mxu0 0
      %1825 = vmatprep.subr.bf16.mxu0 0
      %1826 = vmatpush1.bf16.xpose.msra.mxu0 0
      %1827 = vmatprep.subr.bf16.mxu0 0
      %1828 = vmatpush1.bf16.xpose.msra.mxu0 0
      %1829 = vmatprep.subr.bf16.mxu0 0
      %1830 = vmatpush1.bf16.xpose.msra.mxu0 %v1813
      %1831 = vmatprep.subr.bf16.mxu0 0
      %1832 = vmatpush2.bf16.xpose.msra.mxu0 0
      %1833 = vmatprep.subr.bf16.mxu0 0
      %1834 = vmatpush2.bf16.xpose.msra.mxu0 0
      %1835 = vmatprep.subr.bf16.mxu0 0
      %1836 = vmatpush2.bf16.xpose.msra.mxu0 0
      %1837 = vmatprep.subr.bf16.mxu0 0
      %1838 = vmatpush2.bf16.xpose.msra.mxu0 0
      %1839 = vmatprep.subr.bf16.mxu0 0
      %1840 = vmatpush2.bf16.xpose.msra.mxu0 0
      %1841 = vmatprep.subr.bf16.mxu0 0
      %1842 = vmatpush2.bf16.xpose.msra.mxu0 0
      %1843 = vmatprep.subr.bf16.mxu0 0
      %1844 = vmatpush2.bf16.xpose.msra.mxu0 0
      %1845 = vmatprep.subr.bf16.mxu0 0
      %1846 = vmatpush2.bf16.xpose.msra.mxu0 0
      %1847 = vmatprep.mubr.bf16.mxu0 0
      %1848 = vmatmul.mubr.bf16.gmra.mxu0 %v1810
      %v1849 = vpop.f32.mrf.mxu0
      %v1850 = vadd.f32 0.0, %v1849
      %v1851 = vpop.f32.mrf.mxu0
      %v1852 = vpop.f32.mrf.mxu0
      %v1853 = vpop.f32.mrf.mxu0
      %1854 = vdwg.mxu0
      %v1855 = vadd.f32 %v1607, %v1338
      %v1856 = vadd.f32 %v1850, %v1338
      %vm1857 = vcmask 64512
      %v1858 = vsel %vm1857, %v1855, -inf
      %1859 = vmax.xlane.f32.xlu0 %v1858
      %v1860 = vpop.xlane.xlu0 %1859
      %v1861 = vsel %vm1857, %v1856, -inf
      %1862 = vmax.xlane.f32.xlu0 %v1861
      %v1863 = vpop.xlane.xlu0 %1862
      %v1864 = vsub.f32 %v1855, %v1860
      %v1865 = vsub.f32 %v1856, %v1863
      %v1866 = vmul.f32 %v1864, 1.442695
      %v1867 = vpow.pop %v1866
      %v1868 = vmul.f32 %v1865, 1.442695
      %v1869 = vpow.pop %v1868
      %v1870 = vsel %vm1857, %v1867, 0.0
      %1871 = vadd.xlane.f32.xlu0 %v1870
      %v1872 = vpop.xlane.xlu0 %1871
      %v1873 = vsel %vm1857, %v1869, 0.0
      %1874 = vadd.xlane.f32.xlu0 %v1873
      %v1875 = vpop.xlane.xlu0 %1874
      %v1876 = vrcp.pop %v1872
      %v1877 = vmul.f32 1.0, %v1876
      %v1878 = vrcp.pop %v1875
      %v1879 = vmul.f32 1.0, %v1878
      %v1880 = vmul.f32 %v1867, %v1877
      %v1881 = vmul.f32 %v1869, %v1879
      %v1882 = vpack.c.bf16 %v1880, %v1880
      %v1883 = vpack.c.bf16 %v1558, %v1558
      %v1885 = vsel %vm1857, %v1882, 0
      %vm1887 = vcmask 1043456
      %v1889 = vsel %vm1887, %v1883, 0
      %1891 = vmatprep.subr.bf16.mxu0 0
      %1892 = vmatpush1.bf16.msra.mxu0 0
      %1893 = vmatprep.subr.bf16.mxu0 0
      %1894 = vmatpush1.bf16.msra.mxu0 0
      %1895 = vmatprep.subr.bf16.mxu0 0
      %1896 = vmatpush1.bf16.msra.mxu0 0
      %1897 = vmatprep.subr.bf16.mxu0 0
      %1898 = vmatpush1.bf16.msra.mxu0 0
      %1899 = vmatprep.subr.bf16.mxu0 0
      %1900 = vmatpush1.bf16.msra.mxu0 0
      %1901 = vmatprep.subr.bf16.mxu0 0
      %1902 = vmatpush1.bf16.msra.mxu0 0
      %1903 = vmatprep.subr.bf16.mxu0 0
      %1904 = vmatpush1.bf16.msra.mxu0 0
      %1905 = vmatprep.subr.bf16.mxu0 0
      %1906 = vmatpush1.bf16.msra.mxu0 %v1889
      %1907 = vmatprep.subr.bf16.mxu0 0
      %1908 = vmatpush2.bf16.msra.mxu0 0
      %1909 = vmatprep.subr.bf16.mxu0 0
      %1910 = vmatpush2.bf16.msra.mxu0 0
      %1911 = vmatprep.subr.bf16.mxu0 0
      %1912 = vmatpush2.bf16.msra.mxu0 0
      %1913 = vmatprep.subr.bf16.mxu0 0
      %1914 = vmatpush2.bf16.msra.mxu0 0
      %1915 = vmatprep.subr.bf16.mxu0 0
      %1916 = vmatpush2.bf16.msra.mxu0 0
      %1917 = vmatprep.subr.bf16.mxu0 0
      %1918 = vmatpush2.bf16.msra.mxu0 0
      %1919 = vmatprep.subr.bf16.mxu0 0
      %1920 = vmatpush2.bf16.msra.mxu0 0
      %1921 = vmatprep.subr.bf16.mxu0 0
      %1922 = vmatpush2.bf16.msra.mxu0 0
      %1923 = vmatprep.mubr.bf16.mxu0 0
      %1924 = vmatmul.mubr.bf16.gmra.mxu0 %v1885
      %v1925 = vpop.f32.mrf.mxu0
      %v1926 = vadd.f32 0.0, %v1925
      %v1927 = vpop.f32.mrf.mxu0
      %v1928 = vpop.f32.mrf.mxu0
      %v1929 = vpop.f32.mrf.mxu0
      %1930 = vdwg.mxu0
      %v1931 = vld [vmem:[%s31] sm:$0xf]
      %v1932 = vld [vmem:[%s31 + $0x4] sm:$0xf]
      %v1933 = vpack.c.bf16 %v1926, %v1926
      %v1934 = vpack.c.bf16 %v1881, %v1881
      %v1935 = vpack.c.bf16 %v1802, %v1802
      %v1937 = vsel %vm1857, %v1934, 0
      %v1940 = vsel %vm1887, %v1935, 0
      %1942 = vmatprep.subr.bf16.mxu0 0
      %1943 = vmatpush1.bf16.msra.mxu0 0
      %1944 = vmatprep.subr.bf16.mxu0 0
      %1945 = vmatpush1.bf16.msra.mxu0 0
      %1946 = vmatprep.subr.bf16.mxu0 0
      %1947 = vmatpush1.bf16.msra.mxu0 0
      %1948 = vmatprep.subr.bf16.mxu0 0
      %1949 = vmatpush1.bf16.msra.mxu0 0
      %1950 = vmatprep.subr.bf16.mxu0 0
      %1951 = vmatpush1.bf16.msra.mxu0 0
      %1952 = vmatprep.subr.bf16.mxu0 0
      %1953 = vmatpush1.bf16.msra.mxu0 0
      %1954 = vmatprep.subr.bf16.mxu0 0
      %1955 = vmatpush1.bf16.msra.mxu0 0
      %1956 = vmatprep.subr.bf16.mxu0 0
      %1957 = vmatpush1.bf16.msra.mxu0 %v1940
      %1958 = vmatprep.subr.bf16.mxu0 0
      %1959 = vmatpush2.bf16.msra.mxu0 0
      %1960 = vmatprep.subr.bf16.mxu0 0
      %1961 = vmatpush2.bf16.msra.mxu0 0
      %1962 = vmatprep.subr.bf16.mxu0 0
      %1963 = vmatpush2.bf16.msra.mxu0 0
      %1964 = vmatprep.subr.bf16.mxu0 0
      %1965 = vmatpush2.bf16.msra.mxu0 0
      %1966 = vmatprep.subr.bf16.mxu0 0
      %1967 = vmatpush2.bf16.msra.mxu0 0
      %1968 = vmatprep.subr.bf16.mxu0 0
      %1969 = vmatpush2.bf16.msra.mxu0 0
      %1970 = vmatprep.subr.bf16.mxu0 0
      %1971 = vmatpush2.bf16.msra.mxu0 0
      %1972 = vmatprep.subr.bf16.mxu0 0
      %1973 = vmatpush2.bf16.msra.mxu0 0
      %1974 = vmatprep.mubr.bf16.mxu0 0
      %1975 = vmatmul.mubr.bf16.gmra.mxu0 %v1937
      %v1976 = vpop.f32.mrf.mxu0
      %v1977 = vadd.f32 0.0, %v1976
      %v1978 = vpop.f32.mrf.mxu0
      %v1979 = vpop.f32.mrf.mxu0
      %v1980 = vpop.f32.mrf.mxu0
      %1981 = vdwg.mxu0
      %s1982 = scalar_lea.vmem %s31, 8
      %v1983 = vld [vmem:[%s1982] sm:$0xf]
      %v1984 = vld [vmem:[%s1982 + $0x4] sm:$0xf]
      %v1985 = vpack.c.bf16 %v1977, %v1977
      %v1988 = vunpack.c.l.b16 %v1983
      %v1989 = vunpack.c.l.b16 %v1984
      %v1990 = vpack.c.b16 %v1989, %v1988
      %v1993 = vsel %vm1565, %v1985, 0
      %1995 = vmatprep.subr.bf16.mxu0 0
      %1996 = vmatpush1.bf16.msra.mxu0 0
      %1997 = vmatprep.subr.bf16.mxu0 0
      %1998 = vmatpush1.bf16.msra.mxu0 0
      %1999 = vmatprep.subr.bf16.mxu0 0
      %2000 = vmatpush1.bf16.msra.mxu0 0
      %2001 = vmatprep.subr.bf16.mxu0 0
      %2002 = vmatpush1.bf16.msra.mxu0 0
      %2003 = vmatprep.subr.bf16.mxu0 0
      %2004 = vmatpush1.bf16.msra.mxu0 0
      %2005 = vmatprep.subr.bf16.mxu0 0
      %2006 = vmatpush1.bf16.msra.mxu0 0
      %2007 = vmatprep.subr.bf16.mxu0 0
      %2008 = vmatpush1.bf16.msra.mxu0 0
      %2009 = vmatprep.subr.bf16.mxu0 0
      %2010 = vmatpush1.bf16.msra.mxu0 %v1990
      %2011 = vmatprep.subr.bf16.mxu0 0
      %2012 = vmatpush2.bf16.msra.mxu0 0
      %2013 = vmatprep.subr.bf16.mxu0 0
      %2014 = vmatpush2.bf16.msra.mxu0 0
      %2015 = vmatprep.subr.bf16.mxu0 0
      %2016 = vmatpush2.bf16.msra.mxu0 0
      %2017 = vmatprep.subr.bf16.mxu0 0
      %2018 = vmatpush2.bf16.msra.mxu0 0
      %2019 = vmatprep.subr.bf16.mxu0 0
      %2020 = vmatpush2.bf16.msra.mxu0 0
      %2021 = vmatprep.subr.bf16.mxu0 0
      %2022 = vmatpush2.bf16.msra.mxu0 0
      %2023 = vmatprep.subr.bf16.mxu0 0
      %2024 = vmatpush2.bf16.msra.mxu0 0
      %2025 = vmatprep.subr.bf16.mxu0 0
      %2026 = vmatpush2.bf16.msra.mxu0 0
      %2027 = vmatprep.mubr.bf16.mxu0 0
      %2028 = vmatmul.mubr.bf16.gmra.mxu0 %v1993
      %v2029 = vpop.f32.mrf.mxu0
      %v2030 = vadd.f32 0.0, %v2029
      %v2031 = vpop.f32.mrf.mxu0
      %v2032 = vpop.f32.mrf.mxu0
      %v2033 = vpop.f32.mrf.mxu0
      %2034 = vdwg.mxu0
      %v2037 = vunpack.c.l.b16 %v1931
      %v2038 = vunpack.c.l.b16 %v1932
      %v2039 = vpack.c.b16 %v2038, %v2037
      %v2042 = vsel %vm1565, %v1933, 0
      %2044 = vmatprep.subr.bf16.mxu0 0
      %2045 = vmatpush1.bf16.msra.mxu0 0
      %2046 = vmatprep.subr.bf16.mxu0 0
      %2047 = vmatpush1.bf16.msra.mxu0 0
      %2048 = vmatprep.subr.bf16.mxu0 0
      %2049 = vmatpush1.bf16.msra.mxu0 0
      %2050 = vmatprep.subr.bf16.mxu0 0
      %2051 = vmatpush1.bf16.msra.mxu0 0
      %2052 = vmatprep.subr.bf16.mxu0 0
      %2053 = vmatpush1.bf16.msra.mxu0 0
      %2054 = vmatprep.subr.bf16.mxu0 0
      %2055 = vmatpush1.bf16.msra.mxu0 0
      %2056 = vmatprep.subr.bf16.mxu0 0
      %2057 = vmatpush1.bf16.msra.mxu0 0
      %2058 = vmatprep.subr.bf16.mxu0 0
      %2059 = vmatpush1.bf16.msra.mxu0 %v2039
      %2060 = vmatprep.subr.bf16.mxu0 0
      %2061 = vmatpush2.bf16.msra.mxu0 0
      %2062 = vmatprep.subr.bf16.mxu0 0
      %2063 = vmatpush2.bf16.msra.mxu0 0
      %2064 = vmatprep.subr.bf16.mxu0 0
      %2065 = vmatpush2.bf16.msra.mxu0 0
      %2066 = vmatprep.subr.bf16.mxu0 0
      %2067 = vmatpush2.bf16.msra.mxu0 0
      %2068 = vmatprep.subr.bf16.mxu0 0
      %2069 = vmatpush2.bf16.msra.mxu0 0
      %2070 = vmatprep.subr.bf16.mxu0 0
      %2071 = vmatpush2.bf16.msra.mxu0 0
      %2072 = vmatprep.subr.bf16.mxu0 0
      %2073 = vmatpush2.bf16.msra.mxu0 0
      %2074 = vmatprep.subr.bf16.mxu0 0
      %2075 = vmatpush2.bf16.msra.mxu0 0
      %2076 = vmatprep.mubr.bf16.mxu0 0
      %2077 = vmatmul.mubr.bf16.gmra.mxu0 %v2042
      %v2078 = vpop.f32.mrf.mxu0
      %v2079 = vadd.f32 %v2030, %v2078
      %v2080 = vpop.f32.mrf.mxu0
      %v2081 = vpop.f32.mrf.mxu0
      %v2082 = vpop.f32.mrf.mxu0
      %2083 = vdwg.mxu0
      %v2084 = vadd.f32 %v1320, %v2079
      %v2085 = vld [vmem:[%s33] sm:$0x1]
      %v2087 = vlaneseq
      %v2088 = vshrl.u32 %v2087, 7
      %v2089 = vsub.s32 0, %v2088
      %v2090 = vrot.slane %v2085, %v2089
      %v2092 = vadd.f32 %v2084, %v2090
      %v2093 = vld [vmem:[%s35] sm:$0x1]
      %v2094 = vld [vmem:[%s37] sm:$0x1]
      %v2095 = vsel %vm1341, %v2092, 0.0
      %2096 = vadd.xlane.f32.xlu0 %v2095
      %v2097 = vpop.xlane.xlu0 %2096
      %v2098 = vmul.f32 %v2097, %v1345
      %v2099 = vsub.f32 %v2092, %v2098
      %v2100 = vmul.f32 %v2099, %v2099
      %v2101 = vsel %vm1341, %v2100, 0.0
      %2102 = vadd.xlane.f32.xlu0 %v2101
      %v2103 = vpop.xlane.xlu0 %2102
      %v2104 = vmul.f32 %v2103, %v1345
      %v2105 = vadd.f32 %v2104, 1e-05
      %v2106 = vrsqrt.pop %v2105
      %v2107 = vmul.f32 %v2099, %v2106
      %v2109 = vlaneseq
      %v2110 = vshrl.u32 %v2109, 7
      %v2111 = vsub.s32 0, %v2110
      %v2112 = vrot.slane %v2093, %v2111
      %v2114 = vmul.f32 %v2107, %v2112
      %v2116 = vlaneseq
      %v2117 = vshrl.u32 %v2116, 7
      %v2118 = vsub.s32 0, %v2117
      %v2119 = vrot.slane %v2094, %v2118
      %v2121 = vadd.f32 %v2114, %v2119
      %v2122 = vld [vmem:[%s39] sm:$0xf]
      %v2123 = vld [vmem:[%s39 + $0x4] sm:$0xf]
      %v2124 = vld [vmem:[%s39 + $0x8] sm:$0xf]
      %v2125 = vld [vmem:[%s39 + $0xc] sm:$0xf]
      %v2126 = vpack.c.bf16 %v2121, %v2121
      %v2127 = vld [vmem:[%s41] sm:$0x1]
      %v2129 = vlaneseq
      %v2130 = vshrl.u32 %v2129, 7
      %v2131 = vsub.s32 0, %v2130
      %v2132 = vrot.slane %v2127, %v2131
      %v2138 = vunpack.c.l.b16 %v2122
      %v2139 = vunpack.c.l.b16 %v2123
      %v2140 = vunpack.c.l.b16 %v2124
      %v2141 = vunpack.c.l.b16 %v2125
      %v2142 = vpack.c.b16 %v2139, %v2138
      %v2143 = vpack.c.b16 %v2141, %v2140
      %v2147 = vsel %vm1341, %v2126, 0
      %2149 = vmatprep.subr.bf16.mxu0 0
      %2150 = vmatpush1.bf16.msra.mxu0 0
      %2151 = vmatprep.subr.bf16.mxu0 0
      %2152 = vmatpush1.bf16.msra.mxu0 0
      %2153 = vmatprep.subr.bf16.mxu0 0
      %2154 = vmatpush1.bf16.msra.mxu0 0
      %2155 = vmatprep.subr.bf16.mxu0 0
      %2156 = vmatpush1.bf16.msra.mxu0 0
      %2157 = vmatprep.subr.bf16.mxu0 0
      %2158 = vmatpush1.bf16.msra.mxu0 0
      %2159 = vmatprep.subr.bf16.mxu0 0
      %2160 = vmatpush1.bf16.msra.mxu0 0
      %2161 = vmatprep.subr.bf16.mxu0 0
      %2162 = vmatpush1.bf16.msra.mxu0 %v2143
      %2163 = vmatprep.subr.bf16.mxu0 0
      %2164 = vmatpush1.bf16.msra.mxu0 %v2142
      %2165 = vmatprep.subr.bf16.mxu0 0
      %2166 = vmatpush2.bf16.msra.mxu0 0
      %2167 = vmatprep.subr.bf16.mxu0 0
      %2168 = vmatpush2.bf16.msra.mxu0 0
      %2169 = vmatprep.subr.bf16.mxu0 0
      %2170 = vmatpush2.bf16.msra.mxu0 0
      %2171 = vmatprep.subr.bf16.mxu0 0
      %2172 = vmatpush2.bf16.msra.mxu0 0
      %2173 = vmatprep.subr.bf16.mxu0 0
      %2174 = vmatpush2.bf16.msra.mxu0 0
      %2175 = vmatprep.subr.bf16.mxu0 0
      %2176 = vmatpush2.bf16.msra.mxu0 0
      %2177 = vmatprep.subr.bf16.mxu0 0
      %2178 = vmatpush2.bf16.msra.mxu0 0
      %2179 = vmatprep.subr.bf16.mxu0 0
      %2180 = vmatpush2.bf16.msra.mxu0 0
      %2181 = vmatprep.mubr.bf16.mxu0 0
      %2182 = vmatmul.mubr.bf16.gmra.mxu0 %v2147
      %v2183 = vpop.f32.mrf.mxu0
      %v2184 = vadd.f32 %v2132, %v2183
      %v2185 = vpop.f32.mrf.mxu0
      %v2186 = vpop.f32.mrf.mxu0
      %v2187 = vpop.f32.mrf.mxu0
      %2188 = vdwg.mxu0
      %v2189 = vmul.f32 %v2184, 0.5
      %v2190 = vmul.f32 %v2184, 0.044715
      %v2191 = vmul.f32 %v2190, %v2184
      %v2192 = vmul.f32 %v2191, %v2184
      %v2193 = vadd.f32 %v2184, %v2192
      %v2194 = vmul.f32 %v2193, 0.7978846
      %v2195 = vtanh.pop %v2194
      %v2196 = vadd.f32 %v2195, 1.0
      %v2197 = vmul.f32 %v2189, %v2196
      %v2198 = vld [vmem:[%s43] sm:$0xf]
      %v2199 = vld [vmem:[%s43 + $0x4] sm:$0xf]
      %v2200 = vld [vmem:[%s43 + $0x8] sm:$0xf]
      %v2201 = vld [vmem:[%s43 + $0xc] sm:$0xf]
      %v2202 = vld [vmem:[%s43 + $0x10] sm:$0xf]
      %v2203 = vld [vmem:[%s43 + $0x14] sm:$0xf]
      %v2204 = vld [vmem:[%s43 + $0x18] sm:$0xf]
      %v2205 = vld [vmem:[%s43 + $0x1c] sm:$0xf]
      %v2206 = vld [vmem:[%s43 + $0x20] sm:$0xf]
      %v2207 = vld [vmem:[%s43 + $0x24] sm:$0xf]
      %v2208 = vld [vmem:[%s43 + $0x28] sm:$0xf]
      %v2209 = vld [vmem:[%s43 + $0x2c] sm:$0xf]
      %v2210 = vld [vmem:[%s43 + $0x30] sm:$0xf]
      %v2211 = vld [vmem:[%s43 + $0x34] sm:$0xf]
      %v2212 = vld [vmem:[%s43 + $0x38] sm:$0xf]
      %v2213 = vld [vmem:[%s43 + $0x3c] sm:$0xf]
      %v2214 = vpack.c.bf16 %v2197, %v2197
      %v2231 = vunpack.c.l.b16 %v2198
      %v2232 = vunpack.c.l.b16 %v2199
      %v2233 = vunpack.c.l.b16 %v2200
      %v2234 = vunpack.c.l.b16 %v2201
      %v2235 = vunpack.c.l.b16 %v2202
      %v2236 = vunpack.c.l.b16 %v2203
      %v2237 = vunpack.c.l.b16 %v2204
      %v2238 = vunpack.c.l.b16 %v2205
      %v2239 = vunpack.c.l.b16 %v2206
      %v2240 = vunpack.c.l.b16 %v2207
      %v2241 = vunpack.c.l.b16 %v2208
      %v2242 = vunpack.c.l.b16 %v2209
      %v2243 = vunpack.c.l.b16 %v2210
      %v2244 = vunpack.c.l.b16 %v2211
      %v2245 = vunpack.c.l.b16 %v2212
      %v2246 = vunpack.c.l.b16 %v2213
      %v2247 = vpack.c.b16 %v2232, %v2231
      %v2248 = vpack.c.b16 %v2234, %v2233
      %v2249 = vpack.c.b16 %v2236, %v2235
      %v2250 = vpack.c.b16 %v2238, %v2237
      %v2251 = vpack.c.b16 %v2240, %v2239
      %v2252 = vpack.c.b16 %v2242, %v2241
      %v2253 = vpack.c.b16 %v2244, %v2243
      %v2254 = vpack.c.b16 %v2246, %v2245
      %2263 = vmatprep.subr.bf16.mxu0 0
      %2264 = vmatpush1.bf16.msra.mxu0 %v2254
      %2265 = vmatprep.subr.bf16.mxu0 0
      %2266 = vmatpush1.bf16.msra.mxu0 %v2253
      %2267 = vmatprep.subr.bf16.mxu0 0
      %2268 = vmatpush1.bf16.msra.mxu0 %v2252
      %2269 = vmatprep.subr.bf16.mxu0 0
      %2270 = vmatpush1.bf16.msra.mxu0 %v2251
      %2271 = vmatprep.subr.bf16.mxu0 0
      %2272 = vmatpush1.bf16.msra.mxu0 %v2250
      %2273 = vmatprep.subr.bf16.mxu0 0
      %2274 = vmatpush1.bf16.msra.mxu0 %v2249
      %2275 = vmatprep.subr.bf16.mxu0 0
      %2276 = vmatpush1.bf16.msra.mxu0 %v2248
      %2277 = vmatprep.subr.bf16.mxu0 0
      %2278 = vmatpush1.bf16.msra.mxu0 %v2247
      %2279 = vmatprep.subr.bf16.mxu0 0
      %2280 = vmatpush2.bf16.msra.mxu0 0
      %2281 = vmatprep.subr.bf16.mxu0 0
      %2282 = vmatpush2.bf16.msra.mxu0 0
      %2283 = vmatprep.subr.bf16.mxu0 0
      %2284 = vmatpush2.bf16.msra.mxu0 0
      %2285 = vmatprep.subr.bf16.mxu0 0
      %2286 = vmatpush2.bf16.msra.mxu0 0
      %2287 = vmatprep.subr.bf16.mxu0 0
      %2288 = vmatpush2.bf16.msra.mxu0 0
      %2289 = vmatprep.subr.bf16.mxu0 0
      %2290 = vmatpush2.bf16.msra.mxu0 0
      %2291 = vmatprep.subr.bf16.mxu0 0
      %2292 = vmatpush2.bf16.msra.mxu0 0
      %2293 = vmatprep.subr.bf16.mxu0 0
      %2294 = vmatpush2.bf16.msra.mxu0 0
      %2295 = vmatprep.mubr.bf16.mxu0 0
      %2296 = vmatmul.mubr.bf16.gmra.mxu0 %v2214
      %v2297 = vpop.f32.mrf.mxu0
      %v2298 = vadd.f32 0.0, %v2297
      %v2299 = vpop.f32.mrf.mxu0
      %v2300 = vpop.f32.mrf.mxu0
      %v2301 = vpop.f32.mrf.mxu0
      %2302 = vdwg.mxu0
      %v2303 = vadd.f32 %v2092, %v2298
      %v2304 = vld [vmem:[%s45] sm:$0x1]
      %v2306 = vlaneseq
      %v2307 = vshrl.u32 %v2306, 7
      %v2308 = vsub.s32 0, %v2307
      %v2309 = vrot.slane %v2304, %v2308
      %v2311 = vadd.f32 %v2303, %v2309
      %v2312 = vld [vmem:[%s47] sm:$0x1]
      %v2313 = vld [vmem:[%s49] sm:$0x1]
      %v2314 = vsel %vm1341, %v2311, 0.0
      %2315 = vadd.xlane.f32.xlu0 %v2314
      %v2316 = vpop.xlane.xlu0 %2315
      %v2317 = vmul.f32 %v2316, %v1345
      %v2318 = vsub.f32 %v2311, %v2317
      %v2319 = vmul.f32 %v2318, %v2318
      %v2320 = vsel %vm1341, %v2319, 0.0
      %2321 = vadd.xlane.f32.xlu0 %v2320
      %v2322 = vpop.xlane.xlu0 %2321
      %v2323 = vmul.f32 %v2322, %v1345
      %v2324 = vadd.f32 %v2323, 1e-05
      %v2325 = vrsqrt.pop %v2324
      %v2326 = vmul.f32 %v2318, %v2325
      %v2328 = vlaneseq
      %v2329 = vshrl.u32 %v2328, 7
      %v2330 = vsub.s32 0, %v2329
      %v2331 = vrot.slane %v2312, %v2330
      %v2333 = vmul.f32 %v2326, %v2331
      %v2335 = vlaneseq
      %v2336 = vshrl.u32 %v2335, 7
      %v2337 = vsub.s32 0, %v2336
      %v2338 = vrot.slane %v2313, %v2337
      %v2340 = vadd.f32 %v2333, %v2338
      %v2341 = vpack.c.bf16 %v2340, %v2340
      %v2342 = vld [vmem:[%s51] sm:$0xf]
      %v2343 = vld [vmem:[%s51 + $0x4] sm:$0xf]
      %v2344 = vld [vmem:[%s51 + $0x8] sm:$0xf]
      %v2345 = vld [vmem:[%s51 + $0xc] sm:$0xf]
      %v2346 = vld [vmem:[%s57] sm:$0x1]
      %v2348 = vlaneseq
      %v2349 = vshrl.u32 %v2348, 7
      %v2350 = vsub.s32 0, %v2349
      %v2351 = vrot.slane %v2346, %v2350
      %v2357 = vunpack.c.l.b16 %v2342
      %v2358 = vunpack.c.l.b16 %v2343
      %v2359 = vunpack.c.l.b16 %v2344
      %v2360 = vunpack.c.l.b16 %v2345
      %v2361 = vpack.c.b16 %v2358, %v2357
      %v2362 = vpack.c.b16 %v2360, %v2359
      %v2366 = vsel %vm1341, %v2341, 0
      %2368 = vmatprep.subr.bf16.mxu0 0
      %2369 = vmatpush1.bf16.msra.mxu0 0
      %2370 = vmatprep.subr.bf16.mxu0 0
      %2371 = vmatpush1.bf16.msra.mxu0 0
      %2372 = vmatprep.subr.bf16.mxu0 0
      %2373 = vmatpush1.bf16.msra.mxu0 0
      %2374 = vmatprep.subr.bf16.mxu0 0
      %2375 = vmatpush1.bf16.msra.mxu0 0
      %2376 = vmatprep.subr.bf16.mxu0 0
      %2377 = vmatpush1.bf16.msra.mxu0 0
      %2378 = vmatprep.subr.bf16.mxu0 0
      %2379 = vmatpush1.bf16.msra.mxu0 0
      %2380 = vmatprep.subr.bf16.mxu0 0
      %2381 = vmatpush1.bf16.msra.mxu0 %v2362
      %2382 = vmatprep.subr.bf16.mxu0 0
      %2383 = vmatpush1.bf16.msra.mxu0 %v2361
      %2384 = vmatprep.subr.bf16.mxu0 0
      %2385 = vmatpush2.bf16.msra.mxu0 0
      %2386 = vmatprep.subr.bf16.mxu0 0
      %2387 = vmatpush2.bf16.msra.mxu0 0
      %2388 = vmatprep.subr.bf16.mxu0 0
      %2389 = vmatpush2.bf16.msra.mxu0 0
      %2390 = vmatprep.subr.bf16.mxu0 0
      %2391 = vmatpush2.bf16.msra.mxu0 0
      %2392 = vmatprep.subr.bf16.mxu0 0
      %2393 = vmatpush2.bf16.msra.mxu0 0
      %2394 = vmatprep.subr.bf16.mxu0 0
      %2395 = vmatpush2.bf16.msra.mxu0 0
      %2396 = vmatprep.subr.bf16.mxu0 0
      %2397 = vmatpush2.bf16.msra.mxu0 0
      %2398 = vmatprep.subr.bf16.mxu0 0
      %2399 = vmatpush2.bf16.msra.mxu0 0
      %2400 = vmatprep.mubr.bf16.mxu0 0
      %2401 = vmatmul.mubr.bf16.gmra.mxu0 %v2366
      %v2402 = vpop.f32.mrf.mxu0
      %v2403 = vadd.f32 %v2351, %v2402
      %v2404 = vpop.f32.mrf.mxu0
      %v2405 = vpop.f32.mrf.mxu0
      %v2406 = vpop.f32.mrf.mxu0
      %2407 = vdwg.mxu0
      %v2408 = vld [vmem:[%s53] sm:$0xf]
      %v2409 = vld [vmem:[%s53 + $0x4] sm:$0xf]
      %v2410 = vld [vmem:[%s53 + $0x8] sm:$0xf]
      %v2411 = vld [vmem:[%s53 + $0xc] sm:$0xf]
      %v2412 = vld [vmem:[%s59] sm:$0x1]
      %v2414 = vlaneseq
      %v2415 = vshrl.u32 %v2414, 7
      %v2416 = vsub.s32 0, %v2415
      %v2417 = vrot.slane %v2412, %v2416
      %v2423 = vunpack.c.l.b16 %v2408
      %v2424 = vunpack.c.l.b16 %v2409
      %v2425 = vunpack.c.l.b16 %v2410
      %v2426 = vunpack.c.l.b16 %v2411
      %v2427 = vpack.c.b16 %v2424, %v2423
      %v2428 = vpack.c.b16 %v2426, %v2425
      %2431 = vmatprep.subr.bf16.mxu0 0
      %2432 = vmatpush1.bf16.msra.mxu0 0
      %2433 = vmatprep.subr.bf16.mxu0 0
      %2434 = vmatpush1.bf16.msra.mxu0 0
      %2435 = vmatprep.subr.bf16.mxu0 0
      %2436 = vmatpush1.bf16.msra.mxu0 0
      %2437 = vmatprep.subr.bf16.mxu0 0
      %2438 = vmatpush1.bf16.msra.mxu0 0
      %2439 = vmatprep.subr.bf16.mxu0 0
      %2440 = vmatpush1.bf16.msra.mxu0 0
      %2441 = vmatprep.subr.bf16.mxu0 0
      %2442 = vmatpush1.bf16.msra.mxu0 0
      %2443 = vmatprep.subr.bf16.mxu0 0
      %2444 = vmatpush1.bf16.msra.mxu0 %v2428
      %2445 = vmatprep.subr.bf16.mxu0 0
      %2446 = vmatpush1.bf16.msra.mxu0 %v2427
      %2447 = vmatprep.subr.bf16.mxu0 0
      %2448 = vmatpush2.bf16.msra.mxu0 0
      %2449 = vmatprep.subr.bf16.mxu0 0
      %2450 = vmatpush2.bf16.msra.mxu0 0
      %2451 = vmatprep.subr.bf16.mxu0 0
      %2452 = vmatpush2.bf16.msra.mxu0 0
      %2453 = vmatprep.subr.bf16.mxu0 0
      %2454 = vmatpush2.bf16.msra.mxu0 0
      %2455 = vmatprep.subr.bf16.mxu0 0
      %2456 = vmatpush2.bf16.msra.mxu0 0
      %2457 = vmatprep.subr.bf16.mxu0 0
      %2458 = vmatpush2.bf16.msra.mxu0 0
      %2459 = vmatprep.subr.bf16.mxu0 0
      %2460 = vmatpush2.bf16.msra.mxu0 0
      %2461 = vmatprep.subr.bf16.mxu0 0
      %2462 = vmatpush2.bf16.msra.mxu0 0
      %2463 = vmatprep.mubr.bf16.mxu0 0
      %2464 = vmatmul.mubr.bf16.gmra.mxu0 %v2366
      %v2465 = vpop.f32.mrf.mxu0
      %v2466 = vadd.f32 %v2417, %v2465
      %v2467 = vpop.f32.mrf.mxu0
      %v2468 = vpop.f32.mrf.mxu0
      %v2469 = vpop.f32.mrf.mxu0
      %2470 = vdwg.mxu0
      %v2471 = vld [vmem:[%s55] sm:$0xf]
      %v2472 = vld [vmem:[%s55 + $0x4] sm:$0xf]
      %v2473 = vld [vmem:[%s55 + $0x8] sm:$0xf]
      %v2474 = vld [vmem:[%s55 + $0xc] sm:$0xf]
      %v2475 = vld [vmem:[%s61] sm:$0x1]
      %v2477 = vlaneseq
      %v2478 = vshrl.u32 %v2477, 7
      %v2479 = vsub.s32 0, %v2478
      %v2480 = vrot.slane %v2475, %v2479
      %v2486 = vunpack.c.l.b16 %v2471
      %v2487 = vunpack.c.l.b16 %v2472
      %v2488 = vunpack.c.l.b16 %v2473
      %v2489 = vunpack.c.l.b16 %v2474
      %v2490 = vpack.c.b16 %v2487, %v2486
      %v2491 = vpack.c.b16 %v2489, %v2488
      %2494 = vmatprep.subr.bf16.mxu0 0
      %2495 = vmatpush1.bf16.msra.mxu0 0
      %2496 = vmatprep.subr.bf16.mxu0 0
      %2497 = vmatpush1.bf16.msra.mxu0 0
      %2498 = vmatprep.subr.bf16.mxu0 0
      %2499 = vmatpush1.bf16.msra.mxu0 0
      %2500 = vmatprep.subr.bf16.mxu0 0
      %2501 = vmatpush1.bf16.msra.mxu0 0
      %2502 = vmatprep.subr.bf16.mxu0 0
      %2503 = vmatpush1.bf16.msra.mxu0 0
      %2504 = vmatprep.subr.bf16.mxu0 0
      %2505 = vmatpush1.bf16.msra.mxu0 0
      %2506 = vmatprep.subr.bf16.mxu0 0
      %2507 = vmatpush1.bf16.msra.mxu0 %v2491
      %2508 = vmatprep.subr.bf16.mxu0 0
      %2509 = vmatpush1.bf16.msra.mxu0 %v2490
      %2510 = vmatprep.subr.bf16.mxu0 0
      %2511 = vmatpush2.bf16.msra.mxu0 0
      %2512 = vmatprep.subr.bf16.mxu0 0
      %2513 = vmatpush2.bf16.msra.mxu0 0
      %2514 = vmatprep.subr.bf16.mxu0 0
      %2515 = vmatpush2.bf16.msra.mxu0 0
      %2516 = vmatprep.subr.bf16.mxu0 0
      %2517 = vmatpush2.bf16.msra.mxu0 0
      %2518 = vmatprep.subr.bf16.mxu0 0
      %2519 = vmatpush2.bf16.msra.mxu0 0
      %2520 = vmatprep.subr.bf16.mxu0 0
      %2521 = vmatpush2.bf16.msra.mxu0 0
      %2522 = vmatprep.subr.bf16.mxu0 0
      %2523 = vmatpush2.bf16.msra.mxu0 0
      %2524 = vmatprep.subr.bf16.mxu0 0
      %2525 = vmatpush2.bf16.msra.mxu0 0
      %2526 = vmatprep.mubr.bf16.mxu0 0
      %2527 = vmatmul.mubr.bf16.gmra.mxu0 %v2366
      %v2528 = vpop.f32.mrf.mxu0
      %v2529 = vadd.f32 %v2480, %v2528
      %v2530 = vpop.f32.mrf.mxu0
      %v2531 = vpop.f32.mrf.mxu0
      %v2532 = vpop.f32.mrf.mxu0
      %2533 = vdwg.mxu0
      %v2534 = vpack.c.bf16 %v2403, %v2403
      %v2535 = vpack.c.bf16 %v2466, %v2466
      %v2537 = vsel %vm1565, %v2534, 0
      %v2540 = vsel %vm1565, %v2535, 0
      %2542 = vmatprep.subr.bf16.mxu0 0
      %2543 = vmatpush1.bf16.xpose.msra.mxu0 0
      %2544 = vmatprep.subr.bf16.mxu0 0
      %2545 = vmatpush1.bf16.xpose.msra.mxu0 0
      %2546 = vmatprep.subr.bf16.mxu0 0
      %2547 = vmatpush1.bf16.xpose.msra.mxu0 0
      %2548 = vmatprep.subr.bf16.mxu0 0
      %2549 = vmatpush1.bf16.xpose.msra.mxu0 0
      %2550 = vmatprep.subr.bf16.mxu0 0
      %2551 = vmatpush1.bf16.xpose.msra.mxu0 0
      %2552 = vmatprep.subr.bf16.mxu0 0
      %2553 = vmatpush1.bf16.xpose.msra.mxu0 0
      %2554 = vmatprep.subr.bf16.mxu0 0
      %2555 = vmatpush1.bf16.xpose.msra.mxu0 0
      %2556 = vmatprep.subr.bf16.mxu0 0
      %2557 = vmatpush1.bf16.xpose.msra.mxu0 %v2540
      %2558 = vmatprep.subr.bf16.mxu0 0
      %2559 = vmatpush2.bf16.xpose.msra.mxu0 0
      %2560 = vmatprep.subr.bf16.mxu0 0
      %2561 = vmatpush2.bf16.xpose.msra.mxu0 0
      %2562 = vmatprep.subr.bf16.mxu0 0
      %2563 = vmatpush2.bf16.xpose.msra.mxu0 0
      %2564 = vmatprep.subr.bf16.mxu0 0
      %2565 = vmatpush2.bf16.xpose.msra.mxu0 0
      %2566 = vmatprep.subr.bf16.mxu0 0
      %2567 = vmatpush2.bf16.xpose.msra.mxu0 0
      %2568 = vmatprep.subr.bf16.mxu0 0
      %2569 = vmatpush2.bf16.xpose.msra.mxu0 0
      %2570 = vmatprep.subr.bf16.mxu0 0
      %2571 = vmatpush2.bf16.xpose.msra.mxu0 0
      %2572 = vmatprep.subr.bf16.mxu0 0
      %2573 = vmatpush2.bf16.xpose.msra.mxu0 0
      %2574 = vmatprep.mubr.bf16.mxu0 0
      %2575 = vmatmul.mubr.bf16.gmra.mxu0 %v2537
      %v2576 = vpop.f32.mrf.mxu0
      %v2577 = vadd.f32 0.0, %v2576
      %v2578 = vpop.f32.mrf.mxu0
      %v2579 = vpop.f32.mrf.mxu0
      %v2580 = vpop.f32.mrf.mxu0
      %2581 = vdwg.mxu0
      %s2582 = scalar_lea.vmem %s51, 16
      %v2583 = vld [vmem:[%s2582] sm:$0xf]
      %v2584 = vld [vmem:[%s2582 + $0x4] sm:$0xf]
      %v2585 = vld [vmem:[%s2582 + $0x8] sm:$0xf]
      %v2586 = vld [vmem:[%s2582 + $0xc] sm:$0xf]
      %s2587 = scalar_lea.vmem %s57, 1
      %v2588 = vld [vmem:[%s2587] sm:$0x1]
      %v2590 = vlaneseq
      %v2591 = vshrl.u32 %v2590, 7
      %v2592 = vsub.s32 0, %v2591
      %v2593 = vrot.slane %v2588, %v2592
      %v2599 = vunpack.c.l.b16 %v2583
      %v2600 = vunpack.c.l.b16 %v2584
      %v2601 = vunpack.c.l.b16 %v2585
      %v2602 = vunpack.c.l.b16 %v2586
      %v2603 = vpack.c.b16 %v2600, %v2599
      %v2604 = vpack.c.b16 %v2602, %v2601
      %2607 = vmatprep.subr.bf16.mxu0 0
      %2608 = vmatpush1.bf16.msra.mxu0 0
      %2609 = vmatprep.subr.bf16.mxu0 0
      %2610 = vmatpush1.bf16.msra.mxu0 0
      %2611 = vmatprep.subr.bf16.mxu0 0
      %2612 = vmatpush1.bf16.msra.mxu0 0
      %2613 = vmatprep.subr.bf16.mxu0 0
      %2614 = vmatpush1.bf16.msra.mxu0 0
      %2615 = vmatprep.subr.bf16.mxu0 0
      %2616 = vmatpush1.bf16.msra.mxu0 0
      %2617 = vmatprep.subr.bf16.mxu0 0
      %2618 = vmatpush1.bf16.msra.mxu0 0
      %2619 = vmatprep.subr.bf16.mxu0 0
      %2620 = vmatpush1.bf16.msra.mxu0 %v2604
      %2621 = vmatprep.subr.bf16.mxu0 0
      %2622 = vmatpush1.bf16.msra.mxu0 %v2603
      %2623 = vmatprep.subr.bf16.mxu0 0
      %2624 = vmatpush2.bf16.msra.mxu0 0
      %2625 = vmatprep.subr.bf16.mxu0 0
      %2626 = vmatpush2.bf16.msra.mxu0 0
      %2627 = vmatprep.subr.bf16.mxu0 0
      %2628 = vmatpush2.bf16.msra.mxu0 0
      %2629 = vmatprep.subr.bf16.mxu0 0
      %2630 = vmatpush2.bf16.msra.mxu0 0
      %2631 = vmatprep.subr.bf16.mxu0 0
      %2632 = vmatpush2.bf16.msra.mxu0 0
      %2633 = vmatprep.subr.bf16.mxu0 0
      %2634 = vmatpush2.bf16.msra.mxu0 0
      %2635 = vmatprep.subr.bf16.mxu0 0
      %2636 = vmatpush2.bf16.msra.mxu0 0
      %2637 = vmatprep.subr.bf16.mxu0 0
      %2638 = vmatpush2.bf16.msra.mxu0 0
      %2639 = vmatprep.mubr.bf16.mxu0 0
      %2640 = vmatmul.mubr.bf16.gmra.mxu0 %v2366
      %v2641 = vpop.f32.mrf.mxu0
      %v2642 = vadd.f32 %v2593, %v2641
      %v2643 = vpop.f32.mrf.mxu0
      %v2644 = vpop.f32.mrf.mxu0
      %v2645 = vpop.f32.mrf.mxu0
      %2646 = vdwg.mxu0
      %s2647 = scalar_lea.vmem %s53, 16
      %v2648 = vld [vmem:[%s2647] sm:$0xf]
      %v2649 = vld [vmem:[%s2647 + $0x4] sm:$0xf]
      %v2650 = vld [vmem:[%s2647 + $0x8] sm:$0xf]
      %v2651 = vld [vmem:[%s2647 + $0xc] sm:$0xf]
      %s2652 = scalar_lea.vmem %s59, 1
      %v2653 = vld [vmem:[%s2652] sm:$0x1]
      %v2655 = vlaneseq
      %v2656 = vshrl.u32 %v2655, 7
      %v2657 = vsub.s32 0, %v2656
      %v2658 = vrot.slane %v2653, %v2657
      %v2664 = vunpack.c.l.b16 %v2648
      %v2665 = vunpack.c.l.b16 %v2649
      %v2666 = vunpack.c.l.b16 %v2650
      %v2667 = vunpack.c.l.b16 %v2651
      %v2668 = vpack.c.b16 %v2665, %v2664
      %v2669 = vpack.c.b16 %v2667, %v2666
      %2672 = vmatprep.subr.bf16.mxu0 0
      %2673 = vmatpush1.bf16.msra.mxu0 0
      %2674 = vmatprep.subr.bf16.mxu0 0
      %2675 = vmatpush1.bf16.msra.mxu0 0
      %2676 = vmatprep.subr.bf16.mxu0 0
      %2677 = vmatpush1.bf16.msra.mxu0 0
      %2678 = vmatprep.subr.bf16.mxu0 0
      %2679 = vmatpush1.bf16.msra.mxu0 0
      %2680 = vmatprep.subr.bf16.mxu0 0
      %2681 = vmatpush1.bf16.msra.mxu0 0
      %2682 = vmatprep.subr.bf16.mxu0 0
      %2683 = vmatpush1.bf16.msra.mxu0 0
      %2684 = vmatprep.subr.bf16.mxu0 0
      %2685 = vmatpush1.bf16.msra.mxu0 %v2669
      %2686 = vmatprep.subr.bf16.mxu0 0
      %2687 = vmatpush1.bf16.msra.mxu0 %v2668
      %2688 = vmatprep.subr.bf16.mxu0 0
      %2689 = vmatpush2.bf16.msra.mxu0 0
      %2690 = vmatprep.subr.bf16.mxu0 0
      %2691 = vmatpush2.bf16.msra.mxu0 0
      %2692 = vmatprep.subr.bf16.mxu0 0
      %2693 = vmatpush2.bf16.msra.mxu0 0
      %2694 = vmatprep.subr.bf16.mxu0 0
      %2695 = vmatpush2.bf16.msra.mxu0 0
      %2696 = vmatprep.subr.bf16.mxu0 0
      %2697 = vmatpush2.bf16.msra.mxu0 0
      %2698 = vmatprep.subr.bf16.mxu0 0
      %2699 = vmatpush2.bf16.msra.mxu0 0
      %2700 = vmatprep.subr.bf16.mxu0 0
      %2701 = vmatpush2.bf16.msra.mxu0 0
      %2702 = vmatprep.subr.bf16.mxu0 0
      %2703 = vmatpush2.bf16.msra.mxu0 0
      %2704 = vmatprep.mubr.bf16.mxu0 0
      %2705 = vmatmul.mubr.bf16.gmra.mxu0 %v2366
      %v2706 = vpop.f32.mrf.mxu0
      %v2707 = vadd.f32 %v2658, %v2706
      %v2708 = vpop.f32.mrf.mxu0
      %v2709 = vpop.f32.mrf.mxu0
      %v2710 = vpop.f32.mrf.mxu0
      %2711 = vdwg.mxu0
      %s2712 = scalar_lea.vmem %s55, 16
      %v2713 = vld [vmem:[%s2712] sm:$0xf]
      %v2714 = vld [vmem:[%s2712 + $0x4] sm:$0xf]
      %v2715 = vld [vmem:[%s2712 + $0x8] sm:$0xf]
      %v2716 = vld [vmem:[%s2712 + $0xc] sm:$0xf]
      %s2717 = scalar_lea.vmem %s61, 1
      %v2718 = vld [vmem:[%s2717] sm:$0x1]
      %v2720 = vlaneseq
      %v2721 = vshrl.u32 %v2720, 7
      %v2722 = vsub.s32 0, %v2721
      %v2723 = vrot.slane %v2718, %v2722
      %v2729 = vunpack.c.l.b16 %v2713
      %v2730 = vunpack.c.l.b16 %v2714
      %v2731 = vunpack.c.l.b16 %v2715
      %v2732 = vunpack.c.l.b16 %v2716
      %v2733 = vpack.c.b16 %v2730, %v2729
      %v2734 = vpack.c.b16 %v2732, %v2731
      %2737 = vmatprep.subr.bf16.mxu0 0
      %2738 = vmatpush1.bf16.msra.mxu0 0
      %2739 = vmatprep.subr.bf16.mxu0 0
      %2740 = vmatpush1.bf16.msra.mxu0 0
      %2741 = vmatprep.subr.bf16.mxu0 0
      %2742 = vmatpush1.bf16.msra.mxu0 0
      %2743 = vmatprep.subr.bf16.mxu0 0
      %2744 = vmatpush1.bf16.msra.mxu0 0
      %2745 = vmatprep.subr.bf16.mxu0 0
      %2746 = vmatpush1.bf16.msra.mxu0 0
      %2747 = vmatprep.subr.bf16.mxu0 0
      %2748 = vmatpush1.bf16.msra.mxu0 0
      %2749 = vmatprep.subr.bf16.mxu0 0
      %2750 = vmatpush1.bf16.msra.mxu0 %v2734
      %2751 = vmatprep.subr.bf16.mxu0 0
      %2752 = vmatpush1.bf16.msra.mxu0 %v2733
      %2753 = vmatprep.subr.bf16.mxu0 0
      %2754 = vmatpush2.bf16.msra.mxu0 0
      %2755 = vmatprep.subr.bf16.mxu0 0
      %2756 = vmatpush2.bf16.msra.mxu0 0
      %2757 = vmatprep.subr.bf16.mxu0 0
      %2758 = vmatpush2.bf16.msra.mxu0 0
      %2759 = vmatprep.subr.bf16.mxu0 0
      %2760 = vmatpush2.bf16.msra.mxu0 0
      %2761 = vmatprep.subr.bf16.mxu0 0
      %2762 = vmatpush2.bf16.msra.mxu0 0
      %2763 = vmatprep.subr.bf16.mxu0 0
      %2764 = vmatpush2.bf16.msra.mxu0 0
      %2765 = vmatprep.subr.bf16.mxu0 0
      %2766 = vmatpush2.bf16.msra.mxu0 0
      %2767 = vmatprep.subr.bf16.mxu0 0
      %2768 = vmatpush2.bf16.msra.mxu0 0
      %2769 = vmatprep.mubr.bf16.mxu0 0
      %2770 = vmatmul.mubr.bf16.gmra.mxu0 %v2366
      %v2771 = vpop.f32.mrf.mxu0
      %v2772 = vadd.f32 %v2723, %v2771
      %v2773 = vpop.f32.mrf.mxu0
      %v2774 = vpop.f32.mrf.mxu0
      %v2775 = vpop.f32.mrf.mxu0
      %2776 = vdwg.mxu0
      %v2777 = vpack.c.bf16 %v2642, %v2642
      %v2778 = vpack.c.bf16 %v2707, %v2707
      %v2780 = vsel %vm1565, %v2777, 0
      %v2783 = vsel %vm1565, %v2778, 0
      %2785 = vmatprep.subr.bf16.mxu0 0
      %2786 = vmatpush1.bf16.xpose.msra.mxu0 0
      %2787 = vmatprep.subr.bf16.mxu0 0
      %2788 = vmatpush1.bf16.xpose.msra.mxu0 0
      %2789 = vmatprep.subr.bf16.mxu0 0
      %2790 = vmatpush1.bf16.xpose.msra.mxu0 0
      %2791 = vmatprep.subr.bf16.mxu0 0
      %2792 = vmatpush1.bf16.xpose.msra.mxu0 0
      %2793 = vmatprep.subr.bf16.mxu0 0
      %2794 = vmatpush1.bf16.xpose.msra.mxu0 0
      %2795 = vmatprep.subr.bf16.mxu0 0
      %2796 = vmatpush1.bf16.xpose.msra.mxu0 0
      %2797 = vmatprep.subr.bf16.mxu0 0
      %2798 = vmatpush1.bf16.xpose.msra.mxu0 0
      %2799 = vmatprep.subr.bf16.mxu0 0
      %2800 = vmatpush1.bf16.xpose.msra.mxu0 %v2783
      %2801 = vmatprep.subr.bf16.mxu0 0
      %2802 = vmatpush2.bf16.xpose.msra.mxu0 0
      %2803 = vmatprep.subr.bf16.mxu0 0
      %2804 = vmatpush2.bf16.xpose.msra.mxu0 0
      %2805 = vmatprep.subr.bf16.mxu0 0
      %2806 = vmatpush2.bf16.xpose.msra.mxu0 0
      %2807 = vmatprep.subr.bf16.mxu0 0
      %2808 = vmatpush2.bf16.xpose.msra.mxu0 0
      %2809 = vmatprep.subr.bf16.mxu0 0
      %2810 = vmatpush2.bf16.xpose.msra.mxu0 0
      %2811 = vmatprep.subr.bf16.mxu0 0
      %2812 = vmatpush2.bf16.xpose.msra.mxu0 0
      %2813 = vmatprep.subr.bf16.mxu0 0
      %2814 = vmatpush2.bf16.xpose.msra.mxu0 0
      %2815 = vmatprep.subr.bf16.mxu0 0
      %2816 = vmatpush2.bf16.xpose.msra.mxu0 0
      %2817 = vmatprep.mubr.bf16.mxu0 0
      %2818 = vmatmul.mubr.bf16.gmra.mxu0 %v2780
      %v2819 = vpop.f32.mrf.mxu0
      %v2820 = vadd.f32 0.0, %v2819
      %v2821 = vpop.f32.mrf.mxu0
      %v2822 = vpop.f32.mrf.mxu0
      %v2823 = vpop.f32.mrf.mxu0
      %2824 = vdwg.mxu0
      %v2825 = vadd.f32 %v2577, %v1338
      %v2826 = vadd.f32 %v2820, %v1338
      %v2827 = vsel %vm1857, %v2825, -inf
      %2828 = vmax.xlane.f32.xlu0 %v2827
      %v2829 = vpop.xlane.xlu0 %2828
      %v2830 = vsel %vm1857, %v2826, -inf
      %2831 = vmax.xlane.f32.xlu0 %v2830
      %v2832 = vpop.xlane.xlu0 %2831
      %v2833 = vsub.f32 %v2825, %v2829
      %v2834 = vsub.f32 %v2826, %v2832
      %v2835 = vmul.f32 %v2833, 1.442695
      %v2836 = vpow.pop %v2835
      %v2837 = vmul.f32 %v2834, 1.442695
      %v2838 = vpow.pop %v2837
      %v2839 = vsel %vm1857, %v2836, 0.0
      %2840 = vadd.xlane.f32.xlu0 %v2839
      %v2841 = vpop.xlane.xlu0 %2840
      %v2842 = vsel %vm1857, %v2838, 0.0
      %2843 = vadd.xlane.f32.xlu0 %v2842
      %v2844 = vpop.xlane.xlu0 %2843
      %v2845 = vrcp.pop %v2841
      %v2846 = vmul.f32 1.0, %v2845
      %v2847 = vrcp.pop %v2844
      %v2848 = vmul.f32 1.0, %v2847
      %v2849 = vmul.f32 %v2836, %v2846
      %v2850 = vmul.f32 %v2838, %v2848
      %v2851 = vpack.c.bf16 %v2849, %v2849
      %v2852 = vpack.c.bf16 %v2529, %v2529
      %v2854 = vsel %vm1857, %v2851, 0
      %v2857 = vsel %vm1887, %v2852, 0
      %2859 = vmatprep.subr.bf16.mxu0 0
      %2860 = vmatpush1.bf16.msra.mxu0 0
      %2861 = vmatprep.subr.bf16.mxu0 0
      %2862 = vmatpush1.bf16.msra.mxu0 0
      %2863 = vmatprep.subr.bf16.mxu0 0
      %2864 = vmatpush1.bf16.msra.mxu0 0
      %2865 = vmatprep.subr.bf16.mxu0 0
      %2866 = vmatpush1.bf16.msra.mxu0 0
      %2867 = vmatprep.subr.bf16.mxu0 0
      %2868 = vmatpush1.bf16.msra.mxu0 0
      %2869 = vmatprep.subr.bf16.mxu0 0
      %2870 = vmatpush1.bf16.msra.mxu0 0
      %2871 = vmatprep.subr.bf16.mxu0 0
      %2872 = vmatpush1.bf16.msra.mxu0 0
      %2873 = vmatprep.subr.bf16.mxu0 0
      %2874 = vmatpush1.bf16.msra.mxu0 %v2857
      %2875 = vmatprep.subr.bf16.mxu0 0
      %2876 = vmatpush2.bf16.msra.mxu0 0
      %2877 = vmatprep.subr.bf16.mxu0 0
      %2878 = vmatpush2.bf16.msra.mxu0 0
      %2879 = vmatprep.subr.bf16.mxu0 0
      %2880 = vmatpush2.bf16.msra.mxu0 0
      %2881 = vmatprep.subr.bf16.mxu0 0
      %2882 = vmatpush2.bf16.msra.mxu0 0
      %2883 = vmatprep.subr.bf16.mxu0 0
      %2884 = vmatpush2.bf16.msra.mxu0 0
      %2885 = vmatprep.subr.bf16.mxu0 0
      %2886 = vmatpush2.bf16.msra.mxu0 0
      %2887 = vmatprep.subr.bf16.mxu0 0
      %2888 = vmatpush2.bf16.msra.mxu0 0
      %2889 = vmatprep.subr.bf16.mxu0 0
      %2890 = vmatpush2.bf16.msra.mxu0 0
      %2891 = vmatprep.mubr.bf16.mxu0 0
      %2892 = vmatmul.mubr.bf16.gmra.mxu0 %v2854
      %v2893 = vpop.f32.mrf.mxu0
      %v2894 = vadd.f32 0.0, %v2893
      %v2895 = vpop.f32.mrf.mxu0
      %v2896 = vpop.f32.mrf.mxu0
      %v2897 = vpop.f32.mrf.mxu0
      %2898 = vdwg.mxu0
      %v2899 = vld [vmem:[%s63] sm:$0xf]
      %v2900 = vld [vmem:[%s63 + $0x4] sm:$0xf]
      %v2901 = vpack.c.bf16 %v2894, %v2894
      %v2902 = vpack.c.bf16 %v2850, %v2850
      %v2903 = vpack.c.bf16 %v2772, %v2772
      %v2905 = vsel %vm1857, %v2902, 0
      %v2908 = vsel %vm1887, %v2903, 0
      %2910 = vmatprep.subr.bf16.mxu0 0
      %2911 = vmatpush1.bf16.msra.mxu0 0
      %2912 = vmatprep.subr.bf16.mxu0 0
      %2913 = vmatpush1.bf16.msra.mxu0 0
      %2914 = vmatprep.subr.bf16.mxu0 0
      %2915 = vmatpush1.bf16.msra.mxu0 0
      %2916 = vmatprep.subr.bf16.mxu0 0
      %2917 = vmatpush1.bf16.msra.mxu0 0
      %2918 = vmatprep.subr.bf16.mxu0 0
      %2919 = vmatpush1.bf16.msra.mxu0 0
      %2920 = vmatprep.subr.bf16.mxu0 0
      %2921 = vmatpush1.bf16.msra.mxu0 0
      %2922 = vmatprep.subr.bf16.mxu0 0
      %2923 = vmatpush1.bf16.msra.mxu0 0
      %2924 = vmatprep.subr.bf16.mxu0 0
      %2925 = vmatpush1.bf16.msra.mxu0 %v2908
      %2926 = vmatprep.subr.bf16.mxu0 0
      %2927 = vmatpush2.bf16.msra.mxu0 0
      %2928 = vmatprep.subr.bf16.mxu0 0
      %2929 = vmatpush2.bf16.msra.mxu0 0
      %2930 = vmatprep.subr.bf16.mxu0 0
      %2931 = vmatpush2.bf16.msra.mxu0 0
      %2932 = vmatprep.subr.bf16.mxu0 0
      %2933 = vmatpush2.bf16.msra.mxu0 0
      %2934 = vmatprep.subr.bf16.mxu0 0
      %2935 = vmatpush2.bf16.msra.mxu0 0
      %2936 = vmatprep.subr.bf16.mxu0 0
      %2937 = vmatpush2.bf16.msra.mxu0 0
      %2938 = vmatprep.subr.bf16.mxu0 0
      %2939 = vmatpush2.bf16.msra.mxu0 0
      %2940 = vmatprep.subr.bf16.mxu0 0
      %2941 = vmatpush2.bf16.msra.mxu0 0
      %2942 = vmatprep.mubr.bf16.mxu0 0
      %2943 = vmatmul.mubr.bf16.gmra.mxu0 %v2905
      %v2944 = vpop.f32.mrf.mxu0
      %v2945 = vadd.f32 0.0, %v2944
      %v2946 = vpop.f32.mrf.mxu0
      %v2947 = vpop.f32.mrf.mxu0
      %v2948 = vpop.f32.mrf.mxu0
      %2949 = vdwg.mxu0
      %s2950 = scalar_lea.vmem %s63, 8
      %v2951 = vld [vmem:[%s2950] sm:$0xf]
      %v2952 = vld [vmem:[%s2950 + $0x4] sm:$0xf]
      %v2953 = vpack.c.bf16 %v2945, %v2945
      %v2956 = vunpack.c.l.b16 %v2951
      %v2957 = vunpack.c.l.b16 %v2952
      %v2958 = vpack.c.b16 %v2957, %v2956
      %v2961 = vsel %vm1565, %v2953, 0
      %2963 = vmatprep.subr.bf16.mxu0 0
      %2964 = vmatpush1.bf16.msra.mxu0 0
      %2965 = vmatprep.subr.bf16.mxu0 0
      %2966 = vmatpush1.bf16.msra.mxu0 0
      %2967 = vmatprep.subr.bf16.mxu0 0
      %2968 = vmatpush1.bf16.msra.mxu0 0
      %2969 = vmatprep.subr.bf16.mxu0 0
      %2970 = vmatpush1.bf16.msra.mxu0 0
      %2971 = vmatprep.subr.bf16.mxu0 0
      %2972 = vmatpush1.bf16.msra.mxu0 0
      %2973 = vmatprep.subr.bf16.mxu0 0
      %2974 = vmatpush1.bf16.msra.mxu0 0
      %2975 = vmatprep.subr.bf16.mxu0 0
      %2976 = vmatpush1.bf16.msra.mxu0 0
      %2977 = vmatprep.subr.bf16.mxu0 0
      %2978 = vmatpush1.bf16.msra.mxu0 %v2958
      %2979 = vmatprep.subr.bf16.mxu0 0
      %2980 = vmatpush2.bf16.msra.mxu0 0
      %2981 = vmatprep.subr.bf16.mxu0 0
      %2982 = vmatpush2.bf16.msra.mxu0 0
      %2983 = vmatprep.subr.bf16.mxu0 0
      %2984 = vmatpush2.bf16.msra.mxu0 0
      %2985 = vmatprep.subr.bf16.mxu0 0
      %2986 = vmatpush2.bf16.msra.mxu0 0
      %2987 = vmatprep.subr.bf16.mxu0 0
      %2988 = vmatpush2.bf16.msra.mxu0 0
      %2989 = vmatprep.subr.bf16.mxu0 0
      %2990 = vmatpush2.bf16.msra.mxu0 0
      %2991 = vmatprep.subr.bf16.mxu0 0
      %2992 = vmatpush2.bf16.msra.mxu0 0
      %2993 = vmatprep.subr.bf16.mxu0 0
      %2994 = vmatpush2.bf16.msra.mxu0 0
      %2995 = vmatprep.mubr.bf16.mxu0 0
      %2996 = vmatmul.mubr.bf16.gmra.mxu0 %v2961
      %v2997 = vpop.f32.mrf.mxu0
      %v2998 = vadd.f32 0.0, %v2997
      %v2999 = vpop.f32.mrf.mxu0
      %v3000 = vpop.f32.mrf.mxu0
      %v3001 = vpop.f32.mrf.mxu0
      %3002 = vdwg.mxu0
      %v3005 = vunpack.c.l.b16 %v2899
      %v3006 = vunpack.c.l.b16 %v2900
      %v3007 = vpack.c.b16 %v3006, %v3005
      %v3010 = vsel %vm1565, %v2901, 0
      %3012 = vmatprep.subr.bf16.mxu0 0
      %3013 = vmatpush1.bf16.msra.mxu0 0
      %3014 = vmatprep.subr.bf16.mxu0 0
      %3015 = vmatpush1.bf16.msra.mxu0 0
      %3016 = vmatprep.subr.bf16.mxu0 0
      %3017 = vmatpush1.bf16.msra.mxu0 0
      %3018 = vmatprep.subr.bf16.mxu0 0
      %3019 = vmatpush1.bf16.msra.mxu0 0
      %3020 = vmatprep.subr.bf16.mxu0 0
      %3021 = vmatpush1.bf16.msra.mxu0 0
      %3022 = vmatprep.subr.bf16.mxu0 0
      %3023 = vmatpush1.bf16.msra.mxu0 0
      %3024 = vmatprep.subr.bf16.mxu0 0
      %3025 = vmatpush1.bf16.msra.mxu0 0
      %3026 = vmatprep.subr.bf16.mxu0 0
      %3027 = vmatpush1.bf16.msra.mxu0 %v3007
      %3028 = vmatprep.subr.bf16.mxu0 0
      %3029 = vmatpush2.bf16.msra.mxu0 0
      %3030 = vmatprep.subr.bf16.mxu0 0
      %3031 = vmatpush2.bf16.msra.mxu0 0
      %3032 = vmatprep.subr.bf16.mxu0 0
      %3033 = vmatpush2.bf16.msra.mxu0 0
      %3034 = vmatprep.subr.bf16.mxu0 0
      %3035 = vmatpush2.bf16.msra.mxu0 0
      %3036 = vmatprep.subr.bf16.mxu0 0
      %3037 = vmatpush2.bf16.msra.mxu0 0
      %3038 = vmatprep.subr.bf16.mxu0 0
      %3039 = vmatpush2.bf16.msra.mxu0 0
      %3040 = vmatprep.subr.bf16.mxu0 0
      %3041 = vmatpush2.bf16.msra.mxu0 0
      %3042 = vmatprep.subr.bf16.mxu0 0
      %3043 = vmatpush2.bf16.msra.mxu0 0
      %3044 = vmatprep.mubr.bf16.mxu0 0
      %3045 = vmatmul.mubr.bf16.gmra.mxu0 %v3010
      %v3046 = vpop.f32.mrf.mxu0
      %v3047 = vadd.f32 %v2998, %v3046
      %v3048 = vpop.f32.mrf.mxu0
      %v3049 = vpop.f32.mrf.mxu0
      %v3050 = vpop.f32.mrf.mxu0
      %3051 = vdwg.mxu0
      %v3052 = vadd.f32 %v2311, %v3047
      %v3053 = vld [vmem:[%s65] sm:$0x1]
      %v3055 = vlaneseq
      %v3056 = vshrl.u32 %v3055, 7
      %v3057 = vsub.s32 0, %v3056
      %v3058 = vrot.slane %v3053, %v3057
      %v3060 = vadd.f32 %v3052, %v3058
      %v3061 = vld [vmem:[%s67] sm:$0x1]
      %v3062 = vld [vmem:[%s69] sm:$0x1]
      %v3063 = vsel %vm1341, %v3060, 0.0
      %3064 = vadd.xlane.f32.xlu0 %v3063
      %v3065 = vpop.xlane.xlu0 %3064
      %v3066 = vmul.f32 %v3065, %v1345
      %v3067 = vsub.f32 %v3060, %v3066
      %v3068 = vmul.f32 %v3067, %v3067
      %v3069 = vsel %vm1341, %v3068, 0.0
      %3070 = vadd.xlane.f32.xlu0 %v3069
      %v3071 = vpop.xlane.xlu0 %3070
      %v3072 = vmul.f32 %v3071, %v1345
      %v3073 = vadd.f32 %v3072, 1e-05
      %v3074 = vrsqrt.pop %v3073
      %v3075 = vmul.f32 %v3067, %v3074
      %v3077 = vlaneseq
      %v3078 = vshrl.u32 %v3077, 7
      %v3079 = vsub.s32 0, %v3078
      %v3080 = vrot.slane %v3061, %v3079
      %v3082 = vmul.f32 %v3075, %v3080
      %v3084 = vlaneseq
      %v3085 = vshrl.u32 %v3084, 7
      %v3086 = vsub.s32 0, %v3085
      %v3087 = vrot.slane %v3062, %v3086
      %v3089 = vadd.f32 %v3082, %v3087
      %v3090 = vld [vmem:[%s71] sm:$0xf]
      %v3091 = vld [vmem:[%s71 + $0x4] sm:$0xf]
      %v3092 = vld [vmem:[%s71 + $0x8] sm:$0xf]
      %v3093 = vld [vmem:[%s71 + $0xc] sm:$0xf]
      %v3094 = vpack.c.bf16 %v3089, %v3089
      %v3095 = vld [vmem:[%s73] sm:$0x1]
      %v3097 = vlaneseq
      %v3098 = vshrl.u32 %v3097, 7
      %v3099 = vsub.s32 0, %v3098
      %v3100 = vrot.slane %v3095, %v3099
      %v3106 = vunpack.c.l.b16 %v3090
      %v3107 = vunpack.c.l.b16 %v3091
      %v3108 = vunpack.c.l.b16 %v3092
      %v3109 = vunpack.c.l.b16 %v3093
      %v3110 = vpack.c.b16 %v3107, %v3106
      %v3111 = vpack.c.b16 %v3109, %v3108
      %v3115 = vsel %vm1341, %v3094, 0
      %3117 = vmatprep.subr.bf16.mxu0 0
      %3118 = vmatpush1.bf16.msra.mxu0 0
      %3119 = vmatprep.subr.bf16.mxu0 0
      %3120 = vmatpush1.bf16.msra.mxu0 0
      %3121 = vmatprep.subr.bf16.mxu0 0
      %3122 = vmatpush1.bf16.msra.mxu0 0
      %3123 = vmatprep.subr.bf16.mxu0 0
      %3124 = vmatpush1.bf16.msra.mxu0 0
      %3125 = vmatprep.subr.bf16.mxu0 0
      %3126 = vmatpush1.bf16.msra.mxu0 0
      %3127 = vmatprep.subr.bf16.mxu0 0
      %3128 = vmatpush1.bf16.msra.mxu0 0
      %3129 = vmatprep.subr.bf16.mxu0 0
      %3130 = vmatpush1.bf16.msra.mxu0 %v3111
      %3131 = vmatprep.subr.bf16.mxu0 0
      %3132 = vmatpush1.bf16.msra.mxu0 %v3110
      %3133 = vmatprep.subr.bf16.mxu0 0
      %3134 = vmatpush2.bf16.msra.mxu0 0
      %3135 = vmatprep.subr.bf16.mxu0 0
      %3136 = vmatpush2.bf16.msra.mxu0 0
      %3137 = vmatprep.subr.bf16.mxu0 0
      %3138 = vmatpush2.bf16.msra.mxu0 0
      %3139 = vmatprep.subr.bf16.mxu0 0
      %3140 = vmatpush2.bf16.msra.mxu0 0
      %3141 = vmatprep.subr.bf16.mxu0 0
      %3142 = vmatpush2.bf16.msra.mxu0 0
      %3143 = vmatprep.subr.bf16.mxu0 0
      %3144 = vmatpush2.bf16.msra.mxu0 0
      %3145 = vmatprep.subr.bf16.mxu0 0
      %3146 = vmatpush2.bf16.msra.mxu0 0
      %3147 = vmatprep.subr.bf16.mxu0 0
      %3148 = vmatpush2.bf16.msra.mxu0 0
      %3149 = vmatprep.mubr.bf16.mxu0 0
      %3150 = vmatmul.mubr.bf16.gmra.mxu0 %v3115
      %v3151 = vpop.f32.mrf.mxu0
      %v3152 = vadd.f32 %v3100, %v3151
      %v3153 = vpop.f32.mrf.mxu0
      %v3154 = vpop.f32.mrf.mxu0
      %v3155 = vpop.f32.mrf.mxu0
      %3156 = vdwg.mxu0
      %v3157 = vmul.f32 %v3152, 0.5
      %v3158 = vmul.f32 %v3152, 0.044715
      %v3159 = vmul.f32 %v3158, %v3152
      %v3160 = vmul.f32 %v3159, %v3152
      %v3161 = vadd.f32 %v3152, %v3160
      %v3162 = vmul.f32 %v3161, 0.7978846
      %v3163 = vtanh.pop %v3162
      %v3164 = vadd.f32 %v3163, 1.0
      %v3165 = vmul.f32 %v3157, %v3164
      %v3166 = vld [vmem:[%s75] sm:$0xf]
      %v3167 = vld [vmem:[%s75 + $0x4] sm:$0xf]
      %v3168 = vld [vmem:[%s75 + $0x8] sm:$0xf]
      %v3169 = vld [vmem:[%s75 + $0xc] sm:$0xf]
      %v3170 = vld [vmem:[%s75 + $0x10] sm:$0xf]
      %v3171 = vld [vmem:[%s75 + $0x14] sm:$0xf]
      %v3172 = vld [vmem:[%s75 + $0x18] sm:$0xf]
      %v3173 = vld [vmem:[%s75 + $0x1c] sm:$0xf]
      %v3174 = vld [vmem:[%s75 + $0x20] sm:$0xf]
      %v3175 = vld [vmem:[%s75 + $0x24] sm:$0xf]
      %v3176 = vld [vmem:[%s75 + $0x28] sm:$0xf]
      %v3177 = vld [vmem:[%s75 + $0x2c] sm:$0xf]
      %v3178 = vld [vmem:[%s75 + $0x30] sm:$0xf]
      %v3179 = vld [vmem:[%s75 + $0x34] sm:$0xf]
      %v3180 = vld [vmem:[%s75 + $0x38] sm:$0xf]
      %v3181 = vld [vmem:[%s75 + $0x3c] sm:$0xf]
      %v3182 = vpack.c.bf16 %v3165, %v3165
      %v3199 = vunpack.c.l.b16 %v3166
      %v3200 = vunpack.c.l.b16 %v3167
      %v3201 = vunpack.c.l.b16 %v3168
      %v3202 = vunpack.c.l.b16 %v3169
      %v3203 = vunpack.c.l.b16 %v3170
      %v3204 = vunpack.c.l.b16 %v3171
      %v3205 = vunpack.c.l.b16 %v3172
      %v3206 = vunpack.c.l.b16 %v3173
      %v3207 = vunpack.c.l.b16 %v3174
      %v3208 = vunpack.c.l.b16 %v3175
      %v3209 = vunpack.c.l.b16 %v3176
      %v3210 = vunpack.c.l.b16 %v3177
      %v3211 = vunpack.c.l.b16 %v3178
      %v3212 = vunpack.c.l.b16 %v3179
      %v3213 = vunpack.c.l.b16 %v3180
      %v3214 = vunpack.c.l.b16 %v3181
      %v3215 = vpack.c.b16 %v3200, %v3199
      %v3216 = vpack.c.b16 %v3202, %v3201
      %v3217 = vpack.c.b16 %v3204, %v3203
      %v3218 = vpack.c.b16 %v3206, %v3205
      %v3219 = vpack.c.b16 %v3208, %v3207
      %v3220 = vpack.c.b16 %v3210, %v3209
      %v3221 = vpack.c.b16 %v3212, %v3211
      %v3222 = vpack.c.b16 %v3214, %v3213
      %3231 = vmatprep.subr.bf16.mxu0 0
      %3232 = vmatpush1.bf16.msra.mxu0 %v3222
      %3233 = vmatprep.subr.bf16.mxu0 0
      %3234 = vmatpush1.bf16.msra.mxu0 %v3221
      %3235 = vmatprep.subr.bf16.mxu0 0
      %3236 = vmatpush1.bf16.msra.mxu0 %v3220
      %3237 = vmatprep.subr.bf16.mxu0 0
      %3238 = vmatpush1.bf16.msra.mxu0 %v3219
      %3239 = vmatprep.subr.bf16.mxu0 0
      %3240 = vmatpush1.bf16.msra.mxu0 %v3218
      %3241 = vmatprep.subr.bf16.mxu0 0
      %3242 = vmatpush1.bf16.msra.mxu0 %v3217
      %3243 = vmatprep.subr.bf16.mxu0 0
      %3244 = vmatpush1.bf16.msra.mxu0 %v3216
      %3245 = vmatprep.subr.bf16.mxu0 0
      %3246 = vmatpush1.bf16.msra.mxu0 %v3215
      %3247 = vmatprep.subr.bf16.mxu0 0
      %3248 = vmatpush2.bf16.msra.mxu0 0
      %3249 = vmatprep.subr.bf16.mxu0 0
      %3250 = vmatpush2.bf16.msra.mxu0 0
      %3251 = vmatprep.subr.bf16.mxu0 0
      %3252 = vmatpush2.bf16.msra.mxu0 0
      %3253 = vmatprep.subr.bf16.mxu0 0
      %3254 = vmatpush2.bf16.msra.mxu0 0
      %3255 = vmatprep.subr.bf16.mxu0 0
      %3256 = vmatpush2.bf16.msra.mxu0 0
      %3257 = vmatprep.subr.bf16.mxu0 0
      %3258 = vmatpush2.bf16.msra.mxu0 0
      %3259 = vmatprep.subr.bf16.mxu0 0
      %3260 = vmatpush2.bf16.msra.mxu0 0
      %3261 = vmatprep.subr.bf16.mxu0 0
      %3262 = vmatpush2.bf16.msra.mxu0 0
      %3263 = vmatprep.mubr.bf16.mxu0 0
      %3264 = vmatmul.mubr.bf16.gmra.mxu0 %v3182
      %v3265 = vpop.f32.mrf.mxu0
      %v3266 = vadd.f32 0.0, %v3265
      %v3267 = vpop.f32.mrf.mxu0
      %v3268 = vpop.f32.mrf.mxu0
      %v3269 = vpop.f32.mrf.mxu0
      %3270 = vdwg.mxu0
      %v3271 = vadd.f32 %v3060, %v3266
      %v3272 = vld [vmem:[%s77] sm:$0x1]
      %v3274 = vlaneseq
      %v3275 = vshrl.u32 %v3274, 7
      %v3276 = vsub.s32 0, %v3275
      %v3277 = vrot.slane %v3272, %v3276
      %v3279 = vadd.f32 %v3271, %v3277
      %v3280 = vld [vmem:[%s11] sm:$0x1]
      %v3281 = vld [vmem:[%s13] sm:$0x1]
      %v3282 = vsel %vm1341, %v3279, 0.0
      %3283 = vadd.xlane.f32.xlu0 %v3282
      %v3284 = vpop.xlane.xlu0 %3283
      %v3285 = vmul.f32 %v3284, %v1345
      %v3286 = vsub.f32 %v3279, %v3285
      %v3287 = vmul.f32 %v3286, %v3286
      %v3288 = vsel %vm1341, %v3287, 0.0
      %3289 = vadd.xlane.f32.xlu0 %v3288
      %v3290 = vpop.xlane.xlu0 %3289
      %v3291 = vmul.f32 %v3290, %v1345
      %v3292 = vadd.f32 %v3291, 1e-05
      %v3293 = vrsqrt.pop %v3292
      %v3294 = vmul.f32 %v3286, %v3293
      %v3296 = vlaneseq
      %v3297 = vshrl.u32 %v3296, 7
      %v3298 = vsub.s32 0, %v3297
      %v3299 = vrot.slane %v3280, %v3298
      %v3301 = vmul.f32 %v3294, %v3299
      %v3303 = vlaneseq
      %v3304 = vshrl.u32 %v3303, 7
      %v3305 = vsub.s32 0, %v3304
      %v3306 = vrot.slane %v3281, %v3305
      %v3308 = vadd.f32 %v3301, %v3306
      %v3309 = vpack.c.bf16 %v3308, %v3308
      %v3311 = vsel %vm1341, %v3309, 0
      %v3314 = vsel %vm1341, %v1269, 0
      %v3317 = vsel %vm1341, %v1270, 0
      %v3320 = vsel %vm1341, %v1271, 0
      %v3323 = vsel %vm1341, %v1272, 0
      %v3326 = vsel %vm1341, %v1273, 0
      %v3329 = vsel %vm1341, %v1274, 0
      %v3332 = vsel %vm1341, %v1275, 0
      %v3335 = vsel %vm1341, %v1276, 0
      %3337 = vmatprep.subr.bf16.mxu0 0
      %3338 = vmatpush1.bf16.xpose.msra.mxu0 %v3335
      %3339 = vmatprep.subr.bf16.mxu0 0
      %3340 = vmatpush1.bf16.xpose.msra.mxu0 %v3332
      %3341 = vmatprep.subr.bf16.mxu0 0
      %3342 = vmatpush1.bf16.xpose.msra.mxu0 %v3329
      %3343 = vmatprep.subr.bf16.mxu0 0
      %3344 = vmatpush1.bf16.xpose.msra.mxu0 %v3326
      %3345 = vmatprep.subr.bf16.mxu0 0
      %3346 = vmatpush1.bf16.xpose.msra.mxu0 %v3323
      %3347 = vmatprep.subr.bf16.mxu0 0
      %3348 = vmatpush1.bf16.xpose.msra.mxu0 %v3320
      %3349 = vmatprep.subr.bf16.mxu0 0
      %3350 = vmatpush1.bf16.xpose.msra.mxu0 %v3317
      %3351 = vmatprep.subr.bf16.mxu0 0
      %3352 = vmatpush1.bf16.xpose.msra.mxu0 %v3314
      %3353 = vmatprep.subr.bf16.mxu0 0
      %3354 = vmatpush2.bf16.xpose.msra.mxu0 0
      %3355 = vmatprep.subr.bf16.mxu0 0
      %3356 = vmatpush2.bf16.xpose.msra.mxu0 0
      %3357 = vmatprep.subr.bf16.mxu0 0
      %3358 = vmatpush2.bf16.xpose.msra.mxu0 0
      %3359 = vmatprep.subr.bf16.mxu0 0
      %3360 = vmatpush2.bf16.xpose.msra.mxu0 0
      %3361 = vmatprep.subr.bf16.mxu0 0
      %3362 = vmatpush2.bf16.xpose.msra.mxu0 0
      %3363 = vmatprep.subr.bf16.mxu0 0
      %3364 = vmatpush2.bf16.xpose.msra.mxu0 0
      %3365 = vmatprep.subr.bf16.mxu0 0
      %3366 = vmatpush2.bf16.xpose.msra.mxu0 0
      %3367 = vmatprep.subr.bf16.mxu0 0
      %3368 = vmatpush2.bf16.xpose.msra.mxu0 0
      %3369 = vmatprep.mubr.bf16.mxu0 0
      %3370 = vmatmul.mubr.bf16.gmra.mxu0 %v3311
      %v3371 = vpop.f32.mrf.mxu0
      %v3372 = vadd.f32 0.0, %v3371
      %v3373 = vpop.f32.mrf.mxu0
      %v3374 = vpop.f32.mrf.mxu0
      %v3375 = vpop.f32.mrf.mxu0
      %3376 = vdwg.mxu0
      %3377 = vmax.xlane.f32.xlu0 %v3372
      %v3378 = vpop.xlane.xlu0 %3377
      %v3379 = vsub.f32 %v3372, %v3378
      %v3380 = vmul.f32 %v3379, 1.442695
      %v3381 = vpow.pop %v3380
      %3382 = vadd.xlane.f32.xlu0 %v3381
      %v3383 = vpop.xlane.xlu0 %3382
      %v3384 = vlog2.pop %v3383
      %v3385 = vmul.f32 %v3384, 0.6931472
      %v3386 = vadd.f32 %v3378, %v3385
      %v3387 = vld [vmem:[%s1201] sm:$0xff]
      %3388 = vset.pattern.permute.xlu0 0
      %3389 = vperm.xlu0 %3388, %v3387
      %v3390 = vpop.permute.xlu0 %3389
      %vm3391 = vcmp.eq.s32.totalorder %v1228, %v3390
      %v3392 = vsel %vm3391, %v3372, 0.0
      %3393 = vadd.xlane.f32.xlu0 %v3392
      %v3394 = vpop.xlane.xlu0 %3393
      %v3395 = vsub.f32 %v3394, %v3386
      %vm3396 = vcmask 7168
      %3397 = vst.msk [vmem:[%s1208] sm:$0xff] %vm3396, %v3395
      %p3398 = scmp.lt.s32.totalorder %s90, 1
      %s3399 = scalar_select %p3398, %s90, 1
      %s3400 = smul.addr %s3399, 8
      %s3401 = scalar_lea.vmem %s79, %s3400
      // Predicated region
      $region177: #{actor_forward.1} parent=175 // pred_check
        %p3402 = pneg %p942
      $region178: #{actor_forward.1} parent=175 // pred_check_branch
        %3404 = sbr.rel (%p3402) target = $region180
      $region179: #{actor_forward.1} parent=175 // pred_region
        _
      $region180: #{actor_forward.1} parent=175 // pred_fallthru
        _
    $region176: #{actor_forward.1} parent=5 // pred_fallthru
      _
    %p3405 = scmp.le.s32.totalorder 2, %s85
    // Predicated region
    $region181: #{actor_forward.1} parent=5 // pred_check
      %p3406 = pneg %p3405
    $region182: #{actor_forward.1} parent=5 // pred_check_branch
      %3408 = sbr.rel (%p3406) target = $region184
    $region183: #{actor_forward.1} parent=5 // pred_region
      %s3409 = ssub.s32 %s85, 2
      // Predicated region
      $region185: #{actor_forward.1} parent=183 // pred_check
        %p3410 = pneg %p948
      $region186: #{actor_forward.1} parent=183 // pred_check_branch
        %3412 = sbr.rel (%p3410) target = $region188
      $region187: #{actor_forward.1} parent=183 // pred_region
        %p3413 = scmp.lt.s32.totalorder %s91, 1
        %s3414 = scalar_select %p3413, %s91, 1
        %s3415 = smul.addr %s3414, 8
        %s3416 = scalar_lea.vmem %s79, %s3415
      $region188: #{actor_forward.1} parent=183 // pred_fallthru
        _
    $region184: #{actor_forward.1} parent=5 // pred_fallthru
      _
  $region6: #{actor_forward.1} parent=0 // loop_footer
    %s89 = sadd.s32 1, %s85
  $region7: #{actor_forward.1} parent=0 // loop_footer_branch
    %84 = sbr.rel target = $region3
  $region8: #{actor_forward.1} parent=0 // loop_exit
    _

</llo_original>
